<compile_context>
chip_gen: v6e
topology: v6e:2x2x1
jax: 0.10.0
libtpu: 0.0.40
codegen_flags: <defaults>
</compile_context>

<pallas_src>
import math

import jax
import jax.numpy as jnp
from jax.experimental import pallas as pl
from jax.experimental.pallas import tpu as pltpu

BASE = 4                      # `base` in the reference script
HIDDEN = 256
IN_SIZE = 1
N_HEADS_HID = 3 * HIDDEN      # 768: fused linear_1 | linear_2 | linear_3
OUT_RAW = 2 + 2 + BASE        # 8:  output_1 | output_2 | output_3
OUT_PAD = 128                 # lane-dense padded width of the fused output


def _policy_kernel(x_ref, h0_ref, c0_ref,
                   wih_t_ref, whh_t_ref, b_lstm_ref,
                   wh_ref, bh_ref, wo_ref, bo_ref,
                   out_ref, h1_ref, c1_ref,
                   h_all_ref):
    """Whole-sequence forward in one invocation.

    x_ref:   (T*B, 1)      all inputs, VMEM resident
    out_ref: (T*B, 128)    fused, lane-padded per-step logits (one store)
    h1/c1:   (B, 256)      final recurrent state
    h_all:   (T*B, 256)    VMEM scratch collecting hidden states for the
                           batched head matmuls
    """
    H = HIDDEN
    B = h0_ref.shape[0]
    TB = x_ref.shape[0]
    T = TB // B

    # ---- precompute input contribution + bias for every timestep ---------
    # (T*B,1) * (1,4H) + (1,4H)  ->  (T*B, 4H); one VPU pass instead of T.
    gates_pre = x_ref[...] * wih_t_ref[...] + b_lstm_ref[...]

    # Hoisted, loop-invariant recurrent weight (stays in VMEM).
    whh = whh_t_ref[...]                      # (256, 1024)

    # ---- sequential LSTM recurrence (static T, fully unrolled) -----------
    h = h0_ref[...]                           # (B, 256)
    c = c0_ref[...]                           # (B, 256)
    for t in range(T):                        # static trip count -> unrolled
        g = gates_pre[t * B:(t + 1) * B, :] + jnp.dot(
            h, whh, preferred_element_type=jnp.float32)        # (B, 1024)
        i_g = jax.nn.sigmoid(g[:, 0 * H:1 * H])
        f_g = jax.nn.sigmoid(g[:, 1 * H:2 * H])
        g_g = jnp.tanh(g[:, 2 * H:3 * H])
        o_g = jax.nn.sigmoid(g[:, 3 * H:4 * H])
        c = f_g * c + i_g * g_g
        h = o_g * jnp.tanh(c)
        h_all_ref[t * B:(t + 1) * B, :] = h   # static-slice store, no DMA

    h1_ref[...] = h
    c1_ref[...] = c

    # ---- batched fused heads (hoisted out of the recurrence) -------------
    # One (T*B,256)@(256,768) matmul + one tanh, then one block-diagonal
    # (T*B,768)@(768,128) matmul; single unmasked lane-dense store.
    hid = jnp.tanh(jnp.dot(h_all_ref[...], wh_ref[...],
                           preferred_element_type=jnp.float32) + bh_ref[...])
    out_ref[...] = (jnp.dot(hid, wo_ref[...],
                            preferred_element_type=jnp.float32) + bo_ref[...])


@jax.jit
def simple_policy_gradient_forward(x_seq, h0, c0, params):
    """Run the full sequence in one pallas_call / one kernel invocation.

    x_seq: (T, B, 1).  Returns (out1 (T,B,2), out2 (T,B,2), out3 (T,B,BASE),
    h_T (B,256), c_T (B,256)).  h_T/c_T correspond to the module's mutated
    self.h_0 / self.c_0 after processing the sequence.
    """
    T, B, _ = x_seq.shape
    x_flat = x_seq.reshape(T * B, IN_SIZE)

    def whole(shape):
        # full-array block, constant index -> single HBM<->VMEM transfer
        return pl.BlockSpec(shape, lambda i, _s=shape: (0,) * len(_s))

    in_specs = [
        whole((T * B, IN_SIZE)),            # x (all timesteps)
        whole((B, HIDDEN)),                 # h_0
        whole((B, HIDDEN)),                 # c_0
        whole((1, 4 * HIDDEN)),             # W_ih.T
        whole((HIDDEN, 4 * HIDDEN)),        # W_hh.T
        whole((1, 4 * HIDDEN)),             # b_ih + b_hh
        whole((HIDDEN, N_HEADS_HID)),       # fused head W
        whole((1, N_HEADS_HID)),            # fused head b
        whole((N_HEADS_HID, OUT_PAD)),      # fused block-diag output W
        whole((1, OUT_PAD)),                # fused output b
    ]
    out_specs = [
        whole((T * B, OUT_PAD)),            # fused per-step logits slab
        whole((B, HIDDEN)),                 # h_T
        whole((B, HIDDEN)),                 # c_T
    ]
    out_shapes = (
        jax.ShapeDtypeStruct((T * B, OUT_PAD), jnp.float32),
        jax.ShapeDtypeStruct((B, HIDDEN), jnp.float32),
        jax.ShapeDtypeStruct((B, HIDDEN), jnp.float32),
    )

    out_flat, h_t, c_t = pl.pallas_call(
        _policy_kernel,
        out_shape=out_shapes,
        grid_spec=pltpu.PrefetchScalarGridSpec(
            num_scalar_prefetch=0,
            grid=(1,),
            in_specs=in_specs,
            out_specs=out_specs,
            scratch_shapes=[
                pltpu.VMEM((T * B, HIDDEN), jnp.float32),   # h_all scratch
            ]),
        compiler_params=pltpu.CompilerParams(
            dimension_semantics=("arbitrary",)),
    )(x_flat, h0, c0,
      params["wih_t"], params["whh_t"], params["b_lstm"],
      params["wh_fused"], params["bh_fused"],
      params["wo_fused"], params["bo_fused"])

    out_pad = out_flat.reshape(T, B, OUT_PAD)
    out1 = out_pad[:, :, 0:2]
    out2 = out_pad[:, :, 2:4]
    out3 = out_pad[:, :, 4:4 + BASE]
    return out1, out2, out3, h_t, c_t


def init_params(key):
    """PyTorch-style default init (uniform(-1/sqrt(fan), 1/sqrt(fan))), with the
    fused / pre-transposed layout the kernel expects."""
    keys = jax.random.split(key, 16)
    ki = iter(keys)
    H = HIDDEN

    def uni(k, shape, fan):
        bound = 1.0 / math.sqrt(fan)
        return jax.random.uniform(k, shape, jnp.float32, -bound, bound)

    # LSTMCell(input_size=1, hidden_size=256); gate order i, f, g, o
    w_ih = uni(next(ki), (4 * H, IN_SIZE), H)      # (1024, 1)
    w_hh = uni(next(ki), (4 * H, H), H)            # (1024, 256)
    b_ih = uni(next(ki), (4 * H,), H)
    b_hh = uni(next(ki), (4 * H,), H)

    def linear(k1, k2, out_f, in_f):
        w = uni(k1, (out_f, in_f), in_f)
        b = uni(k2, (out_f,), in_f)
        return w, b

    w1, b1 = linear(next(ki), next(ki), H, H)
    w2, b2 = linear(next(ki), next(ki), H, H)
    w3, b3 = linear(next(ki), next(ki), H, H)
    wo1, bo1 = linear(next(ki), next(ki), 2, H)
    wo2, bo2 = linear(next(ki), next(ki), 2, H)
    wo3, bo3 = linear(next(ki), next(ki), BASE, H)

    # Fused head hidden layer: (256, 768) = [linear_1.T | linear_2.T | linear_3.T]
    wh_fused = jnp.concatenate([w1.T, w2.T, w3.T], axis=1)
    bh_fused = jnp.concatenate([b1, b2, b3])[None, :]

    # Fused block-diagonal output projection, padded to 128 lanes.
    wo_fused = jnp.zeros((N_HEADS_HID, OUT_PAD), jnp.float32)
    wo_fused = wo_fused.at[0 * H:1 * H, 0:2].set(wo1.T)
    wo_fused = wo_fused.at[1 * H:2 * H, 2:4].set(wo2.T)
    wo_fused = wo_fused.at[2 * H:3 * H, 4:4 + BASE].set(wo3.T)
    bo_fused = jnp.zeros((1, OUT_PAD), jnp.float32)
    bo_fused = bo_fused.at[0, 0:2].set(bo1)
    bo_fused = bo_fused.at[0, 2:4].set(bo2)
    bo_fused = bo_fused.at[0, 4:4 + BASE].set(bo3)

    return {
        "wih_t": w_ih.T,                      # (1, 1024)
        "whh_t": w_hh.T,                      # (256, 1024)
        "b_lstm": (b_ih + b_hh)[None, :],     # (1, 1024)
        "wh_fused": wh_fused,                 # (256, 768)
        "bh_fused": bh_fused,                 # (1, 768)
        "wo_fused": wo_fused,                 # (768, 128) block-diagonal, zero-padded
        "bo_fused": bo_fused,                 # (1, 128)   zero-padded
    }


def _reference_forward(x_seq, h0, c0, p):
    """Pure-JAX reference (un-fused math, same numbers) for correctness check."""
    H = HIDDEN

    def step(carry, x):
        h, c = carry
        gates = x @ p["wih_t"] + h @ p["whh_t"] + p["b_lstm"]
        i = jax.nn.sigmoid(gates[:, 0 * H:1 * H])
        f = jax.nn.sigmoid(gates[:, 1 * H:2 * H])
        g = jnp.tanh(gates[:, 2 * H:3 * H])
        o = jax.nn.sigmoid(gates[:, 3 * H:4 * H])
        c1 = f * c + i * g
        h1 = o * jnp.tanh(c1)
        hid = jnp.tanh(h1 @ p["wh_fused"] + p["bh_fused"])
        o1 = hid[:, 0 * H:1 * H] @ p["wo_fused"][0 * H:1 * H, 0:2] + p["bo_fused"][:, 0:2]
        o2 = hid[:, 1 * H:2 * H] @ p["wo_fused"][1 * H:2 * H, 2:4] + p["bo_fused"][:, 2:4]
        o3 = (hid[:, 2 * H:3 * H] @ p["wo_fused"][2 * H:3 * H, 4:4 + BASE]
              + p["bo_fused"][:, 4:4 + BASE])
        return (h1, c1), (o1, o2, o3)

    (h_t, c_t), (o1s, o2s, o3s) = jax.lax.scan(step, (h0, c0), x_seq)
    return o1s, o2s, o3s, h_t, c_t


if __name__ == "__main__":
    key = jax.random.PRNGKey(0)
    k_params, k_x = jax.random.split(key)

    params = init_params(k_params)

    T, B = 8, 1                                       # module hard-codes batch 1
    x_seq = jax.random.normal(k_x, (T, B, IN_SIZE), jnp.float32)
    h0 = jnp.zeros((B, HIDDEN), jnp.float32)          # self.h_0
    c0 = jnp.zeros((B, HIDDEN), jnp.float32)          # self.c_0

    # TODO(synk): on v7x, independent rollouts could be sharded across the two
    # TensorCores with a leading "parallel" grid axis; single-sequence use
    # keeps one core busy.

    out1, out2, out3, h_t, c_t = simple_policy_gradient_forward(x_seq, h0, c0, params)
    jax.block_until_ready((out1, out2, out3, h_t, c_t))

    # sanity check vs pure-JAX reference
    r1, r2, r3, rh, rc = _reference_forward(x_seq, h0, c0, params)
    assert jnp.allclose(out1, r1, atol=2e-5), "out1 mismatch"
    assert jnp.allclose(out2, r2, atol=2e-5), "out2 mismatch"
    assert jnp.allclose(out3, r3, atol=2e-5), "out3 mismatch"
    assert jnp.allclose(h_t, rh, atol=2e-5), "h_T mismatch"
    assert jnp.allclose(c_t, rc, atol=2e-5), "c_T mismatch"

    print("KERNEL_OK")
</pallas_src>

<mosaic_0001>
module attributes {stable_mosaic.version = 11 : i64} {
  func.func @_policy_kernel(%arg0: i32, %arg1: memref<8x1xf32, #tpu.memory_space<vmem>>, %arg2: memref<1x256xf32, #tpu.memory_space<vmem>>, %arg3: memref<1x256xf32, #tpu.memory_space<vmem>>, %arg4: memref<1x1024xf32, #tpu.memory_space<vmem>>, %arg5: memref<256x1024xf32, #tpu.memory_space<vmem>>, %arg6: memref<1x1024xf32, #tpu.memory_space<vmem>>, %arg7: memref<256x768xf32, #tpu.memory_space<vmem>>, %arg8: memref<1x768xf32, #tpu.memory_space<vmem>>, %arg9: memref<768x128xf32, #tpu.memory_space<vmem>>, %arg10: memref<1x128xf32, #tpu.memory_space<vmem>>, %arg11: memref<8x128xf32, #tpu.memory_space<vmem>>, %arg12: memref<1x256xf32, #tpu.memory_space<vmem>>, %arg13: memref<1x256xf32, #tpu.memory_space<vmem>>, %arg14: memref<8x256xf32, #tpu.memory_space<vmem>>) attributes {dimension_semantics = [#tpu.dimension_semantics<arbitrary>], iteration_bounds = array<i64: 1>, scalar_prefetch = 0 : i64, scratch_operands = 1 : i64, tpu.core_type = #tpu.core_type<tc>, window_params = [{pipeline_mode = #tpu.pipeline_mode<synchronous>, transform_indices = @transform_0, window_bounds = array<i64: 8, 1>}, {pipeline_mode = #tpu.pipeline_mode<synchronous>, transform_indices = @transform_1, window_bounds = array<i64: 1, 256>}, {pipeline_mode = #tpu.pipeline_mode<synchronous>, transform_indices = @transform_2, window_bounds = array<i64: 1, 256>}, {pipeline_mode = #tpu.pipeline_mode<synchronous>, transform_indices = @transform_3, window_bounds = array<i64: 1, 1024>}, {pipeline_mode = #tpu.pipeline_mode<synchronous>, transform_indices = @transform_4, window_bounds = array<i64: 256, 1024>}, {pipeline_mode = #tpu.pipeline_mode<synchronous>, transform_indices = @transform_5, window_bounds = array<i64: 1, 1024>}, {pipeline_mode = #tpu.pipeline_mode<synchronous>, transform_indices = @transform_6, window_bounds = array<i64: 256, 768>}, {pipeline_mode = #tpu.pipeline_mode<synchronous>, transform_indices = @transform_7, window_bounds = array<i64: 1, 768>}, {pipeline_mode = #tpu.pipeline_mode<synchronous>, transform_indices = @transform_8, window_bounds = array<i64: 768, 128>}, {pipeline_mode = #tpu.pipeline_mode<synchronous>, transform_indices = @transform_9, window_bounds = array<i64: 1, 128>}, {pipeline_mode = #tpu.pipeline_mode<synchronous>, transform_indices = @transform_10, window_bounds = array<i64: 8, 128>}, {pipeline_mode = #tpu.pipeline_mode<synchronous>, transform_indices = @transform_11, window_bounds = array<i64: 1, 256>}, {pipeline_mode = #tpu.pipeline_mode<synchronous>, transform_indices = @transform_12, window_bounds = array<i64: 1, 256>}]} {
    %c0 = arith.constant 0 : index
    %c0_0 = arith.constant 0 : index
    %0 = vector.load %arg1[%c0, %c0_0] : memref<8x1xf32, #tpu.memory_space<vmem>>, vector<8x1xf32>
    %c0_1 = arith.constant 0 : index
    %c0_2 = arith.constant 0 : index
    %1 = vector.load %arg4[%c0_1, %c0_2] : memref<1x1024xf32, #tpu.memory_space<vmem>>, vector<1x1024xf32>
    %2 = vector.broadcast %0 : vector<8x1xf32> to vector<8x1024xf32>
    %3 = vector.broadcast %1 : vector<1x1024xf32> to vector<8x1024xf32>
    %4 = arith.mulf %2, %3 : vector<8x1024xf32>
    %c0_3 = arith.constant 0 : index
    %c0_4 = arith.constant 0 : index
    %5 = vector.load %arg6[%c0_3, %c0_4] : memref<1x1024xf32, #tpu.memory_space<vmem>>, vector<1x1024xf32>
    %6 = vector.broadcast %5 : vector<1x1024xf32> to vector<8x1024xf32>
    %7 = arith.addf %4, %6 : vector<8x1024xf32>
    %c0_5 = arith.constant 0 : index
    %c0_6 = arith.constant 0 : index
    %8 = vector.load %arg5[%c0_5, %c0_6] : memref<256x1024xf32, #tpu.memory_space<vmem>>, vector<256x1024xf32>
    %c0_7 = arith.constant 0 : index
    %c0_8 = arith.constant 0 : index
    %9 = vector.load %arg2[%c0_7, %c0_8] : memref<1x256xf32, #tpu.memory_space<vmem>>, vector<1x256xf32>
    %c0_9 = arith.constant 0 : index
    %c0_10 = arith.constant 0 : index
    %10 = vector.load %arg3[%c0_9, %c0_10] : memref<1x256xf32, #tpu.memory_space<vmem>>, vector<1x256xf32>
    %11 = vector.extract_strided_slice %7 {offsets = [0, 0], sizes = [1, 1024], strides = [1, 1]} : vector<8x1024xf32> to vector<1x1024xf32>
    %cst = arith.constant dense<0.000000e+00> : vector<1x1024xf32>
    %12 = tpu.matmul %9, %8, %cst {dimension_numbers = #tpu.dot_dimension_numbers<[1], [0], [0], [1], [0, 0, 1, 1], [], []>} : vector<1x256xf32>, vector<256x1024xf32>, vector<1x1024xf32> -> vector<1x1024xf32>
    %13 = arith.addf %11, %12 : vector<1x1024xf32>
    %14 = vector.extract_strided_slice %13 {offsets = [0, 0], sizes = [1, 256], strides = [1, 1]} : vector<1x1024xf32> to vector<1x256xf32>
    %15 = arith.negf %14 : vector<1x256xf32>
    %16 = math.exp %15 : vector<1x256xf32>
    %cst_11 = arith.constant 1.000000e+00 : f32
    %17 = vector.broadcast %cst_11 : f32 to vector<1x256xf32>
    %18 = arith.addf %17, %16 : vector<1x256xf32>
    %19 = arith.divf %17, %18 : vector<1x256xf32>
    %20 = vector.extract_strided_slice %13 {offsets = [0, 256], sizes = [1, 256], strides = [1, 1]} : vector<1x1024xf32> to vector<1x256xf32>
    %21 = arith.negf %20 : vector<1x256xf32>
    %22 = math.exp %21 : vector<1x256xf32>
    %cst_12 = arith.constant 1.000000e+00 : f32
    %23 = vector.broadcast %cst_12 : f32 to vector<1x256xf32>
    %24 = arith.addf %23, %22 : vector<1x256xf32>
    %25 = arith.divf %23, %24 : vector<1x256xf32>
    %26 = vector.extract_strided_slice %13 {offsets = [0, 512], sizes = [1, 256], strides = [1, 1]} : vector<1x1024xf32> to vector<1x256xf32>
    %27 = math.tanh %26 : vector<1x256xf32>
    %28 = vector.extract_strided_slice %13 {offsets = [0, 768], sizes = [1, 256], strides = [1, 1]} : vector<1x1024xf32> to vector<1x256xf32>
    %29 = arith.negf %28 : vector<1x256xf32>
    %30 = math.exp %29 : vector<1x256xf32>
    %cst_13 = arith.constant 1.000000e+00 : f32
    %31 = vector.broadcast %cst_13 : f32 to vector<1x256xf32>
    %32 = arith.addf %31, %30 : vector<1x256xf32>
    %33 = arith.divf %31, %32 : vector<1x256xf32>
    %34 = arith.mulf %25, %10 : vector<1x256xf32>
    %35 = arith.mulf %19, %27 : vector<1x256xf32>
    %36 = arith.addf %34, %35 : vector<1x256xf32>
    %37 = math.tanh %36 : vector<1x256xf32>
    %38 = arith.mulf %33, %37 : vector<1x256xf32>
    %c0_14 = arith.constant 0 : index
    %c0_15 = arith.constant 0 : index
    %39 = vector.load %arg14[%c0_14, %c0_15] : memref<8x256xf32, #tpu.memory_space<vmem>>, vector<1x256xf32>
    tpu.vector_store %arg14[%c0_14, %c0_15], %38 {strides = array<i32>} : memref<8x256xf32, #tpu.memory_space<vmem>>, vector<1x256xf32>,
    %40 = vector.extract_strided_slice %7 {offsets = [1, 0], sizes = [1, 1024], strides = [1, 1]} : vector<8x1024xf32> to vector<1x1024xf32>
    %cst_16 = arith.constant dense<0.000000e+00> : vector<1x1024xf32>
    %41 = tpu.matmul %38, %8, %cst_16 {dimension_numbers = #tpu.dot_dimension_numbers<[1], [0], [0], [1], [0, 0, 1, 1], [], []>} : vector<1x256xf32>, vector<256x1024xf32>, vector<1x1024xf32> -> vector<1x1024xf32>
    %42 = arith.addf %40, %41 : vector<1x1024xf32>
    %43 = vector.extract_strided_slice %42 {offsets = [0, 0], sizes = [1, 256], strides = [1, 1]} : vector<1x1024xf32> to vector<1x256xf32>
    %44 = arith.negf %43 : vector<1x256xf32>
    %45 = math.exp %44 : vector<1x256xf32>
    %cst_17 = arith.constant 1.000000e+00 : f32
    %46 = vector.broadcast %cst_17 : f32 to vector<1x256xf32>
    %47 = arith.addf %46, %45 : vector<1x256xf32>
    %48 = arith.divf %46, %47 : vector<1x256xf32>
    %49 = vector.extract_strided_slice %42 {offsets = [0, 256], sizes = [1, 256], strides = [1, 1]} : vector<1x1024xf32> to vector<1x256xf32>
    %50 = arith.negf %49 : vector<1x256xf32>
    %51 = math.exp %50 : vector<1x256xf32>
    %cst_18 = arith.constant 1.000000e+00 : f32
    %52 = vector.broadcast %cst_18 : f32 to vector<1x256xf32>
    %53 = arith.addf %52, %51 : vector<1x256xf32>
    %54 = arith.divf %52, %53 : vector<1x256xf32>
    %55 = vector.extract_strided_slice %42 {offsets = [0, 512], sizes = [1, 256], strides = [1, 1]} : vector<1x1024xf32> to vector<1x256xf32>
    %56 = math.tanh %55 : vector<1x256xf32>
    %57 = vector.extract_strided_slice %42 {offsets = [0, 768], sizes = [1, 256], strides = [1, 1]} : vector<1x1024xf32> to vector<1x256xf32>
    %58 = arith.negf %57 : vector<1x256xf32>
    %59 = math.exp %58 : vector<1x256xf32>
    %cst_19 = arith.constant 1.000000e+00 : f32
    %60 = vector.broadcast %cst_19 : f32 to vector<1x256xf32>
    %61 = arith.addf %60, %59 : vector<1x256xf32>
    %62 = arith.divf %60, %61 : vector<1x256xf32>
    %63 = arith.mulf %54, %36 : vector<1x256xf32>
    %64 = arith.mulf %48, %56 : vector<1x256xf32>
    %65 = arith.addf %63, %64 : vector<1x256xf32>
    %66 = math.tanh %65 : vector<1x256xf32>
    %67 = arith.mulf %62, %66 : vector<1x256xf32>
    %c1 = arith.constant 1 : index
    %c0_20 = arith.constant 0 : index
    %68 = vector.load %arg14[%c1, %c0_20] : memref<8x256xf32, #tpu.memory_space<vmem>>, vector<1x256xf32>
    tpu.vector_store %arg14[%c1, %c0_20], %67 {strides = array<i32>} : memref<8x256xf32, #tpu.memory_space<vmem>>, vector<1x256xf32>,
    %69 = vector.extract_strided_slice %7 {offsets = [2, 0], sizes = [1, 1024], strides = [1, 1]} : vector<8x1024xf32> to vector<1x1024xf32>
    %cst_21 = arith.constant dense<0.000000e+00> : vector<1x1024xf32>
    %70 = tpu.matmul %67, %8, %cst_21 {dimension_numbers = #tpu.dot_dimension_numbers<[1], [0], [0], [1], [0, 0, 1, 1], [], []>} : vector<1x256xf32>, vector<256x1024xf32>, vector<1x1024xf32> -> vector<1x1024xf32>
    %71 = arith.addf %69, %70 : vector<1x1024xf32>
    %72 = vector.extract_strided_slice %71 {offsets = [0, 0], sizes = [1, 256], strides = [1, 1]} : vector<1x1024xf32> to vector<1x256xf32>
    %73 = arith.negf %72 : vector<1x256xf32>
    %74 = math.exp %73 : vector<1x256xf32>
    %cst_22 = arith.constant 1.000000e+00 : f32
    %75 = vector.broadcast %cst_22 : f32 to vector<1x256xf32>
    %76 = arith.addf %75, %74 : vector<1x256xf32>
    %77 = arith.divf %75, %76 : vector<1x256xf32>
    %78 = vector.extract_strided_slice %71 {offsets = [0, 256], sizes = [1, 256], strides = [1, 1]} : vector<1x1024xf32> to vector<1x256xf32>
    %79 = arith.negf %78 : vector<1x256xf32>
    %80 = math.exp %79 : vector<1x256xf32>
    %cst_23 = arith.constant 1.000000e+00 : f32
    %81 = vector.broadcast %cst_23 : f32 to vector<1x256xf32>
    %82 = arith.addf %81, %80 : vector<1x256xf32>
    %83 = arith.divf %81, %82 : vector<1x256xf32>
    %84 = vector.extract_strided_slice %71 {offsets = [0, 512], sizes = [1, 256], strides = [1, 1]} : vector<1x1024xf32> to vector<1x256xf32>
    %85 = math.tanh %84 : vector<1x256xf32>
    %86 = vector.extract_strided_slice %71 {offsets = [0, 768], sizes = [1, 256], strides = [1, 1]} : vector<1x1024xf32> to vector<1x256xf32>
    %87 = arith.negf %86 : vector<1x256xf32>
    %88 = math.exp %87 : vector<1x256xf32>
    %cst_24 = arith.constant 1.000000e+00 : f32
    %89 = vector.broadcast %cst_24 : f32 to vector<1x256xf32>
    %90 = arith.addf %89, %88 : vector<1x256xf32>
    %91 = arith.divf %89, %90 : vector<1x256xf32>
    %92 = arith.mulf %83, %65 : vector<1x256xf32>
    %93 = arith.mulf %77, %85 : vector<1x256xf32>
    %94 = arith.addf %92, %93 : vector<1x256xf32>
    %95 = math.tanh %94 : vector<1x256xf32>
    %96 = arith.mulf %91, %95 : vector<1x256xf32>
    %c2 = arith.constant 2 : index
    %c0_25 = arith.constant 0 : index
    %97 = vector.load %arg14[%c2, %c0_25] : memref<8x256xf32, #tpu.memory_space<vmem>>, vector<1x256xf32>
    tpu.vector_store %arg14[%c2, %c0_25], %96 {strides = array<i32>} : memref<8x256xf32, #tpu.memory_space<vmem>>, vector<1x256xf32>,
    %98 = vector.extract_strided_slice %7 {offsets = [3, 0], sizes = [1, 1024], strides = [1, 1]} : vector<8x1024xf32> to vector<1x1024xf32>
    %cst_26 = arith.constant dense<0.000000e+00> : vector<1x1024xf32>
    %99 = tpu.matmul %96, %8, %cst_26 {dimension_numbers = #tpu.dot_dimension_numbers<[1], [0], [0], [1], [0, 0, 1, 1], [], []>} : vector<1x256xf32>, vector<256x1024xf32>, vector<1x1024xf32> -> vector<1x1024xf32>
    %100 = arith.addf %98, %99 : vector<1x1024xf32>
    %101 = vector.extract_strided_slice %100 {offsets = [0, 0], sizes = [1, 256], strides = [1, 1]} : vector<1x1024xf32> to vector<1x256xf32>
    %102 = arith.negf %101 : vector<1x256xf32>
    %103 = math.exp %102 : vector<1x256xf32>
    %cst_27 = arith.constant 1.000000e+00 : f32
    %104 = vector.broadcast %cst_27 : f32 to vector<1x256xf32>
    %105 = arith.addf %104, %103 : vector<1x256xf32>
    %106 = arith.divf %104, %105 : vector<1x256xf32>
    %107 = vector.extract_strided_slice %100 {offsets = [0, 256], sizes = [1, 256], strides = [1, 1]} : vector<1x1024xf32> to vector<1x256xf32>
    %108 = arith.negf %107 : vector<1x256xf32>
    %109 = math.exp %108 : vector<1x256xf32>
    %cst_28 = arith.constant 1.000000e+00 : f32
    %110 = vector.broadcast %cst_28 : f32 to vector<1x256xf32>
    %111 = arith.addf %110, %109 : vector<1x256xf32>
    %112 = arith.divf %110, %111 : vector<1x256xf32>
    %113 = vector.extract_strided_slice %100 {offsets = [0, 512], sizes = [1, 256], strides = [1, 1]} : vector<1x1024xf32> to vector<1x256xf32>
    %114 = math.tanh %113 : vector<1x256xf32>
    %115 = vector.extract_strided_slice %100 {offsets = [0, 768], sizes = [1, 256], strides = [1, 1]} : vector<1x1024xf32> to vector<1x256xf32>
    %116 = arith.negf %115 : vector<1x256xf32>
    %117 = math.exp %116 : vector<1x256xf32>
    %cst_29 = arith.constant 1.000000e+00 : f32
    %118 = vector.broadcast %cst_29 : f32 to vector<1x256xf32>
    %119 = arith.addf %118, %117 : vector<1x256xf32>
    %120 = arith.divf %118, %119 : vector<1x256xf32>
    %121 = arith.mulf %112, %94 : vector<1x256xf32>
    %122 = arith.mulf %106, %114 : vector<1x256xf32>
    %123 = arith.addf %121, %122 : vector<1x256xf32>
    %124 = math.tanh %123 : vector<1x256xf32>
    %125 = arith.mulf %120, %124 : vector<1x256xf32>
    %c3 = arith.constant 3 : index
    %c0_30 = arith.constant 0 : index
    %126 = vector.load %arg14[%c3, %c0_30] : memref<8x256xf32, #tpu.memory_space<vmem>>, vector<1x256xf32>
    tpu.vector_store %arg14[%c3, %c0_30], %125 {strides = array<i32>} : memref<8x256xf32, #tpu.memory_space<vmem>>, vector<1x256xf32>,
    %127 = vector.extract_strided_slice %7 {offsets = [4, 0], sizes = [1, 1024], strides = [1, 1]} : vector<8x1024xf32> to vector<1x1024xf32>
    %cst_31 = arith.constant dense<0.000000e+00> : vector<1x1024xf32>
    %128 = tpu.matmul %125, %8, %cst_31 {dimension_numbers = #tpu.dot_dimension_numbers<[1], [0], [0], [1], [0, 0, 1, 1], [], []>} : vector<1x256xf32>, vector<256x1024xf32>, vector<1x1024xf32> -> vector<1x1024xf32>
    %129 = arith.addf %127, %128 : vector<1x1024xf32>
    %130 = vector.extract_strided_slice %129 {offsets = [0, 0], sizes = [1, 256], strides = [1, 1]} : vector<1x1024xf32> to vector<1x256xf32>
    %131 = arith.negf %130 : vector<1x256xf32>
    %132 = math.exp %131 : vector<1x256xf32>
    %cst_32 = arith.constant 1.000000e+00 : f32
    %133 = vector.broadcast %cst_32 : f32 to vector<1x256xf32>
    %134 = arith.addf %133, %132 : vector<1x256xf32>
    %135 = arith.divf %133, %134 : vector<1x256xf32>
    %136 = vector.extract_strided_slice %129 {offsets = [0, 256], sizes = [1, 256], strides = [1, 1]} : vector<1x1024xf32> to vector<1x256xf32>
    %137 = arith.negf %136 : vector<1x256xf32>
    %138 = math.exp %137 : vector<1x256xf32>
    %cst_33 = arith.constant 1.000000e+00 : f32
    %139 = vector.broadcast %cst_33 : f32 to vector<1x256xf32>
    %140 = arith.addf %139, %138 : vector<1x256xf32>
    %141 = arith.divf %139, %140 : vector<1x256xf32>
    %142 = vector.extract_strided_slice %129 {offsets = [0, 512], sizes = [1, 256], strides = [1, 1]} : vector<1x1024xf32> to vector<1x256xf32>
    %143 = math.tanh %142 : vector<1x256xf32>
    %144 = vector.extract_strided_slice %129 {offsets = [0, 768], sizes = [1, 256], strides = [1, 1]} : vector<1x1024xf32> to vector<1x256xf32>
    %145 = arith.negf %144 : vector<1x256xf32>
    %146 = math.exp %145 : vector<1x256xf32>
    %cst_34 = arith.constant 1.000000e+00 : f32
    %147 = vector.broadcast %cst_34 : f32 to vector<1x256xf32>
    %148 = arith.addf %147, %146 : vector<1x256xf32>
    %149 = arith.divf %147, %148 : vector<1x256xf32>
    %150 = arith.mulf %141, %123 : vector<1x256xf32>
    %151 = arith.mulf %135, %143 : vector<1x256xf32>
    %152 = arith.addf %150, %151 : vector<1x256xf32>
    %153 = math.tanh %152 : vector<1x256xf32>
    %154 = arith.mulf %149, %153 : vector<1x256xf32>
    %c4 = arith.constant 4 : index
    %c0_35 = arith.constant 0 : index
    %155 = vector.load %arg14[%c4, %c0_35] : memref<8x256xf32, #tpu.memory_space<vmem>>, vector<1x256xf32>
    tpu.vector_store %arg14[%c4, %c0_35], %154 {strides = array<i32>} : memref<8x256xf32, #tpu.memory_space<vmem>>, vector<1x256xf32>,
    %156 = vector.extract_strided_slice %7 {offsets = [5, 0], sizes = [1, 1024], strides = [1, 1]} : vector<8x1024xf32> to vector<1x1024xf32>
    %cst_36 = arith.constant dense<0.000000e+00> : vector<1x1024xf32>
    %157 = tpu.matmul %154, %8, %cst_36 {dimension_numbers = #tpu.dot_dimension_numbers<[1], [0], [0], [1], [0, 0, 1, 1], [], []>} : vector<1x256xf32>, vector<256x1024xf32>, vector<1x1024xf32> -> vector<1x1024xf32>
    %158 = arith.addf %156, %157 : vector<1x1024xf32>
    %159 = vector.extract_strided_slice %158 {offsets = [0, 0], sizes = [1, 256], strides = [1, 1]} : vector<1x1024xf32> to vector<1x256xf32>
    %160 = arith.negf %159 : vector<1x256xf32>
    %161 = math.exp %160 : vector<1x256xf32>
    %cst_37 = arith.constant 1.000000e+00 : f32
    %162 = vector.broadcast %cst_37 : f32 to vector<1x256xf32>
    %163 = arith.addf %162, %161 : vector<1x256xf32>
    %164 = arith.divf %162, %163 : vector<1x256xf32>
    %165 = vector.extract_strided_slice %158 {offsets = [0, 256], sizes = [1, 256], strides = [1, 1]} : vector<1x1024xf32> to vector<1x256xf32>
    %166 = arith.negf %165 : vector<1x256xf32>
    %167 = math.exp %166 : vector<1x256xf32>
    %cst_38 = arith.constant 1.000000e+00 : f32
    %168 = vector.broadcast %cst_38 : f32 to vector<1x256xf32>
    %169 = arith.addf %168, %167 : vector<1x256xf32>
    %170 = arith.divf %168, %169 : vector<1x256xf32>
    %171 = vector.extract_strided_slice %158 {offsets = [0, 512], sizes = [1, 256], strides = [1, 1]} : vector<1x1024xf32> to vector<1x256xf32>
    %172 = math.tanh %171 : vector<1x256xf32>
    %173 = vector.extract_strided_slice %158 {offsets = [0, 768], sizes = [1, 256], strides = [1, 1]} : vector<1x1024xf32> to vector<1x256xf32>
    %174 = arith.negf %173 : vector<1x256xf32>
    %175 = math.exp %174 : vector<1x256xf32>
    %cst_39 = arith.constant 1.000000e+00 : f32
    %176 = vector.broadcast %cst_39 : f32 to vector<1x256xf32>
    %177 = arith.addf %176, %175 : vector<1x256xf32>
    %178 = arith.divf %176, %177 : vector<1x256xf32>
    %179 = arith.mulf %170, %152 : vector<1x256xf32>
    %180 = arith.mulf %164, %172 : vector<1x256xf32>
    %181 = arith.addf %179, %180 : vector<1x256xf32>
    %182 = math.tanh %181 : vector<1x256xf32>
    %183 = arith.mulf %178, %182 : vector<1x256xf32>
    %c5 = arith.constant 5 : index
    %c0_40 = arith.constant 0 : index
    %184 = vector.load %arg14[%c5, %c0_40] : memref<8x256xf32, #tpu.memory_space<vmem>>, vector<1x256xf32>
    tpu.vector_store %arg14[%c5, %c0_40], %183 {strides = array<i32>} : memref<8x256xf32, #tpu.memory_space<vmem>>, vector<1x256xf32>,
    %185 = vector.extract_strided_slice %7 {offsets = [6, 0], sizes = [1, 1024], strides = [1, 1]} : vector<8x1024xf32> to vector<1x1024xf32>
    %cst_41 = arith.constant dense<0.000000e+00> : vector<1x1024xf32>
    %186 = tpu.matmul %183, %8, %cst_41 {dimension_numbers = #tpu.dot_dimension_numbers<[1], [0], [0], [1], [0, 0, 1, 1], [], []>} : vector<1x256xf32>, vector<256x1024xf32>, vector<1x1024xf32> -> vector<1x1024xf32>
    %187 = arith.addf %185, %186 : vector<1x1024xf32>
    %188 = vector.extract_strided_slice %187 {offsets = [0, 0], sizes = [1, 256], strides = [1, 1]} : vector<1x1024xf32> to vector<1x256xf32>
    %189 = arith.negf %188 : vector<1x256xf32>
    %190 = math.exp %189 : vector<1x256xf32>
    %cst_42 = arith.constant 1.000000e+00 : f32
    %191 = vector.broadcast %cst_42 : f32 to vector<1x256xf32>
    %192 = arith.addf %191, %190 : vector<1x256xf32>
    %193 = arith.divf %191, %192 : vector<1x256xf32>
    %194 = vector.extract_strided_slice %187 {offsets = [0, 256], sizes = [1, 256], strides = [1, 1]} : vector<1x1024xf32> to vector<1x256xf32>
    %195 = arith.negf %194 : vector<1x256xf32>
    %196 = math.exp %195 : vector<1x256xf32>
    %cst_43 = arith.constant 1.000000e+00 : f32
    %197 = vector.broadcast %cst_43 : f32 to vector<1x256xf32>
    %198 = arith.addf %197, %196 : vector<1x256xf32>
    %199 = arith.divf %197, %198 : vector<1x256xf32>
    %200 = vector.extract_strided_slice %187 {offsets = [0, 512], sizes = [1, 256], strides = [1, 1]} : vector<1x1024xf32> to vector<1x256xf32>
    %201 = math.tanh %200 : vector<1x256xf32>
    %202 = vector.extract_strided_slice %187 {offsets = [0, 768], sizes = [1, 256], strides = [1, 1]} : vector<1x1024xf32> to vector<1x256xf32>
    %203 = arith.negf %202 : vector<1x256xf32>
    %204 = math.exp %203 : vector<1x256xf32>
    %cst_44 = arith.constant 1.000000e+00 : f32
    %205 = vector.broadcast %cst_44 : f32 to vector<1x256xf32>
    %206 = arith.addf %205, %204 : vector<1x256xf32>
    %207 = arith.divf %205, %206 : vector<1x256xf32>
    %208 = arith.mulf %199, %181 : vector<1x256xf32>
    %209 = arith.mulf %193, %201 : vector<1x256xf32>
    %210 = arith.addf %208, %209 : vector<1x256xf32>
    %211 = math.tanh %210 : vector<1x256xf32>
    %212 = arith.mulf %207, %211 : vector<1x256xf32>
    %c6 = arith.constant 6 : index
    %c0_45 = arith.constant 0 : index
    %213 = vector.load %arg14[%c6, %c0_45] : memref<8x256xf32, #tpu.memory_space<vmem>>, vector<1x256xf32>
    tpu.vector_store %arg14[%c6, %c0_45], %212 {strides = array<i32>} : memref<8x256xf32, #tpu.memory_space<vmem>>, vector<1x256xf32>,
    %214 = vector.extract_strided_slice %7 {offsets = [7, 0], sizes = [1, 1024], strides = [1, 1]} : vector<8x1024xf32> to vector<1x1024xf32>
    %cst_46 = arith.constant dense<0.000000e+00> : vector<1x1024xf32>
    %215 = tpu.matmul %212, %8, %cst_46 {dimension_numbers = #tpu.dot_dimension_numbers<[1], [0], [0], [1], [0, 0, 1, 1], [], []>} : vector<1x256xf32>, vector<256x1024xf32>, vector<1x1024xf32> -> vector<1x1024xf32>
    %216 = arith.addf %214, %215 : vector<1x1024xf32>
    %217 = vector.extract_strided_slice %216 {offsets = [0, 0], sizes = [1, 256], strides = [1, 1]} : vector<1x1024xf32> to vector<1x256xf32>
    %218 = arith.negf %217 : vector<1x256xf32>
    %219 = math.exp %218 : vector<1x256xf32>
    %cst_47 = arith.constant 1.000000e+00 : f32
    %220 = vector.broadcast %cst_47 : f32 to vector<1x256xf32>
    %221 = arith.addf %220, %219 : vector<1x256xf32>
    %222 = arith.divf %220, %221 : vector<1x256xf32>
    %223 = vector.extract_strided_slice %216 {offsets = [0, 256], sizes = [1, 256], strides = [1, 1]} : vector<1x1024xf32> to vector<1x256xf32>
    %224 = arith.negf %223 : vector<1x256xf32>
    %225 = math.exp %224 : vector<1x256xf32>
    %cst_48 = arith.constant 1.000000e+00 : f32
    %226 = vector.broadcast %cst_48 : f32 to vector<1x256xf32>
    %227 = arith.addf %226, %225 : vector<1x256xf32>
    %228 = arith.divf %226, %227 : vector<1x256xf32>
    %229 = vector.extract_strided_slice %216 {offsets = [0, 512], sizes = [1, 256], strides = [1, 1]} : vector<1x1024xf32> to vector<1x256xf32>
    %230 = math.tanh %229 : vector<1x256xf32>
    %231 = vector.extract_strided_slice %216 {offsets = [0, 768], sizes = [1, 256], strides = [1, 1]} : vector<1x1024xf32> to vector<1x256xf32>
    %232 = arith.negf %231 : vector<1x256xf32>
    %233 = math.exp %232 : vector<1x256xf32>
    %cst_49 = arith.constant 1.000000e+00 : f32
    %234 = vector.broadcast %cst_49 : f32 to vector<1x256xf32>
    %235 = arith.addf %234, %233 : vector<1x256xf32>
    %236 = arith.divf %234, %235 : vector<1x256xf32>
    %237 = arith.mulf %228, %210 : vector<1x256xf32>
    %238 = arith.mulf %222, %230 : vector<1x256xf32>
    %239 = arith.addf %237, %238 : vector<1x256xf32>
    %240 = math.tanh %239 : vector<1x256xf32>
    %241 = arith.mulf %236, %240 : vector<1x256xf32>
    %c7 = arith.constant 7 : index
    %c0_50 = arith.constant 0 : index
    %242 = vector.load %arg14[%c7, %c0_50] : memref<8x256xf32, #tpu.memory_space<vmem>>, vector<1x256xf32>
    tpu.vector_store %arg14[%c7, %c0_50], %241 {strides = array<i32>} : memref<8x256xf32, #tpu.memory_space<vmem>>, vector<1x256xf32>,
    %c0_51 = arith.constant 0 : index
    %c0_52 = arith.constant 0 : index
    %243 = vector.load %arg12[%c0_51, %c0_52] : memref<1x256xf32, #tpu.memory_space<vmem>>, vector<1x256xf32>
    tpu.vector_store %arg12[%c0_51, %c0_52], %241 {strides = array<i32>} : memref<1x256xf32, #tpu.memory_space<vmem>>, vector<1x256xf32>,
    %c0_53 = arith.constant 0 : index
    %c0_54 = arith.constant 0 : index
    %244 = vector.load %arg13[%c0_53, %c0_54] : memref<1x256xf32, #tpu.memory_space<vmem>>, vector<1x256xf32>
    tpu.vector_store %arg13[%c0_53, %c0_54], %239 {strides = array<i32>} : memref<1x256xf32, #tpu.memory_space<vmem>>, vector<1x256xf32>,
    %c0_55 = arith.constant 0 : index
    %c0_56 = arith.constant 0 : index
    %245 = vector.load %arg14[%c0_55, %c0_56] : memref<8x256xf32, #tpu.memory_space<vmem>>, vector<8x256xf32>
    %c0_57 = arith.constant 0 : index
    %c0_58 = arith.constant 0 : index
    %246 = vector.load %arg7[%c0_57, %c0_58] : memref<256x768xf32, #tpu.memory_space<vmem>>, vector<256x768xf32>
    %cst_59 = arith.constant dense<0.000000e+00> : vector<8x768xf32>
    %247 = tpu.matmul %245, %246, %cst_59 {dimension_numbers = #tpu.dot_dimension_numbers<[1], [0], [0], [1], [0, 0, 1, 1], [], []>} : vector<8x256xf32>, vector<256x768xf32>, vector<8x768xf32> -> vector<8x768xf32>
    %c0_60 = arith.constant 0 : index
    %c0_61 = arith.constant 0 : index
    %248 = vector.load %arg8[%c0_60, %c0_61] : memref<1x768xf32, #tpu.memory_space<vmem>>, vector<1x768xf32>
    %249 = vector.broadcast %248 : vector<1x768xf32> to vector<8x768xf32>
    %250 = arith.addf %247, %249 : vector<8x768xf32>
    %251 = math.tanh %250 : vector<8x768xf32>
    %c0_62 = arith.constant 0 : index
    %c0_63 = arith.constant 0 : index
    %252 = vector.load %arg9[%c0_62, %c0_63] : memref<768x128xf32, #tpu.memory_space<vmem>>, vector<768x128xf32>
    %cst_64 = arith.constant dense<0.000000e+00> : vector<8x128xf32>
    %253 = tpu.matmul %251, %252, %cst_64 {dimension_numbers = #tpu.dot_dimension_numbers<[1], [0], [0], [1], [0, 0, 1, 1], [], []>} : vector<8x768xf32>, vector<768x128xf32>, vector<8x128xf32> -> vector<8x128xf32>
    %c0_65 = arith.constant 0 : index
    %c0_66 = arith.constant 0 : index
    %254 = vector.load %arg10[%c0_65, %c0_66] : memref<1x128xf32, #tpu.memory_space<vmem>>, vector<1x128xf32>
    %255 = vector.broadcast %254 : vector<1x128xf32> to vector<8x128xf32>
    %256 = arith.addf %253, %255 : vector<8x128xf32>
    %c0_67 = arith.constant 0 : index
    %c0_68 = arith.constant 0 : index
    %257 = vector.load %arg11[%c0_67, %c0_68] : memref<8x128xf32, #tpu.memory_space<vmem>>, vector<8x128xf32>
    tpu.vector_store %arg11[%c0_67, %c0_68], %256 {strides = array<i32>} : memref<8x128xf32, #tpu.memory_space<vmem>>, vector<8x128xf32>,
    return
  }
  func.func @transform_0(%arg0: i32) -> (i32, i32) {
    %c0_i32 = arith.constant 0 : i32
    %c0_i32_0 = arith.constant 0 : i32
    %c0_i32_1 = arith.constant 0 : i32
    return %c0_i32, %c0_i32_0 : i32, i32
  }
  func.func @transform_1(%arg0: i32) -> (i32, i32) {
    %c0_i32 = arith.constant 0 : i32
    %c0_i32_0 = arith.constant 0 : i32
    %c0_i32_1 = arith.constant 0 : i32
    return %c0_i32, %c0_i32_0 : i32, i32
  }
  func.func @transform_2(%arg0: i32) -> (i32, i32) {
    %c0_i32 = arith.constant 0 : i32
    %c0_i32_0 = arith.constant 0 : i32
    %c0_i32_1 = arith.constant 0 : i32
    return %c0_i32, %c0_i32_0 : i32, i32
  }
  func.func @transform_3(%arg0: i32) -> (i32, i32) {
    %c0_i32 = arith.constant 0 : i32
    %c0_i32_0 = arith.constant 0 : i32
    %c0_i32_1 = arith.constant 0 : i32
    return %c0_i32, %c0_i32_0 : i32, i32
  }
  func.func @transform_4(%arg0: i32) -> (i32, i32) {
    %c0_i32 = arith.constant 0 : i32
    %c0_i32_0 = arith.constant 0 : i32
    %c0_i32_1 = arith.constant 0 : i32
    return %c0_i32, %c0_i32_0 : i32, i32
  }
  func.func @transform_5(%arg0: i32) -> (i32, i32) {
    %c0_i32 = arith.constant 0 : i32
    %c0_i32_0 = arith.constant 0 : i32
    %c0_i32_1 = arith.constant 0 : i32
    return %c0_i32, %c0_i32_0 : i32, i32
  }
  func.func @transform_6(%arg0: i32) -> (i32, i32) {
    %c0_i32 = arith.constant 0 : i32
    %c0_i32_0 = arith.constant 0 : i32
    %c0_i32_1 = arith.constant 0 : i32
    return %c0_i32, %c0_i32_0 : i32, i32
  }
  func.func @transform_7(%arg0: i32) -> (i32, i32) {
    %c0_i32 = arith.constant 0 : i32
    %c0_i32_0 = arith.constant 0 : i32
    %c0_i32_1 = arith.constant 0 : i32
    return %c0_i32, %c0_i32_0 : i32, i32
  }
  func.func @transform_8(%arg0: i32) -> (i32, i32) {
    %c0_i32 = arith.constant 0 : i32
    %c0_i32_0 = arith.constant 0 : i32
    %c0_i32_1 = arith.constant 0 : i32
    return %c0_i32, %c0_i32_0 : i32, i32
  }
  func.func @transform_9(%arg0: i32) -> (i32, i32) {
    %c0_i32 = arith.constant 0 : i32
    %c0_i32_0 = arith.constant 0 : i32
    %c0_i32_1 = arith.constant 0 : i32
    return %c0_i32, %c0_i32_0 : i32, i32
  }
  func.func @transform_10(%arg0: i32) -> (i32, i32) {
    %c0_i32 = arith.constant 0 : i32
    %c0_i32_0 = arith.constant 0 : i32
    %c0_i32_1 = arith.constant 0 : i32
    return %c0_i32, %c0_i32_0 : i32, i32
  }
  func.func @transform_11(%arg0: i32) -> (i32, i32) {
    %c0_i32 = arith.constant 0 : i32
    %c0_i32_0 = arith.constant 0 : i32
    %c0_i32_1 = arith.constant 0 : i32
    return %c0_i32, %c0_i32_0 : i32, i32
  }
  func.func @transform_12(%arg0: i32) -> (i32, i32) {
    %c0_i32 = arith.constant 0 : i32
    %c0_i32_0 = arith.constant 0 : i32
    %c0_i32_1 = arith.constant 0 : i32
    return %c0_i32, %c0_i32_0 : i32, i32
  }
}

</mosaic_0001>

<llo_original>
// kernel: simple_policy_gradient_forward.1
$region0: #{simple_policy_gradient_forward.1}
  #allocation0 [shape = 'u32[]', space=smem, size = 0x4, offset = 0x4, fixed_abs, tag = 'smem constant byte address 0x4 - core index']
  #allocation1 [shape = 'u32[144,128]{1,0:T(1,128)}', space=vmem, size = 0x12000, scoped, tag = 'internal scratch']
  #allocation2 [shape = 'f32[8,256]{1,0:T(8,128)}', space=vmem, size = 0x2000, scoped, tag = 'scratch operand']
  %s0 = inlined_call_operand.vmem [shape: f32[8,1], index: 0, kind: input, shape index: {}]
  %s1 = inlined_call_operand.vmem [shape: f32[1,256], index: 1, kind: input, shape index: {}]
  %s2 = inlined_call_operand.vmem [shape: f32[1,256], index: 2, kind: input, shape index: {}]
  %s3 = inlined_call_operand.vmem [shape: f32[1,1024], index: 3, kind: input, shape index: {}]
  %s4 = inlined_call_operand.hbm [shape: f32[256,1024], index: 4, kind: input, shape index: {}]
  %s5 = inlined_call_operand.vmem [shape: f32[1,1024], index: 5, kind: input, shape index: {}]
  %s6 = inlined_call_operand.hbm [shape: f32[256,768], index: 6, kind: input, shape index: {}]
  %s7 = inlined_call_operand.hbm [shape: f32[1,768], index: 7, kind: input, shape index: {}]
  %s8 = inlined_call_operand.hbm [shape: f32[768,128], index: 8, kind: input, shape index: {}]
  %s9 = inlined_call_operand.hbm [shape: f32[1,128], index: 9, kind: input, shape index: {}]
  %s10 = inlined_call_operand.vmem [shape: f32[8,128], index: 10, kind: output, shape index: {0}]
  %s11 = inlined_call_operand.hbm [shape: f32[1,256], index: 11, kind: output, shape index: {1}]
  %s12 = inlined_call_operand.hbm [shape: f32[1,256], index: 12, kind: output, shape index: {2}]
  %13 = xla_tuple %s10, %s11, %s12
  %s14 = sld [smem:[#allocation0]]
  $region86: #{simple_policy_gradient_forward.1} parent=0
    _
  %s16 = ssub.s32 1, %s14
  %s17 = scalar_select 0, %s16, %s14
  $region1: #{simple_policy_gradient_forward.1} parent=0
    #allocation3 [shape = 'u8[1048576]{0}', space=vmem, size = 0x100000, scoped, tag = 'input window, operand 4, single buffered']
    #allocation4 [shape = 's32[1]{0}', space=sflag, size = 0x4, scoped, tag = 'scoped memory for simple_policy_gradient_forward.1']
    #allocation5 [shape = 's32[1]{0}', space=sflag, size = 0x4, scoped, tag = 'scoped memory for simple_policy_gradient_forward.1']
    #allocation6 [shape = 'u8[786432]{0}', space=vmem, size = 0xc0000, scoped, tag = 'input window, operand 6, single buffered']
    #allocation7 [shape = 's32[1]{0}', space=sflag, size = 0x4, scoped, tag = 'scoped memory for simple_policy_gradient_forward.1']
    #allocation8 [shape = 'u8[3072]{0}', space=vmem, size = 0xc00, scoped, tag = 'input window, operand 7, single buffered']
    #allocation9 [shape = 'u8[393216]{0}', space=vmem, size = 0x60000, scoped, tag = 'input window, operand 8, single buffered']
    #allocation10 [shape = 's32[1]{0}', space=sflag, size = 0x4, scoped, tag = 'scoped memory for simple_policy_gradient_forward.1']
    #allocation11 [shape = 'u8[512]{0}', space=vmem, size = 0x400, scoped, tag = 'input window, operand 9, single buffered']
    #allocation12 [shape = 'u8[1024]{0}', space=vmem, size = 0x400, scoped, tag = 'output window, operand 1, single buffered']
    #allocation13 [shape = 'u8[1024]{0}', space=vmem, size = 0x400, scoped, tag = 'output window, operand 2, single buffered']
    #allocation14 [shape = 's32[1]{0}', space=sflag, size = 0x4, scoped, tag = 'scoped memory for simple_policy_gradient_forward.1']
    %18 = vsyncpa [#allocation4], 0
    %19 = vsyncpa [#allocation7], 0
    %20 = vsyncpa [#allocation10], 0
    %21 = vsyncpa [#allocation5], 0
    %22 = vsyncpa [#allocation14], 0
    // Predicated region
    $region2: #{simple_policy_gradient_forward.1} parent=1 // pred_check
      _
    $region3: #{simple_policy_gradient_forward.1} parent=1 // pred_check_branch
      %24 = sbr.rel (0) target = $region5
    $region4: #{simple_policy_gradient_forward.1} parent=1 // pred_region
      _
    $region5: #{simple_policy_gradient_forward.1} parent=1 // pred_fallthru
      _
    // Predicated region
    $region6: #{simple_policy_gradient_forward.1} parent=1 // pred_check
      _
    $region7: #{simple_policy_gradient_forward.1} parent=1 // pred_check_branch
      %26 = sbr.rel (0) target = $region9
    $region8: #{simple_policy_gradient_forward.1} parent=1 // pred_region
      _
    $region9: #{simple_policy_gradient_forward.1} parent=1 // pred_fallthru
      _
    // Predicated region
    $region10: #{simple_policy_gradient_forward.1} parent=1 // pred_check
      _
    $region11: #{simple_policy_gradient_forward.1} parent=1 // pred_check_branch
      %28 = sbr.rel (0) target = $region13
    $region12: #{simple_policy_gradient_forward.1} parent=1 // pred_region
      _
    $region13: #{simple_policy_gradient_forward.1} parent=1 // pred_fallthru
      _
    // Predicated region
    $region14: #{simple_policy_gradient_forward.1} parent=1 // pred_check
      _
    $region15: #{simple_policy_gradient_forward.1} parent=1 // pred_check_branch
      %30 = sbr.rel (0) target = $region17
    $region16: #{simple_policy_gradient_forward.1} parent=1 // pred_region
      _
    $region17: #{simple_policy_gradient_forward.1} parent=1 // pred_fallthru
      _
    // Predicated region
    $region18: #{simple_policy_gradient_forward.1} parent=1 // pred_check
      _
    $region19: #{simple_policy_gradient_forward.1} parent=1 // pred_check_branch
      %32 = sbr.rel (0) target = $region21
    $region20: #{simple_policy_gradient_forward.1} parent=1 // pred_region
      %s34 = ssub.s32 32768, 32768
      %35 = vsyncadd [#allocation4], %s34
      %s36 = sshll.u32 [#allocation3], 4
      %s37 = int_to_ptr.vmem [resolvable:$true] %s36
      %42 = dma.hbm_to_vmem [thread:$0]  %s4, 32768, %s37, [#allocation4], 1024, 1024, 64
    $region21: #{simple_policy_gradient_forward.1} parent=1 // pred_fallthru
      _
    // Predicated region
    $region22: #{simple_policy_gradient_forward.1} parent=1 // pred_check
      _
    $region23: #{simple_policy_gradient_forward.1} parent=1 // pred_check_branch
      %44 = sbr.rel (0) target = $region25
    $region24: #{simple_policy_gradient_forward.1} parent=1 // pred_region
      _
    $region25: #{simple_policy_gradient_forward.1} parent=1 // pred_fallthru
      _
    // Predicated region
    $region26: #{simple_policy_gradient_forward.1} parent=1 // pred_check
      _
    $region27: #{simple_policy_gradient_forward.1} parent=1 // pred_check_branch
      %46 = sbr.rel (0) target = $region29
    $region28: #{simple_policy_gradient_forward.1} parent=1 // pred_region
      %s48 = ssub.s32 24576, 24576
      %49 = vsyncadd [#allocation7], %s48
      %s50 = sshll.u32 [#allocation6], 4
      %s51 = int_to_ptr.vmem [resolvable:$true] %s50
      %56 = dma.hbm_to_vmem [thread:$0]  %s6, 24576, %s51, [#allocation7], 768, 768, 48
    $region29: #{simple_policy_gradient_forward.1} parent=1 // pred_fallthru
      _
    // Predicated region
    $region30: #{simple_policy_gradient_forward.1} parent=1 // pred_check
      _
    $region31: #{simple_policy_gradient_forward.1} parent=1 // pred_check_branch
      %58 = sbr.rel (0) target = $region33
    $region32: #{simple_policy_gradient_forward.1} parent=1 // pred_region
      %s60 = ssub.s32 96, 96
      %61 = vsyncadd [#allocation7], %s60
      %s63 = sshll.u32 [#allocation8], 4
      %s64 = int_to_ptr.vmem [resolvable:$true] %s63
      %66 = dma.hbm_to_vmem [thread:$0]  %s7, 96, %s64, [#allocation7]
    $region33: #{simple_policy_gradient_forward.1} parent=1 // pred_fallthru
      _
    // Predicated region
    $region34: #{simple_policy_gradient_forward.1} parent=1 // pred_check
      _
    $region35: #{simple_policy_gradient_forward.1} parent=1 // pred_check_branch
      %68 = sbr.rel (0) target = $region37
    $region36: #{simple_policy_gradient_forward.1} parent=1 // pred_region
      %s70 = ssub.s32 12288, 12288
      %71 = vsyncadd [#allocation10], %s70
      %s72 = sshll.u32 [#allocation9], 4
      %s73 = int_to_ptr.vmem [resolvable:$true] %s72
      %78 = dma.hbm_to_vmem [thread:$0]  %s8, 12288, %s73, [#allocation10], 128, 128, 8
    $region37: #{simple_policy_gradient_forward.1} parent=1 // pred_fallthru
      _
    // Predicated region
    $region38: #{simple_policy_gradient_forward.1} parent=1 // pred_check
      _
    $region39: #{simple_policy_gradient_forward.1} parent=1 // pred_check_branch
      %80 = sbr.rel (0) target = $region41
    $region40: #{simple_policy_gradient_forward.1} parent=1 // pred_region
      %s82 = ssub.s32 16, 16
      %83 = vsyncadd [#allocation10], %s82
      %s85 = sshll.u32 [#allocation11], 4
      %s86 = int_to_ptr.vmem [resolvable:$true] %s85
      %88 = dma.hbm_to_vmem [thread:$0]  %s9, 16, %s86, [#allocation10]
    $region41: #{simple_policy_gradient_forward.1} parent=1 // pred_fallthru
      _
    // Predicated region
    $region42: #{simple_policy_gradient_forward.1} parent=1 // pred_check
      _
    $region43: #{simple_policy_gradient_forward.1} parent=1 // pred_check_branch
      %90 = sbr.rel (0) target = $region45
    $region44: #{simple_policy_gradient_forward.1} parent=1 // pred_region
      %91 = dma.done [#allocation4], 32768
    $region45: #{simple_policy_gradient_forward.1} parent=1 // pred_fallthru
      _
    // Predicated region
    $region46: #{simple_policy_gradient_forward.1} parent=1 // pred_check
      _
    $region47: #{simple_policy_gradient_forward.1} parent=1 // pred_check_branch
      %93 = sbr.rel (0) target = $region49
    $region48: #{simple_policy_gradient_forward.1} parent=1 // pred_region
      %94 = dma.done [#allocation7], 24576
    $region49: #{simple_policy_gradient_forward.1} parent=1 // pred_fallthru
      _
    // Predicated region
    $region50: #{simple_policy_gradient_forward.1} parent=1 // pred_check
      _
    $region51: #{simple_policy_gradient_forward.1} parent=1 // pred_check_branch
      %96 = sbr.rel (0) target = $region53
    $region52: #{simple_policy_gradient_forward.1} parent=1 // pred_region
      %97 = dma.done [#allocation7], 96
    $region53: #{simple_policy_gradient_forward.1} parent=1 // pred_fallthru
      _
    // Predicated region
    $region54: #{simple_policy_gradient_forward.1} parent=1 // pred_check
      _
    $region55: #{simple_policy_gradient_forward.1} parent=1 // pred_check_branch
      %99 = sbr.rel (0) target = $region57
    $region56: #{simple_policy_gradient_forward.1} parent=1 // pred_region
      %100 = dma.done [#allocation10], 12288
    $region57: #{simple_policy_gradient_forward.1} parent=1 // pred_fallthru
      _
    // Predicated region
    $region58: #{simple_policy_gradient_forward.1} parent=1 // pred_check
      _
    $region59: #{simple_policy_gradient_forward.1} parent=1 // pred_check_branch
      %102 = sbr.rel (0) target = $region61
    $region60: #{simple_policy_gradient_forward.1} parent=1 // pred_region
      %103 = dma.done [#allocation10], 16
    $region61: #{simple_policy_gradient_forward.1} parent=1 // pred_fallthru
      _
    %v104 = vld [vmem:[%s0] sm:$0xff]
    %v105 = vld [vmem:[%s3] sm:$0xff]
    %107 = vset.pattern.permute.xlu0 0
    %108 = vperm.xlu0 %107, %v104
    %v109 = vpop.permute.xlu0 %108
    %v112 = vlaneseq
    %v113 = vshrl.u32 %v112, 7
    %v114 = vsub.s32 0, %v113
    %v115 = vrot.slane %v105, %v114
    %v116 = vlaneseq
    %v117 = vshrl.u32 %v116, 7
    %v118 = vsub.s32 1, %v117
    %v119 = vrot.slane %v105, %v118
    %v120 = vlaneseq
    %v121 = vshrl.u32 %v120, 7
    %v122 = vsub.s32 2, %v121
    %v123 = vrot.slane %v105, %v122
    %v124 = vlaneseq
    %v125 = vshrl.u32 %v124, 7
    %v126 = vsub.s32 3, %v125
    %v127 = vrot.slane %v105, %v126
    %v128 = vlaneseq
    %v129 = vshrl.u32 %v128, 7
    %v130 = vsub.s32 4, %v129
    %v131 = vrot.slane %v105, %v130
    %v132 = vlaneseq
    %v133 = vshrl.u32 %v132, 7
    %v134 = vsub.s32 5, %v133
    %v135 = vrot.slane %v105, %v134
    %v136 = vlaneseq
    %v137 = vshrl.u32 %v136, 7
    %v138 = vsub.s32 6, %v137
    %v139 = vrot.slane %v105, %v138
    %v140 = vlaneseq
    %v141 = vshrl.u32 %v140, 7
    %v142 = vsub.s32 7, %v141
    %v143 = vrot.slane %v105, %v142
    %v152 = vmul.f32 %v109, %v115
    %v153 = vmul.f32 %v109, %v119
    %v154 = vmul.f32 %v109, %v123
    %v155 = vmul.f32 %v109, %v127
    %v156 = vmul.f32 %v109, %v131
    %v157 = vmul.f32 %v109, %v135
    %v158 = vmul.f32 %v109, %v139
    %v159 = vmul.f32 %v109, %v143
    %v160 = vld [vmem:[%s5] sm:$0xff]
    %v162 = vlaneseq
    %v163 = vshrl.u32 %v162, 7
    %v164 = vsub.s32 0, %v163
    %v165 = vrot.slane %v160, %v164
    %v166 = vlaneseq
    %v167 = vshrl.u32 %v166, 7
    %v168 = vsub.s32 1, %v167
    %v169 = vrot.slane %v160, %v168
    %v170 = vlaneseq
    %v171 = vshrl.u32 %v170, 7
    %v172 = vsub.s32 2, %v171
    %v173 = vrot.slane %v160, %v172
    %v174 = vlaneseq
    %v175 = vshrl.u32 %v174, 7
    %v176 = vsub.s32 3, %v175
    %v177 = vrot.slane %v160, %v176
    %v178 = vlaneseq
    %v179 = vshrl.u32 %v178, 7
    %v180 = vsub.s32 4, %v179
    %v181 = vrot.slane %v160, %v180
    %v182 = vlaneseq
    %v183 = vshrl.u32 %v182, 7
    %v184 = vsub.s32 5, %v183
    %v185 = vrot.slane %v160, %v184
    %v186 = vlaneseq
    %v187 = vshrl.u32 %v186, 7
    %v188 = vsub.s32 6, %v187
    %v189 = vrot.slane %v160, %v188
    %v190 = vlaneseq
    %v191 = vshrl.u32 %v190, 7
    %v192 = vsub.s32 7, %v191
    %v193 = vrot.slane %v160, %v192
    %v202 = vadd.f32 %v152, %v165
    %v203 = vadd.f32 %v153, %v169
    %v204 = vadd.f32 %v154, %v173
    %v205 = vadd.f32 %v155, %v177
    %v206 = vadd.f32 %v156, %v181
    %v207 = vadd.f32 %v157, %v185
    %v208 = vadd.f32 %v158, %v189
    %v209 = vadd.f32 %v159, %v193
    %v210 = vld [vmem:[#allocation3] sm:$0xff]
    %v211 = vld [vmem:[#allocation3 + $0x8] sm:$0xff]
    %v212 = vld [vmem:[#allocation3 + $0x10] sm:$0xff]
    %v213 = vld [vmem:[#allocation3 + $0x18] sm:$0xff]
    %v214 = vld [vmem:[#allocation3 + $0x20] sm:$0xff]
    %v215 = vld [vmem:[#allocation3 + $0x28] sm:$0xff]
    %v216 = vld [vmem:[#allocation3 + $0x30] sm:$0xff]
    %v217 = vld [vmem:[#allocation3 + $0x38] sm:$0xff]
    %v218 = vld [vmem:[#allocation3 + $0x40] sm:$0xff]
    %v219 = vld [vmem:[#allocation3 + $0x48] sm:$0xff]
    %v220 = vld [vmem:[#allocation3 + $0x50] sm:$0xff]
    %v221 = vld [vmem:[#allocation3 + $0x58] sm:$0xff]
    %v222 = vld [vmem:[#allocation3 + $0x60] sm:$0xff]
    %v223 = vld [vmem:[#allocation3 + $0x68] sm:$0xff]
    %v224 = vld [vmem:[#allocation3 + $0x70] sm:$0xff]
    %v225 = vld [vmem:[#allocation3 + $0x78] sm:$0xff]
    %v226 = vld [vmem:[#allocation3 + $0x80] sm:$0xff]
    %v227 = vld [vmem:[#allocation3 + $0x88] sm:$0xff]
    %v228 = vld [vmem:[#allocation3 + $0x90] sm:$0xff]
    %v229 = vld [vmem:[#allocation3 + $0x98] sm:$0xff]
    %v230 = vld [vmem:[#allocation3 + $0xa0] sm:$0xff]
    %v231 = vld [vmem:[#allocation3 + $0xa8] sm:$0xff]
    %v232 = vld [vmem:[#allocation3 + $0xb0] sm:$0xff]
    %v233 = vld [vmem:[#allocation3 + $0xb8] sm:$0xff]
    %v234 = vld [vmem:[#allocation3 + $0xc0] sm:$0xff]
    %v235 = vld [vmem:[#allocation3 + $0xc8] sm:$0xff]
    %v236 = vld [vmem:[#allocation3 + $0xd0] sm:$0xff]
    %v237 = vld [vmem:[#allocation3 + $0xd8] sm:$0xff]
    %v238 = vld [vmem:[#allocation3 + $0xe0] sm:$0xff]
    %v239 = vld [vmem:[#allocation3 + $0xe8] sm:$0xff]
    %v240 = vld [vmem:[#allocation3 + $0xf0] sm:$0xff]
    %v241 = vld [vmem:[#allocation3 + $0xf8] sm:$0xff]
    %v242 = vld [vmem:[#allocation3 + $0x100] sm:$0xff]
    %v243 = vld [vmem:[#allocation3 + $0x108] sm:$0xff]
    %v244 = vld [vmem:[#allocation3 + $0x110] sm:$0xff]
    %v245 = vld [vmem:[#allocation3 + $0x118] sm:$0xff]
    %v246 = vld [vmem:[#allocation3 + $0x120] sm:$0xff]
    %v247 = vld [vmem:[#allocation3 + $0x128] sm:$0xff]
    %v248 = vld [vmem:[#allocation3 + $0x130] sm:$0xff]
    %v249 = vld [vmem:[#allocation3 + $0x138] sm:$0xff]
    %v250 = vld [vmem:[#allocation3 + $0x140] sm:$0xff]
    %v251 = vld [vmem:[#allocation3 + $0x148] sm:$0xff]
    %v252 = vld [vmem:[#allocation3 + $0x150] sm:$0xff]
    %v253 = vld [vmem:[#allocation3 + $0x158] sm:$0xff]
    %v254 = vld [vmem:[#allocation3 + $0x160] sm:$0xff]
    %v255 = vld [vmem:[#allocation3 + $0x168] sm:$0xff]
    %v256 = vld [vmem:[#allocation3 + $0x170] sm:$0xff]
    %v257 = vld [vmem:[#allocation3 + $0x178] sm:$0xff]
    %v258 = vld [vmem:[#allocation3 + $0x180] sm:$0xff]
    %v259 = vld [vmem:[#allocation3 + $0x188] sm:$0xff]
    %v260 = vld [vmem:[#allocation3 + $0x190] sm:$0xff]
    %v261 = vld [vmem:[#allocation3 + $0x198] sm:$0xff]
    %v262 = vld [vmem:[#allocation3 + $0x1a0] sm:$0xff]
    %v263 = vld [vmem:[#allocation3 + $0x1a8] sm:$0xff]
    %v264 = vld [vmem:[#allocation3 + $0x1b0] sm:$0xff]
    %v265 = vld [vmem:[#allocation3 + $0x1b8] sm:$0xff]
    %v266 = vld [vmem:[#allocation3 + $0x1c0] sm:$0xff]
    %v267 = vld [vmem:[#allocation3 + $0x1c8] sm:$0xff]
    %v268 = vld [vmem:[#allocation3 + $0x1d0] sm:$0xff]
    %v269 = vld [vmem:[#allocation3 + $0x1d8] sm:$0xff]
    %v270 = vld [vmem:[#allocation3 + $0x1e0] sm:$0xff]
    %v271 = vld [vmem:[#allocation3 + $0x1e8] sm:$0xff]
    %v272 = vld [vmem:[#allocation3 + $0x1f0] sm:$0xff]
    %v273 = vld [vmem:[#allocation3 + $0x1f8] sm:$0xff]
    %v274 = vld [vmem:[#allocation3 + $0x200] sm:$0xff]
    %v275 = vld [vmem:[#allocation3 + $0x208] sm:$0xff]
    %v276 = vld [vmem:[#allocation3 + $0x210] sm:$0xff]
    %v277 = vld [vmem:[#allocation3 + $0x218] sm:$0xff]
    %v278 = vld [vmem:[#allocation3 + $0x220] sm:$0xff]
    %v279 = vld [vmem:[#allocation3 + $0x228] sm:$0xff]
    %v280 = vld [vmem:[#allocation3 + $0x230] sm:$0xff]
    %v281 = vld [vmem:[#allocation3 + $0x238] sm:$0xff]
    %v282 = vld [vmem:[#allocation3 + $0x240] sm:$0xff]
    %v283 = vld [vmem:[#allocation3 + $0x248] sm:$0xff]
    %v284 = vld [vmem:[#allocation3 + $0x250] sm:$0xff]
    %v285 = vld [vmem:[#allocation3 + $0x258] sm:$0xff]
    %v286 = vld [vmem:[#allocation3 + $0x260] sm:$0xff]
    %v287 = vld [vmem:[#allocation3 + $0x268] sm:$0xff]
    %v288 = vld [vmem:[#allocation3 + $0x270] sm:$0xff]
    %v289 = vld [vmem:[#allocation3 + $0x278] sm:$0xff]
    %v290 = vld [vmem:[#allocation3 + $0x280] sm:$0xff]
    %v291 = vld [vmem:[#allocation3 + $0x288] sm:$0xff]
    %v292 = vld [vmem:[#allocation3 + $0x290] sm:$0xff]
    %v293 = vld [vmem:[#allocation3 + $0x298] sm:$0xff]
    %v294 = vld [vmem:[#allocation3 + $0x2a0] sm:$0xff]
    %v295 = vld [vmem:[#allocation3 + $0x2a8] sm:$0xff]
    %v296 = vld [vmem:[#allocation3 + $0x2b0] sm:$0xff]
    %v297 = vld [vmem:[#allocation3 + $0x2b8] sm:$0xff]
    %v298 = vld [vmem:[#allocation3 + $0x2c0] sm:$0xff]
    %v299 = vld [vmem:[#allocation3 + $0x2c8] sm:$0xff]
    %v300 = vld [vmem:[#allocation3 + $0x2d0] sm:$0xff]
    %v301 = vld [vmem:[#allocation3 + $0x2d8] sm:$0xff]
    %v302 = vld [vmem:[#allocation3 + $0x2e0] sm:$0xff]
    %v303 = vld [vmem:[#allocation3 + $0x2e8] sm:$0xff]
    %v304 = vld [vmem:[#allocation3 + $0x2f0] sm:$0xff]
    %v305 = vld [vmem:[#allocation3 + $0x2f8] sm:$0xff]
    %v306 = vld [vmem:[#allocation3 + $0x300] sm:$0xff]
    %v307 = vld [vmem:[#allocation3 + $0x308] sm:$0xff]
    %v308 = vld [vmem:[#allocation3 + $0x310] sm:$0xff]
    %v309 = vld [vmem:[#allocation3 + $0x318] sm:$0xff]
    %v310 = vld [vmem:[#allocation3 + $0x320] sm:$0xff]
    %v311 = vld [vmem:[#allocation3 + $0x328] sm:$0xff]
    %v312 = vld [vmem:[#allocation3 + $0x330] sm:$0xff]
    %v313 = vld [vmem:[#allocation3 + $0x338] sm:$0xff]
    %v314 = vld [vmem:[#allocation3 + $0x340] sm:$0xff]
    %v315 = vld [vmem:[#allocation3 + $0x348] sm:$0xff]
    %v316 = vld [vmem:[#allocation3 + $0x350] sm:$0xff]
    %v317 = vld [vmem:[#allocation3 + $0x358] sm:$0xff]
    %v318 = vld [vmem:[#allocation3 + $0x360] sm:$0xff]
    %v319 = vld [vmem:[#allocation3 + $0x368] sm:$0xff]
    %v320 = vld [vmem:[#allocation3 + $0x370] sm:$0xff]
    %v321 = vld [vmem:[#allocation3 + $0x378] sm:$0xff]
    %v322 = vld [vmem:[#allocation3 + $0x380] sm:$0xff]
    %v323 = vld [vmem:[#allocation3 + $0x388] sm:$0xff]
    %v324 = vld [vmem:[#allocation3 + $0x390] sm:$0xff]
    %v325 = vld [vmem:[#allocation3 + $0x398] sm:$0xff]
    %v326 = vld [vmem:[#allocation3 + $0x3a0] sm:$0xff]
    %v327 = vld [vmem:[#allocation3 + $0x3a8] sm:$0xff]
    %v328 = vld [vmem:[#allocation3 + $0x3b0] sm:$0xff]
    %v329 = vld [vmem:[#allocation3 + $0x3b8] sm:$0xff]
    %v330 = vld [vmem:[#allocation3 + $0x3c0] sm:$0xff]
    %v331 = vld [vmem:[#allocation3 + $0x3c8] sm:$0xff]
    %v332 = vld [vmem:[#allocation3 + $0x3d0] sm:$0xff]
    %v333 = vld [vmem:[#allocation3 + $0x3d8] sm:$0xff]
    %v334 = vld [vmem:[#allocation3 + $0x3e0] sm:$0xff]
    %v335 = vld [vmem:[#allocation3 + $0x3e8] sm:$0xff]
    %v336 = vld [vmem:[#allocation3 + $0x3f0] sm:$0xff]
    %v337 = vld [vmem:[#allocation3 + $0x3f8] sm:$0xff]
    %v338 = vld [vmem:[#allocation3 + $0x400] sm:$0xff]
    %v339 = vld [vmem:[#allocation3 + $0x408] sm:$0xff]
    %v340 = vld [vmem:[#allocation3 + $0x410] sm:$0xff]
    %v341 = vld [vmem:[#allocation3 + $0x418] sm:$0xff]
    %v342 = vld [vmem:[#allocation3 + $0x420] sm:$0xff]
    %v343 = vld [vmem:[#allocation3 + $0x428] sm:$0xff]
    %v344 = vld [vmem:[#allocation3 + $0x430] sm:$0xff]
    %v345 = vld [vmem:[#allocation3 + $0x438] sm:$0xff]
    %v346 = vld [vmem:[#allocation3 + $0x440] sm:$0xff]
    %v347 = vld [vmem:[#allocation3 + $0x448] sm:$0xff]
    %v348 = vld [vmem:[#allocation3 + $0x450] sm:$0xff]
    %v349 = vld [vmem:[#allocation3 + $0x458] sm:$0xff]
    %v350 = vld [vmem:[#allocation3 + $0x460] sm:$0xff]
    %v351 = vld [vmem:[#allocation3 + $0x468] sm:$0xff]
    %v352 = vld [vmem:[#allocation3 + $0x470] sm:$0xff]
    %v353 = vld [vmem:[#allocation3 + $0x478] sm:$0xff]
    %v354 = vld [vmem:[#allocation3 + $0x480] sm:$0xff]
    %v355 = vld [vmem:[#allocation3 + $0x488] sm:$0xff]
    %v356 = vld [vmem:[#allocation3 + $0x490] sm:$0xff]
    %v357 = vld [vmem:[#allocation3 + $0x498] sm:$0xff]
    %v358 = vld [vmem:[#allocation3 + $0x4a0] sm:$0xff]
    %v359 = vld [vmem:[#allocation3 + $0x4a8] sm:$0xff]
    %v360 = vld [vmem:[#allocation3 + $0x4b0] sm:$0xff]
    %v361 = vld [vmem:[#allocation3 + $0x4b8] sm:$0xff]
    %v362 = vld [vmem:[#allocation3 + $0x4c0] sm:$0xff]
    %v363 = vld [vmem:[#allocation3 + $0x4c8] sm:$0xff]
    %v364 = vld [vmem:[#allocation3 + $0x4d0] sm:$0xff]
    %v365 = vld [vmem:[#allocation3 + $0x4d8] sm:$0xff]
    %v366 = vld [vmem:[#allocation3 + $0x4e0] sm:$0xff]
    %v367 = vld [vmem:[#allocation3 + $0x4e8] sm:$0xff]
    %v368 = vld [vmem:[#allocation3 + $0x4f0] sm:$0xff]
    %v369 = vld [vmem:[#allocation3 + $0x4f8] sm:$0xff]
    %v370 = vld [vmem:[#allocation3 + $0x500] sm:$0xff]
    %v371 = vld [vmem:[#allocation3 + $0x508] sm:$0xff]
    %v372 = vld [vmem:[#allocation3 + $0x510] sm:$0xff]
    %v373 = vld [vmem:[#allocation3 + $0x518] sm:$0xff]
    %v374 = vld [vmem:[#allocation3 + $0x520] sm:$0xff]
    %v375 = vld [vmem:[#allocation3 + $0x528] sm:$0xff]
    %v376 = vld [vmem:[#allocation3 + $0x530] sm:$0xff]
    %v377 = vld [vmem:[#allocation3 + $0x538] sm:$0xff]
    %v378 = vld [vmem:[#allocation3 + $0x540] sm:$0xff]
    %v379 = vld [vmem:[#allocation3 + $0x548] sm:$0xff]
    %v380 = vld [vmem:[#allocation3 + $0x550] sm:$0xff]
    %v381 = vld [vmem:[#allocation3 + $0x558] sm:$0xff]
    %v382 = vld [vmem:[#allocation3 + $0x560] sm:$0xff]
    %v383 = vld [vmem:[#allocation3 + $0x568] sm:$0xff]
    %v384 = vld [vmem:[#allocation3 + $0x570] sm:$0xff]
    %v385 = vld [vmem:[#allocation3 + $0x578] sm:$0xff]
    %v386 = vld [vmem:[#allocation3 + $0x580] sm:$0xff]
    %v387 = vld [vmem:[#allocation3 + $0x588] sm:$0xff]
    %v388 = vld [vmem:[#allocation3 + $0x590] sm:$0xff]
    %v389 = vld [vmem:[#allocation3 + $0x598] sm:$0xff]
    %v390 = vld [vmem:[#allocation3 + $0x5a0] sm:$0xff]
    %v391 = vld [vmem:[#allocation3 + $0x5a8] sm:$0xff]
    %v392 = vld [vmem:[#allocation3 + $0x5b0] sm:$0xff]
    %v393 = vld [vmem:[#allocation3 + $0x5b8] sm:$0xff]
    %v394 = vld [vmem:[#allocation3 + $0x5c0] sm:$0xff]
    %v395 = vld [vmem:[#allocation3 + $0x5c8] sm:$0xff]
    %v396 = vld [vmem:[#allocation3 + $0x5d0] sm:$0xff]
    %v397 = vld [vmem:[#allocation3 + $0x5d8] sm:$0xff]
    %v398 = vld [vmem:[#allocation3 + $0x5e0] sm:$0xff]
    %v399 = vld [vmem:[#allocation3 + $0x5e8] sm:$0xff]
    %v400 = vld [vmem:[#allocation3 + $0x5f0] sm:$0xff]
    %v401 = vld [vmem:[#allocation3 + $0x5f8] sm:$0xff]
    %v402 = vld [vmem:[#allocation3 + $0x600] sm:$0xff]
    %v403 = vld [vmem:[#allocation3 + $0x608] sm:$0xff]
    %v404 = vld [vmem:[#allocation3 + $0x610] sm:$0xff]
    %v405 = vld [vmem:[#allocation3 + $0x618] sm:$0xff]
    %v406 = vld [vmem:[#allocation3 + $0x620] sm:$0xff]
    %v407 = vld [vmem:[#allocation3 + $0x628] sm:$0xff]
    %v408 = vld [vmem:[#allocation3 + $0x630] sm:$0xff]
    %v409 = vld [vmem:[#allocation3 + $0x638] sm:$0xff]
    %v410 = vld [vmem:[#allocation3 + $0x640] sm:$0xff]
    %v411 = vld [vmem:[#allocation3 + $0x648] sm:$0xff]
    %v412 = vld [vmem:[#allocation3 + $0x650] sm:$0xff]
    %v413 = vld [vmem:[#allocation3 + $0x658] sm:$0xff]
    %v414 = vld [vmem:[#allocation3 + $0x660] sm:$0xff]
    %v415 = vld [vmem:[#allocation3 + $0x668] sm:$0xff]
    %v416 = vld [vmem:[#allocation3 + $0x670] sm:$0xff]
    %v417 = vld [vmem:[#allocation3 + $0x678] sm:$0xff]
    %v418 = vld [vmem:[#allocation3 + $0x680] sm:$0xff]
    %v419 = vld [vmem:[#allocation3 + $0x688] sm:$0xff]
    %v420 = vld [vmem:[#allocation3 + $0x690] sm:$0xff]
    %v421 = vld [vmem:[#allocation3 + $0x698] sm:$0xff]
    %v422 = vld [vmem:[#allocation3 + $0x6a0] sm:$0xff]
    %v423 = vld [vmem:[#allocation3 + $0x6a8] sm:$0xff]
    %v424 = vld [vmem:[#allocation3 + $0x6b0] sm:$0xff]
    %v425 = vld [vmem:[#allocation3 + $0x6b8] sm:$0xff]
    %v426 = vld [vmem:[#allocation3 + $0x6c0] sm:$0xff]
    %v427 = vld [vmem:[#allocation3 + $0x6c8] sm:$0xff]
    %v428 = vld [vmem:[#allocation3 + $0x6d0] sm:$0xff]
    %v429 = vld [vmem:[#allocation3 + $0x6d8] sm:$0xff]
    %v430 = vld [vmem:[#allocation3 + $0x6e0] sm:$0xff]
    %v431 = vld [vmem:[#allocation3 + $0x6e8] sm:$0xff]
    %v432 = vld [vmem:[#allocation3 + $0x6f0] sm:$0xff]
    %v433 = vld [vmem:[#allocation3 + $0x6f8] sm:$0xff]
    %v434 = vld [vmem:[#allocation3 + $0x700] sm:$0xff]
    %v435 = vld [vmem:[#allocation3 + $0x708] sm:$0xff]
    %v436 = vld [vmem:[#allocation3 + $0x710] sm:$0xff]
    %v437 = vld [vmem:[#allocation3 + $0x718] sm:$0xff]
    %v438 = vld [vmem:[#allocation3 + $0x720] sm:$0xff]
    %v439 = vld [vmem:[#allocation3 + $0x728] sm:$0xff]
    %v440 = vld [vmem:[#allocation3 + $0x730] sm:$0xff]
    %v441 = vld [vmem:[#allocation3 + $0x738] sm:$0xff]
    %v442 = vld [vmem:[#allocation3 + $0x740] sm:$0xff]
    %v443 = vld [vmem:[#allocation3 + $0x748] sm:$0xff]
    %v444 = vld [vmem:[#allocation3 + $0x750] sm:$0xff]
    %v445 = vld [vmem:[#allocation3 + $0x758] sm:$0xff]
    %v446 = vld [vmem:[#allocation3 + $0x760] sm:$0xff]
    %v447 = vld [vmem:[#allocation3 + $0x768] sm:$0xff]
    %v448 = vld [vmem:[#allocation3 + $0x770] sm:$0xff]
    %v449 = vld [vmem:[#allocation3 + $0x778] sm:$0xff]
    %v450 = vld [vmem:[#allocation3 + $0x780] sm:$0xff]
    %v451 = vld [vmem:[#allocation3 + $0x788] sm:$0xff]
    %v452 = vld [vmem:[#allocation3 + $0x790] sm:$0xff]
    %v453 = vld [vmem:[#allocation3 + $0x798] sm:$0xff]
    %v454 = vld [vmem:[#allocation3 + $0x7a0] sm:$0xff]
    %v455 = vld [vmem:[#allocation3 + $0x7a8] sm:$0xff]
    %v456 = vld [vmem:[#allocation3 + $0x7b0] sm:$0xff]
    %v457 = vld [vmem:[#allocation3 + $0x7b8] sm:$0xff]
    %v458 = vld [vmem:[#allocation3 + $0x7c0] sm:$0xff]
    %v459 = vld [vmem:[#allocation3 + $0x7c8] sm:$0xff]
    %v460 = vld [vmem:[#allocation3 + $0x7d0] sm:$0xff]
    %v461 = vld [vmem:[#allocation3 + $0x7d8] sm:$0xff]
    %v462 = vld [vmem:[#allocation3 + $0x7e0] sm:$0xff]
    %v463 = vld [vmem:[#allocation3 + $0x7e8] sm:$0xff]
    %v464 = vld [vmem:[#allocation3 + $0x7f0] sm:$0xff]
    %v465 = vld [vmem:[#allocation3 + $0x7f8] sm:$0xff]
    %v466 = vld [vmem:[%s1] sm:$0x3]
    %v467 = vld [vmem:[%s2] sm:$0x3]
    %v469 = vlaneseq
    %v470 = vshrl.u32 %v469, 7
    %v471 = vsub.s32 0, %v470
    %v472 = vrot.slane %v466, %v471
    %v473 = vlaneseq
    %v474 = vshrl.u32 %v473, 7
    %v475 = vsub.s32 1, %v474
    %v476 = vrot.slane %v466, %v475
    %479 = vmatprep.subr.mxu0 %v331
    %480 = vmatpush1.msra.mxu0 %v330
    %481 = vmatprep.subr.mxu0 %v323
    %482 = vmatpush1.msra.mxu0 %v322
    %483 = vmatprep.subr.mxu0 %v315
    %484 = vmatpush1.msra.mxu0 %v314
    %485 = vmatprep.subr.mxu0 %v307
    %486 = vmatpush1.msra.mxu0 %v306
    %487 = vmatprep.subr.mxu0 %v299
    %488 = vmatpush1.msra.mxu0 %v298
    %489 = vmatprep.subr.mxu0 %v291
    %490 = vmatpush1.msra.mxu0 %v290
    %491 = vmatprep.subr.mxu0 %v283
    %492 = vmatpush1.msra.mxu0 %v282
    %493 = vmatprep.subr.mxu0 %v275
    %494 = vmatpush1.msra.mxu0 %v274
    %495 = vmatprep.subr.mxu0 %v267
    %496 = vmatpush1.msra.mxu0 %v266
    %497 = vmatprep.subr.mxu0 %v259
    %498 = vmatpush1.msra.mxu0 %v258
    %499 = vmatprep.subr.mxu0 %v251
    %500 = vmatpush1.msra.mxu0 %v250
    %501 = vmatprep.subr.mxu0 %v243
    %502 = vmatpush1.msra.mxu0 %v242
    %503 = vmatprep.subr.mxu0 %v235
    %504 = vmatpush1.msra.mxu0 %v234
    %505 = vmatprep.subr.mxu0 %v227
    %506 = vmatpush1.msra.mxu0 %v226
    %507 = vmatprep.subr.mxu0 %v219
    %508 = vmatpush1.msra.mxu0 %v218
    %509 = vmatprep.subr.mxu0 %v211
    %510 = vmatpush1.msra.mxu0 %v210
    %511 = vmatprep.subr.mxu0 %v459
    %512 = vmatpush2.msra.mxu0 %v458
    %513 = vmatprep.subr.mxu0 %v451
    %514 = vmatpush2.msra.mxu0 %v450
    %515 = vmatprep.subr.mxu0 %v443
    %516 = vmatpush2.msra.mxu0 %v442
    %517 = vmatprep.subr.mxu0 %v435
    %518 = vmatpush2.msra.mxu0 %v434
    %519 = vmatprep.subr.mxu0 %v427
    %520 = vmatpush2.msra.mxu0 %v426
    %521 = vmatprep.subr.mxu0 %v419
    %522 = vmatpush2.msra.mxu0 %v418
    %523 = vmatprep.subr.mxu0 %v411
    %524 = vmatpush2.msra.mxu0 %v410
    %525 = vmatprep.subr.mxu0 %v403
    %526 = vmatpush2.msra.mxu0 %v402
    %527 = vmatprep.subr.mxu0 %v395
    %528 = vmatpush2.msra.mxu0 %v394
    %529 = vmatprep.subr.mxu0 %v387
    %530 = vmatpush2.msra.mxu0 %v386
    %531 = vmatprep.subr.mxu0 %v379
    %532 = vmatpush2.msra.mxu0 %v378
    %533 = vmatprep.subr.mxu0 %v371
    %534 = vmatpush2.msra.mxu0 %v370
    %535 = vmatprep.subr.mxu0 %v363
    %536 = vmatpush2.msra.mxu0 %v362
    %537 = vmatprep.subr.mxu0 %v355
    %538 = vmatpush2.msra.mxu0 %v354
    %539 = vmatprep.subr.mxu0 %v347
    %540 = vmatpush2.msra.mxu0 %v346
    %541 = vmatprep.subr.mxu0 %v339
    %542 = vmatpush2.msra.mxu0 %v338
    %543 = vmatprep.mubr.f32.mxu0 %v476
    %544 = vmatmul.mubr.f32.gmra.mxu0 %v472
    %v545 = vpop.f32.mrf.mxu0
    %v546 = vadd.f32 0.0, %v545
    %v547 = vpop.f32.mrf.mxu0
    %v548 = vadd.f32 0.0, %v547
    %549 = vdwg.mxu0
    %550 = vmatprep.subr.mxu0 %v333
    %551 = vmatpush1.msra.mxu0 %v332
    %552 = vmatprep.subr.mxu0 %v325
    %553 = vmatpush1.msra.mxu0 %v324
    %554 = vmatprep.subr.mxu0 %v317
    %555 = vmatpush1.msra.mxu0 %v316
    %556 = vmatprep.subr.mxu0 %v309
    %557 = vmatpush1.msra.mxu0 %v308
    %558 = vmatprep.subr.mxu0 %v301
    %559 = vmatpush1.msra.mxu0 %v300
    %560 = vmatprep.subr.mxu0 %v293
    %561 = vmatpush1.msra.mxu0 %v292
    %562 = vmatprep.subr.mxu0 %v285
    %563 = vmatpush1.msra.mxu0 %v284
    %564 = vmatprep.subr.mxu0 %v277
    %565 = vmatpush1.msra.mxu0 %v276
    %566 = vmatprep.subr.mxu0 %v269
    %567 = vmatpush1.msra.mxu0 %v268
    %568 = vmatprep.subr.mxu0 %v261
    %569 = vmatpush1.msra.mxu0 %v260
    %570 = vmatprep.subr.mxu0 %v253
    %571 = vmatpush1.msra.mxu0 %v252
    %572 = vmatprep.subr.mxu0 %v245
    %573 = vmatpush1.msra.mxu0 %v244
    %574 = vmatprep.subr.mxu0 %v237
    %575 = vmatpush1.msra.mxu0 %v236
    %576 = vmatprep.subr.mxu0 %v229
    %577 = vmatpush1.msra.mxu0 %v228
    %578 = vmatprep.subr.mxu0 %v221
    %579 = vmatpush1.msra.mxu0 %v220
    %580 = vmatprep.subr.mxu0 %v213
    %581 = vmatpush1.msra.mxu0 %v212
    %582 = vmatprep.subr.mxu0 %v461
    %583 = vmatpush2.msra.mxu0 %v460
    %584 = vmatprep.subr.mxu0 %v453
    %585 = vmatpush2.msra.mxu0 %v452
    %586 = vmatprep.subr.mxu0 %v445
    %587 = vmatpush2.msra.mxu0 %v444
    %588 = vmatprep.subr.mxu0 %v437
    %589 = vmatpush2.msra.mxu0 %v436
    %590 = vmatprep.subr.mxu0 %v429
    %591 = vmatpush2.msra.mxu0 %v428
    %592 = vmatprep.subr.mxu0 %v421
    %593 = vmatpush2.msra.mxu0 %v420
    %594 = vmatprep.subr.mxu0 %v413
    %595 = vmatpush2.msra.mxu0 %v412
    %596 = vmatprep.subr.mxu0 %v405
    %597 = vmatpush2.msra.mxu0 %v404
    %598 = vmatprep.subr.mxu0 %v397
    %599 = vmatpush2.msra.mxu0 %v396
    %600 = vmatprep.subr.mxu0 %v389
    %601 = vmatpush2.msra.mxu0 %v388
    %602 = vmatprep.subr.mxu0 %v381
    %603 = vmatpush2.msra.mxu0 %v380
    %604 = vmatprep.subr.mxu0 %v373
    %605 = vmatpush2.msra.mxu0 %v372
    %606 = vmatprep.subr.mxu0 %v365
    %607 = vmatpush2.msra.mxu0 %v364
    %608 = vmatprep.subr.mxu0 %v357
    %609 = vmatpush2.msra.mxu0 %v356
    %610 = vmatprep.subr.mxu0 %v349
    %611 = vmatpush2.msra.mxu0 %v348
    %612 = vmatprep.subr.mxu0 %v341
    %613 = vmatpush2.msra.mxu0 %v340
    %614 = vmatprep.mubr.f32.mxu0 %v476
    %615 = vmatmul.mubr.f32.gmra.mxu0 %v472
    %v616 = vpop.f32.mrf.mxu0
    %v617 = vadd.f32 0.0, %v616
    %v618 = vpop.f32.mrf.mxu0
    %v619 = vadd.f32 0.0, %v618
    %620 = vdwg.mxu0
    %621 = vmatprep.subr.mxu0 %v335
    %622 = vmatpush1.msra.mxu0 %v334
    %623 = vmatprep.subr.mxu0 %v327
    %624 = vmatpush1.msra.mxu0 %v326
    %625 = vmatprep.subr.mxu0 %v319
    %626 = vmatpush1.msra.mxu0 %v318
    %627 = vmatprep.subr.mxu0 %v311
    %628 = vmatpush1.msra.mxu0 %v310
    %629 = vmatprep.subr.mxu0 %v303
    %630 = vmatpush1.msra.mxu0 %v302
    %631 = vmatprep.subr.mxu0 %v295
    %632 = vmatpush1.msra.mxu0 %v294
    %633 = vmatprep.subr.mxu0 %v287
    %634 = vmatpush1.msra.mxu0 %v286
    %635 = vmatprep.subr.mxu0 %v279
    %636 = vmatpush1.msra.mxu0 %v278
    %637 = vmatprep.subr.mxu0 %v271
    %638 = vmatpush1.msra.mxu0 %v270
    %639 = vmatprep.subr.mxu0 %v263
    %640 = vmatpush1.msra.mxu0 %v262
    %641 = vmatprep.subr.mxu0 %v255
    %642 = vmatpush1.msra.mxu0 %v254
    %643 = vmatprep.subr.mxu0 %v247
    %644 = vmatpush1.msra.mxu0 %v246
    %645 = vmatprep.subr.mxu0 %v239
    %646 = vmatpush1.msra.mxu0 %v238
    %647 = vmatprep.subr.mxu0 %v231
    %648 = vmatpush1.msra.mxu0 %v230
    %649 = vmatprep.subr.mxu0 %v223
    %650 = vmatpush1.msra.mxu0 %v222
    %651 = vmatprep.subr.mxu0 %v215
    %652 = vmatpush1.msra.mxu0 %v214
    %653 = vmatprep.subr.mxu0 %v463
    %654 = vmatpush2.msra.mxu0 %v462
    %655 = vmatprep.subr.mxu0 %v455
    %656 = vmatpush2.msra.mxu0 %v454
    %657 = vmatprep.subr.mxu0 %v447
    %658 = vmatpush2.msra.mxu0 %v446
    %659 = vmatprep.subr.mxu0 %v439
    %660 = vmatpush2.msra.mxu0 %v438
    %661 = vmatprep.subr.mxu0 %v431
    %662 = vmatpush2.msra.mxu0 %v430
    %663 = vmatprep.subr.mxu0 %v423
    %664 = vmatpush2.msra.mxu0 %v422
    %665 = vmatprep.subr.mxu0 %v415
    %666 = vmatpush2.msra.mxu0 %v414
    %667 = vmatprep.subr.mxu0 %v407
    %668 = vmatpush2.msra.mxu0 %v406
    %669 = vmatprep.subr.mxu0 %v399
    %670 = vmatpush2.msra.mxu0 %v398
    %671 = vmatprep.subr.mxu0 %v391
    %672 = vmatpush2.msra.mxu0 %v390
    %673 = vmatprep.subr.mxu0 %v383
    %674 = vmatpush2.msra.mxu0 %v382
    %675 = vmatprep.subr.mxu0 %v375
    %676 = vmatpush2.msra.mxu0 %v374
    %677 = vmatprep.subr.mxu0 %v367
    %678 = vmatpush2.msra.mxu0 %v366
    %679 = vmatprep.subr.mxu0 %v359
    %680 = vmatpush2.msra.mxu0 %v358
    %681 = vmatprep.subr.mxu0 %v351
    %682 = vmatpush2.msra.mxu0 %v350
    %683 = vmatprep.subr.mxu0 %v343
    %684 = vmatpush2.msra.mxu0 %v342
    %685 = vmatprep.mubr.f32.mxu0 %v476
    %686 = vmatmul.mubr.f32.gmra.mxu0 %v472
    %v687 = vpop.f32.mrf.mxu0
    %v688 = vadd.f32 0.0, %v687
    %v689 = vpop.f32.mrf.mxu0
    %v690 = vadd.f32 0.0, %v689
    %691 = vdwg.mxu0
    %692 = vmatprep.subr.mxu0 %v337
    %693 = vmatpush1.msra.mxu0 %v336
    %694 = vmatprep.subr.mxu0 %v329
    %695 = vmatpush1.msra.mxu0 %v328
    %696 = vmatprep.subr.mxu0 %v321
    %697 = vmatpush1.msra.mxu0 %v320
    %698 = vmatprep.subr.mxu0 %v313
    %699 = vmatpush1.msra.mxu0 %v312
    %700 = vmatprep.subr.mxu0 %v305
    %701 = vmatpush1.msra.mxu0 %v304
    %702 = vmatprep.subr.mxu0 %v297
    %703 = vmatpush1.msra.mxu0 %v296
    %704 = vmatprep.subr.mxu0 %v289
    %705 = vmatpush1.msra.mxu0 %v288
    %706 = vmatprep.subr.mxu0 %v281
    %707 = vmatpush1.msra.mxu0 %v280
    %708 = vmatprep.subr.mxu0 %v273
    %709 = vmatpush1.msra.mxu0 %v272
    %710 = vmatprep.subr.mxu0 %v265
    %711 = vmatpush1.msra.mxu0 %v264
    %712 = vmatprep.subr.mxu0 %v257
    %713 = vmatpush1.msra.mxu0 %v256
    %714 = vmatprep.subr.mxu0 %v249
    %715 = vmatpush1.msra.mxu0 %v248
    %716 = vmatprep.subr.mxu0 %v241
    %717 = vmatpush1.msra.mxu0 %v240
    %718 = vmatprep.subr.mxu0 %v233
    %719 = vmatpush1.msra.mxu0 %v232
    %720 = vmatprep.subr.mxu0 %v225
    %721 = vmatpush1.msra.mxu0 %v224
    %722 = vmatprep.subr.mxu0 %v217
    %723 = vmatpush1.msra.mxu0 %v216
    %724 = vmatprep.subr.mxu0 %v465
    %725 = vmatpush2.msra.mxu0 %v464
    %726 = vmatprep.subr.mxu0 %v457
    %727 = vmatpush2.msra.mxu0 %v456
    %728 = vmatprep.subr.mxu0 %v449
    %729 = vmatpush2.msra.mxu0 %v448
    %730 = vmatprep.subr.mxu0 %v441
    %731 = vmatpush2.msra.mxu0 %v440
    %732 = vmatprep.subr.mxu0 %v433
    %733 = vmatpush2.msra.mxu0 %v432
    %734 = vmatprep.subr.mxu0 %v425
    %735 = vmatpush2.msra.mxu0 %v424
    %736 = vmatprep.subr.mxu0 %v417
    %737 = vmatpush2.msra.mxu0 %v416
    %738 = vmatprep.subr.mxu0 %v409
    %739 = vmatpush2.msra.mxu0 %v408
    %740 = vmatprep.subr.mxu0 %v401
    %741 = vmatpush2.msra.mxu0 %v400
    %742 = vmatprep.subr.mxu0 %v393
    %743 = vmatpush2.msra.mxu0 %v392
    %744 = vmatprep.subr.mxu0 %v385
    %745 = vmatpush2.msra.mxu0 %v384
    %746 = vmatprep.subr.mxu0 %v377
    %747 = vmatpush2.msra.mxu0 %v376
    %748 = vmatprep.subr.mxu0 %v369
    %749 = vmatpush2.msra.mxu0 %v368
    %750 = vmatprep.subr.mxu0 %v361
    %751 = vmatpush2.msra.mxu0 %v360
    %752 = vmatprep.subr.mxu0 %v353
    %753 = vmatpush2.msra.mxu0 %v352
    %754 = vmatprep.subr.mxu0 %v345
    %755 = vmatpush2.msra.mxu0 %v344
    %756 = vmatprep.mubr.f32.mxu0 %v476
    %757 = vmatmul.mubr.f32.gmra.mxu0 %v472
    %v758 = vpop.f32.mrf.mxu0
    %v759 = vadd.f32 0.0, %v758
    %v760 = vpop.f32.mrf.mxu0
    %v761 = vadd.f32 0.0, %v760
    %762 = vdwg.mxu0
    %v763 = vadd.f32 %v202, %v546
    %v764 = vadd.f32 %v203, %v548
    %v765 = vadd.f32 %v204, %v617
    %v766 = vadd.f32 %v205, %v619
    %v767 = vadd.f32 %v206, %v688
    %v768 = vadd.f32 %v207, %v690
    %v769 = vadd.f32 %v208, %v759
    %v770 = vadd.f32 %v209, %v761
    %v771 = vxor.u32 %v763, 2147483648
    %v772 = vxor.u32 %v764, 2147483648
    %v773 = vmul.f32 %v771, 1.442695
    %v774 = vpow.pop %v773
    %v775 = vmul.f32 %v772, 1.442695
    %v776 = vpow.pop %v775
    %v777 = vadd.f32 %v774, 1.0
    %v778 = vadd.f32 %v776, 1.0
    %v779 = vrcp.pop %v777
    %v780 = vmul.f32 1.0, %v779
    %v781 = vrcp.pop %v778
    %v782 = vmul.f32 1.0, %v781
    %v783 = vxor.u32 %v765, 2147483648
    %v784 = vxor.u32 %v766, 2147483648
    %v785 = vmul.f32 %v783, 1.442695
    %v786 = vpow.pop %v785
    %v787 = vmul.f32 %v784, 1.442695
    %v788 = vpow.pop %v787
    %v789 = vadd.f32 %v786, 1.0
    %v790 = vadd.f32 %v788, 1.0
    %v791 = vrcp.pop %v789
    %v792 = vmul.f32 1.0, %v791
    %v793 = vrcp.pop %v790
    %v794 = vmul.f32 1.0, %v793
    %v795 = vtanh.pop %v767
    %v796 = vtanh.pop %v768
    %v797 = vxor.u32 %v769, 2147483648
    %v798 = vxor.u32 %v770, 2147483648
    %v799 = vmul.f32 %v797, 1.442695
    %v800 = vpow.pop %v799
    %v801 = vmul.f32 %v798, 1.442695
    %v802 = vpow.pop %v801
    %v803 = vadd.f32 %v800, 1.0
    %v804 = vadd.f32 %v802, 1.0
    %v805 = vrcp.pop %v803
    %v806 = vmul.f32 1.0, %v805
    %v807 = vrcp.pop %v804
    %v808 = vmul.f32 1.0, %v807
    %v810 = vlaneseq
    %v811 = vshrl.u32 %v810, 7
    %v812 = vsub.s32 0, %v811
    %v813 = vrot.slane %v467, %v812
    %v814 = vlaneseq
    %v815 = vshrl.u32 %v814, 7
    %v816 = vsub.s32 1, %v815
    %v817 = vrot.slane %v467, %v816
    %v820 = vmul.f32 %v792, %v813
    %v821 = vmul.f32 %v794, %v817
    %v822 = vmul.f32 %v780, %v795
    %v823 = vmul.f32 %v782, %v796
    %v824 = vadd.f32 %v820, %v822
    %v825 = vadd.f32 %v821, %v823
    %v826 = vtanh.pop %v824
    %v827 = vtanh.pop %v825
    %v828 = vmul.f32 %v806, %v826
    %v829 = vmul.f32 %v808, %v827
    %v832 = vcombine.low %v828, %v829
    %v834 = vunpack.c.l.s4 1966171168
    %v835 = vunpack.c.0.s8 %v834
    %v836 = vlaneseq
    %v837 = vshrl.u32 %v836, 7
    %v838 = vsub.s32 %v835, %v837
    %v839 = vrot.slane %v832, %v838
    %v841 = vunpack.c.l.s4 1966171168
    %v842 = vunpack.c.0.s8 %v841
    %v843 = vlaneseq
    %v844 = vshrl.u32 %v843, 7
    %v845 = vsub.s32 %v842, %v844
    %v846 = vrot.slane %v839, %v845
    %v848 = vlaneseq
    %vm849 = vcmp.ge.s32.totalorder %v848, 0
    %vm850 = vcmp.lt.s32.totalorder %v848, 256
    %vm851 = vmand %vm849, %vm850
    %852 = vst.msk [vmem:[#allocation2] ss:$8 sm:$0x3] %vm851, %v846
    %853 = vst.msk [vmem:[#allocation2] ss:$8 sm:$0x0] %vm851, %v846
    %854 = vmatprep.subr.mxu0 %v331
    %855 = vmatpush1.msra.mxu0 %v330
    %856 = vmatprep.subr.mxu0 %v323
    %857 = vmatpush1.msra.mxu0 %v322
    %858 = vmatprep.subr.mxu0 %v315
    %859 = vmatpush1.msra.mxu0 %v314
    %860 = vmatprep.subr.mxu0 %v307
    %861 = vmatpush1.msra.mxu0 %v306
    %862 = vmatprep.subr.mxu0 %v299
    %863 = vmatpush1.msra.mxu0 %v298
    %864 = vmatprep.subr.mxu0 %v291
    %865 = vmatpush1.msra.mxu0 %v290
    %866 = vmatprep.subr.mxu0 %v283
    %867 = vmatpush1.msra.mxu0 %v282
    %868 = vmatprep.subr.mxu0 %v275
    %869 = vmatpush1.msra.mxu0 %v274
    %870 = vmatprep.subr.mxu0 %v267
    %871 = vmatpush1.msra.mxu0 %v266
    %872 = vmatprep.subr.mxu0 %v259
    %873 = vmatpush1.msra.mxu0 %v258
    %874 = vmatprep.subr.mxu0 %v251
    %875 = vmatpush1.msra.mxu0 %v250
    %876 = vmatprep.subr.mxu0 %v243
    %877 = vmatpush1.msra.mxu0 %v242
    %878 = vmatprep.subr.mxu0 %v235
    %879 = vmatpush1.msra.mxu0 %v234
    %880 = vmatprep.subr.mxu0 %v227
    %881 = vmatpush1.msra.mxu0 %v226
    %882 = vmatprep.subr.mxu0 %v219
    %883 = vmatpush1.msra.mxu0 %v218
    %884 = vmatprep.subr.mxu0 %v211
    %885 = vmatpush1.msra.mxu0 %v210
    %886 = vmatprep.subr.mxu0 %v459
    %887 = vmatpush2.msra.mxu0 %v458
    %888 = vmatprep.subr.mxu0 %v451
    %889 = vmatpush2.msra.mxu0 %v450
    %890 = vmatprep.subr.mxu0 %v443
    %891 = vmatpush2.msra.mxu0 %v442
    %892 = vmatprep.subr.mxu0 %v435
    %893 = vmatpush2.msra.mxu0 %v434
    %894 = vmatprep.subr.mxu0 %v427
    %895 = vmatpush2.msra.mxu0 %v426
    %896 = vmatprep.subr.mxu0 %v419
    %897 = vmatpush2.msra.mxu0 %v418
    %898 = vmatprep.subr.mxu0 %v411
    %899 = vmatpush2.msra.mxu0 %v410
    %900 = vmatprep.subr.mxu0 %v403
    %901 = vmatpush2.msra.mxu0 %v402
    %902 = vmatprep.subr.mxu0 %v395
    %903 = vmatpush2.msra.mxu0 %v394
    %904 = vmatprep.subr.mxu0 %v387
    %905 = vmatpush2.msra.mxu0 %v386
    %906 = vmatprep.subr.mxu0 %v379
    %907 = vmatpush2.msra.mxu0 %v378
    %908 = vmatprep.subr.mxu0 %v371
    %909 = vmatpush2.msra.mxu0 %v370
    %910 = vmatprep.subr.mxu0 %v363
    %911 = vmatpush2.msra.mxu0 %v362
    %912 = vmatprep.subr.mxu0 %v355
    %913 = vmatpush2.msra.mxu0 %v354
    %914 = vmatprep.subr.mxu0 %v347
    %915 = vmatpush2.msra.mxu0 %v346
    %916 = vmatprep.subr.mxu0 %v339
    %917 = vmatpush2.msra.mxu0 %v338
    %918 = vmatprep.mubr.f32.mxu0 %v829
    %919 = vmatmul.mubr.f32.gmra.mxu0 %v828
    %v920 = vpop.f32.mrf.mxu0
    %v921 = vadd.f32 0.0, %v920
    %v922 = vpop.f32.mrf.mxu0
    %v923 = vadd.f32 0.0, %v922
    %924 = vdwg.mxu0
    %925 = vmatprep.subr.mxu0 %v333
    %926 = vmatpush1.msra.mxu0 %v332
    %927 = vmatprep.subr.mxu0 %v325
    %928 = vmatpush1.msra.mxu0 %v324
    %929 = vmatprep.subr.mxu0 %v317
    %930 = vmatpush1.msra.mxu0 %v316
    %931 = vmatprep.subr.mxu0 %v309
    %932 = vmatpush1.msra.mxu0 %v308
    %933 = vmatprep.subr.mxu0 %v301
    %934 = vmatpush1.msra.mxu0 %v300
    %935 = vmatprep.subr.mxu0 %v293
    %936 = vmatpush1.msra.mxu0 %v292
    %937 = vmatprep.subr.mxu0 %v285
    %938 = vmatpush1.msra.mxu0 %v284
    %939 = vmatprep.subr.mxu0 %v277
    %940 = vmatpush1.msra.mxu0 %v276
    %941 = vmatprep.subr.mxu0 %v269
    %942 = vmatpush1.msra.mxu0 %v268
    %943 = vmatprep.subr.mxu0 %v261
    %944 = vmatpush1.msra.mxu0 %v260
    %945 = vmatprep.subr.mxu0 %v253
    %946 = vmatpush1.msra.mxu0 %v252
    %947 = vmatprep.subr.mxu0 %v245
    %948 = vmatpush1.msra.mxu0 %v244
    %949 = vmatprep.subr.mxu0 %v237
    %950 = vmatpush1.msra.mxu0 %v236
    %951 = vmatprep.subr.mxu0 %v229
    %952 = vmatpush1.msra.mxu0 %v228
    %953 = vmatprep.subr.mxu0 %v221
    %954 = vmatpush1.msra.mxu0 %v220
    %955 = vmatprep.subr.mxu0 %v213
    %956 = vmatpush1.msra.mxu0 %v212
    %957 = vmatprep.subr.mxu0 %v461
    %958 = vmatpush2.msra.mxu0 %v460
    %959 = vmatprep.subr.mxu0 %v453
    %960 = vmatpush2.msra.mxu0 %v452
    %961 = vmatprep.subr.mxu0 %v445
    %962 = vmatpush2.msra.mxu0 %v444
    %963 = vmatprep.subr.mxu0 %v437
    %964 = vmatpush2.msra.mxu0 %v436
    %965 = vmatprep.subr.mxu0 %v429
    %966 = vmatpush2.msra.mxu0 %v428
    %967 = vmatprep.subr.mxu0 %v421
    %968 = vmatpush2.msra.mxu0 %v420
    %969 = vmatprep.subr.mxu0 %v413
    %970 = vmatpush2.msra.mxu0 %v412
    %971 = vmatprep.subr.mxu0 %v405
    %972 = vmatpush2.msra.mxu0 %v404
    %973 = vmatprep.subr.mxu0 %v397
    %974 = vmatpush2.msra.mxu0 %v396
    %975 = vmatprep.subr.mxu0 %v389
    %976 = vmatpush2.msra.mxu0 %v388
    %977 = vmatprep.subr.mxu0 %v381
    %978 = vmatpush2.msra.mxu0 %v380
    %979 = vmatprep.subr.mxu0 %v373
    %980 = vmatpush2.msra.mxu0 %v372
    %981 = vmatprep.subr.mxu0 %v365
    %982 = vmatpush2.msra.mxu0 %v364
    %983 = vmatprep.subr.mxu0 %v357
    %984 = vmatpush2.msra.mxu0 %v356
    %985 = vmatprep.subr.mxu0 %v349
    %986 = vmatpush2.msra.mxu0 %v348
    %987 = vmatprep.subr.mxu0 %v341
    %988 = vmatpush2.msra.mxu0 %v340
    %989 = vmatprep.mubr.f32.mxu0 %v829
    %990 = vmatmul.mubr.f32.gmra.mxu0 %v828
    %v991 = vpop.f32.mrf.mxu0
    %v992 = vadd.f32 0.0, %v991
    %v993 = vpop.f32.mrf.mxu0
    %v994 = vadd.f32 0.0, %v993
    %995 = vdwg.mxu0
    %996 = vmatprep.subr.mxu0 %v335
    %997 = vmatpush1.msra.mxu0 %v334
    %998 = vmatprep.subr.mxu0 %v327
    %999 = vmatpush1.msra.mxu0 %v326
    %1000 = vmatprep.subr.mxu0 %v319
    %1001 = vmatpush1.msra.mxu0 %v318
    %1002 = vmatprep.subr.mxu0 %v311
    %1003 = vmatpush1.msra.mxu0 %v310
    %1004 = vmatprep.subr.mxu0 %v303
    %1005 = vmatpush1.msra.mxu0 %v302
    %1006 = vmatprep.subr.mxu0 %v295
    %1007 = vmatpush1.msra.mxu0 %v294
    %1008 = vmatprep.subr.mxu0 %v287
    %1009 = vmatpush1.msra.mxu0 %v286
    %1010 = vmatprep.subr.mxu0 %v279
    %1011 = vmatpush1.msra.mxu0 %v278
    %1012 = vmatprep.subr.mxu0 %v271
    %1013 = vmatpush1.msra.mxu0 %v270
    %1014 = vmatprep.subr.mxu0 %v263
    %1015 = vmatpush1.msra.mxu0 %v262
    %1016 = vmatprep.subr.mxu0 %v255
    %1017 = vmatpush1.msra.mxu0 %v254
    %1018 = vmatprep.subr.mxu0 %v247
    %1019 = vmatpush1.msra.mxu0 %v246
    %1020 = vmatprep.subr.mxu0 %v239
    %1021 = vmatpush1.msra.mxu0 %v238
    %1022 = vmatprep.subr.mxu0 %v231
    %1023 = vmatpush1.msra.mxu0 %v230
    %1024 = vmatprep.subr.mxu0 %v223
    %1025 = vmatpush1.msra.mxu0 %v222
    %1026 = vmatprep.subr.mxu0 %v215
    %1027 = vmatpush1.msra.mxu0 %v214
    %1028 = vmatprep.subr.mxu0 %v463
    %1029 = vmatpush2.msra.mxu0 %v462
    %1030 = vmatprep.subr.mxu0 %v455
    %1031 = vmatpush2.msra.mxu0 %v454
    %1032 = vmatprep.subr.mxu0 %v447
    %1033 = vmatpush2.msra.mxu0 %v446
    %1034 = vmatprep.subr.mxu0 %v439
    %1035 = vmatpush2.msra.mxu0 %v438
    %1036 = vmatprep.subr.mxu0 %v431
    %1037 = vmatpush2.msra.mxu0 %v430
    %1038 = vmatprep.subr.mxu0 %v423
    %1039 = vmatpush2.msra.mxu0 %v422
    %1040 = vmatprep.subr.mxu0 %v415
    %1041 = vmatpush2.msra.mxu0 %v414
    %1042 = vmatprep.subr.mxu0 %v407
    %1043 = vmatpush2.msra.mxu0 %v406
    %1044 = vmatprep.subr.mxu0 %v399
    %1045 = vmatpush2.msra.mxu0 %v398
    %1046 = vmatprep.subr.mxu0 %v391
    %1047 = vmatpush2.msra.mxu0 %v390
    %1048 = vmatprep.subr.mxu0 %v383
    %1049 = vmatpush2.msra.mxu0 %v382
    %1050 = vmatprep.subr.mxu0 %v375
    %1051 = vmatpush2.msra.mxu0 %v374
    %1052 = vmatprep.subr.mxu0 %v367
    %1053 = vmatpush2.msra.mxu0 %v366
    %1054 = vmatprep.subr.mxu0 %v359
    %1055 = vmatpush2.msra.mxu0 %v358
    %1056 = vmatprep.subr.mxu0 %v351
    %1057 = vmatpush2.msra.mxu0 %v350
    %1058 = vmatprep.subr.mxu0 %v343
    %1059 = vmatpush2.msra.mxu0 %v342
    %1060 = vmatprep.mubr.f32.mxu0 %v829
    %1061 = vmatmul.mubr.f32.gmra.mxu0 %v828
    %v1062 = vpop.f32.mrf.mxu0
    %v1063 = vadd.f32 0.0, %v1062
    %v1064 = vpop.f32.mrf.mxu0
    %v1065 = vadd.f32 0.0, %v1064
    %1066 = vdwg.mxu0
    %1067 = vmatprep.subr.mxu0 %v337
    %1068 = vmatpush1.msra.mxu0 %v336
    %1069 = vmatprep.subr.mxu0 %v329
    %1070 = vmatpush1.msra.mxu0 %v328
    %1071 = vmatprep.subr.mxu0 %v321
    %1072 = vmatpush1.msra.mxu0 %v320
    %1073 = vmatprep.subr.mxu0 %v313
    %1074 = vmatpush1.msra.mxu0 %v312
    %1075 = vmatprep.subr.mxu0 %v305
    %1076 = vmatpush1.msra.mxu0 %v304
    %1077 = vmatprep.subr.mxu0 %v297
    %1078 = vmatpush1.msra.mxu0 %v296
    %1079 = vmatprep.subr.mxu0 %v289
    %1080 = vmatpush1.msra.mxu0 %v288
    %1081 = vmatprep.subr.mxu0 %v281
    %1082 = vmatpush1.msra.mxu0 %v280
    %1083 = vmatprep.subr.mxu0 %v273
    %1084 = vmatpush1.msra.mxu0 %v272
    %1085 = vmatprep.subr.mxu0 %v265
    %1086 = vmatpush1.msra.mxu0 %v264
    %1087 = vmatprep.subr.mxu0 %v257
    %1088 = vmatpush1.msra.mxu0 %v256
    %1089 = vmatprep.subr.mxu0 %v249
    %1090 = vmatpush1.msra.mxu0 %v248
    %1091 = vmatprep.subr.mxu0 %v241
    %1092 = vmatpush1.msra.mxu0 %v240
    %1093 = vmatprep.subr.mxu0 %v233
    %1094 = vmatpush1.msra.mxu0 %v232
    %1095 = vmatprep.subr.mxu0 %v225
    %1096 = vmatpush1.msra.mxu0 %v224
    %1097 = vmatprep.subr.mxu0 %v217
    %1098 = vmatpush1.msra.mxu0 %v216
    %1099 = vmatprep.subr.mxu0 %v465
    %1100 = vmatpush2.msra.mxu0 %v464
    %1101 = vmatprep.subr.mxu0 %v457
    %1102 = vmatpush2.msra.mxu0 %v456
    %1103 = vmatprep.subr.mxu0 %v449
    %1104 = vmatpush2.msra.mxu0 %v448
    %1105 = vmatprep.subr.mxu0 %v441
    %1106 = vmatpush2.msra.mxu0 %v440
    %1107 = vmatprep.subr.mxu0 %v433
    %1108 = vmatpush2.msra.mxu0 %v432
    %1109 = vmatprep.subr.mxu0 %v425
    %1110 = vmatpush2.msra.mxu0 %v424
    %1111 = vmatprep.subr.mxu0 %v417
    %1112 = vmatpush2.msra.mxu0 %v416
    %1113 = vmatprep.subr.mxu0 %v409
    %1114 = vmatpush2.msra.mxu0 %v408
    %1115 = vmatprep.subr.mxu0 %v401
    %1116 = vmatpush2.msra.mxu0 %v400
    %1117 = vmatprep.subr.mxu0 %v393
    %1118 = vmatpush2.msra.mxu0 %v392
    %1119 = vmatprep.subr.mxu0 %v385
    %1120 = vmatpush2.msra.mxu0 %v384
    %1121 = vmatprep.subr.mxu0 %v377
    %1122 = vmatpush2.msra.mxu0 %v376
    %1123 = vmatprep.subr.mxu0 %v369
    %1124 = vmatpush2.msra.mxu0 %v368
    %1125 = vmatprep.subr.mxu0 %v361
    %1126 = vmatpush2.msra.mxu0 %v360
    %1127 = vmatprep.subr.mxu0 %v353
    %1128 = vmatpush2.msra.mxu0 %v352
    %1129 = vmatprep.subr.mxu0 %v345
    %1130 = vmatpush2.msra.mxu0 %v344
    %1131 = vmatprep.mubr.f32.mxu0 %v829
    %1132 = vmatmul.mubr.f32.gmra.mxu0 %v828
    %v1133 = vpop.f32.mrf.mxu0
    %v1134 = vadd.f32 0.0, %v1133
    %v1135 = vpop.f32.mrf.mxu0
    %v1136 = vadd.f32 0.0, %v1135
    %1137 = vdwg.mxu0
    %v1146 = vrot.slane %v921, 7
    %v1147 = vrot.slane %v923, 7
    %v1148 = vrot.slane %v992, 7
    %v1149 = vrot.slane %v994, 7
    %v1150 = vrot.slane %v1063, 7
    %v1151 = vrot.slane %v1065, 7
    %v1152 = vrot.slane %v1134, 7
    %v1153 = vrot.slane %v1136, 7
    %v1162 = vadd.f32 %v202, %v1146
    %v1163 = vadd.f32 %v203, %v1147
    %v1164 = vadd.f32 %v204, %v1148
    %v1165 = vadd.f32 %v205, %v1149
    %v1166 = vadd.f32 %v206, %v1150
    %v1167 = vadd.f32 %v207, %v1151
    %v1168 = vadd.f32 %v208, %v1152
    %v1169 = vadd.f32 %v209, %v1153
    %v1170 = vxor.u32 %v1162, 2147483648
    %v1171 = vxor.u32 %v1163, 2147483648
    %v1172 = vmul.f32 %v1170, 1.442695
    %v1173 = vpow.pop %v1172
    %v1174 = vmul.f32 %v1171, 1.442695
    %v1175 = vpow.pop %v1174
    %v1176 = vadd.f32 %v1173, 1.0
    %v1177 = vadd.f32 %v1175, 1.0
    %v1178 = vrcp.pop %v1176
    %v1179 = vmul.f32 1.0, %v1178
    %v1180 = vrcp.pop %v1177
    %v1181 = vmul.f32 1.0, %v1180
    %v1182 = vxor.u32 %v1164, 2147483648
    %v1183 = vxor.u32 %v1165, 2147483648
    %v1184 = vmul.f32 %v1182, 1.442695
    %v1185 = vpow.pop %v1184
    %v1186 = vmul.f32 %v1183, 1.442695
    %v1187 = vpow.pop %v1186
    %v1188 = vadd.f32 %v1185, 1.0
    %v1189 = vadd.f32 %v1187, 1.0
    %v1190 = vrcp.pop %v1188
    %v1191 = vmul.f32 1.0, %v1190
    %v1192 = vrcp.pop %v1189
    %v1193 = vmul.f32 1.0, %v1192
    %v1194 = vtanh.pop %v1166
    %v1195 = vtanh.pop %v1167
    %v1196 = vxor.u32 %v1168, 2147483648
    %v1197 = vxor.u32 %v1169, 2147483648
    %v1198 = vmul.f32 %v1196, 1.442695
    %v1199 = vpow.pop %v1198
    %v1200 = vmul.f32 %v1197, 1.442695
    %v1201 = vpow.pop %v1200
    %v1202 = vadd.f32 %v1199, 1.0
    %v1203 = vadd.f32 %v1201, 1.0
    %v1204 = vrcp.pop %v1202
    %v1205 = vmul.f32 1.0, %v1204
    %v1206 = vrcp.pop %v1203
    %v1207 = vmul.f32 1.0, %v1206
    %v1210 = vrot.slane %v824, 7
    %v1211 = vrot.slane %v825, 7
    %v1214 = vmul.f32 %v1191, %v1210
    %v1215 = vmul.f32 %v1193, %v1211
    %v1216 = vmul.f32 %v1179, %v1194
    %v1217 = vmul.f32 %v1181, %v1195
    %v1218 = vadd.f32 %v1214, %v1216
    %v1219 = vadd.f32 %v1215, %v1217
    %v1220 = vtanh.pop %v1218
    %v1221 = vtanh.pop %v1219
    %v1222 = vmul.f32 %v1205, %v1220
    %v1223 = vmul.f32 %v1207, %v1221
    %v1226 = vcombine.low %v1222, %v1223
    %v1228 = vunpack.c.l.s4 1966171168
    %v1229 = vunpack.c.0.s8 %v1228
    %v1230 = vlaneseq
    %v1231 = vshrl.u32 %v1230, 7
    %v1232 = vsub.s32 %v1229, %v1231
    %v1233 = vrot.slane %v1226, %v1232
    %v1234 = vcombine.high %v1233, %v1233
    %v1236 = vunpack.c.l.s4 1966171168
    %v1237 = vunpack.c.0.s8 %v1236
    %v1238 = vlaneseq
    %v1239 = vshrl.u32 %v1238, 7
    %v1240 = vsub.s32 %v1237, %v1239
    %v1241 = vrot.slane %v1234, %v1240
    %s1243 = scalar_lea.vmem [#allocation2], 1
    %1244 = vst.msk [vmem:[%s1243] ss:$8 sm:$0x3] %vm851, %v1241
    %1245 = vst.msk [vmem:[%s1243] ss:$8 sm:$0x0] %vm851, %v1241
    %v1246 = vrot.slane %v1222, 1
    %v1247 = vrot.slane %v1223, 1
    %1250 = vmatprep.subr.mxu0 %v331
    %1251 = vmatpush1.msra.mxu0 %v330
    %1252 = vmatprep.subr.mxu0 %v323
    %1253 = vmatpush1.msra.mxu0 %v322
    %1254 = vmatprep.subr.mxu0 %v315
    %1255 = vmatpush1.msra.mxu0 %v314
    %1256 = vmatprep.subr.mxu0 %v307
    %1257 = vmatpush1.msra.mxu0 %v306
    %1258 = vmatprep.subr.mxu0 %v299
    %1259 = vmatpush1.msra.mxu0 %v298
    %1260 = vmatprep.subr.mxu0 %v291
    %1261 = vmatpush1.msra.mxu0 %v290
    %1262 = vmatprep.subr.mxu0 %v283
    %1263 = vmatpush1.msra.mxu0 %v282
    %1264 = vmatprep.subr.mxu0 %v275
    %1265 = vmatpush1.msra.mxu0 %v274
    %1266 = vmatprep.subr.mxu0 %v267
    %1267 = vmatpush1.msra.mxu0 %v266
    %1268 = vmatprep.subr.mxu0 %v259
    %1269 = vmatpush1.msra.mxu0 %v258
    %1270 = vmatprep.subr.mxu0 %v251
    %1271 = vmatpush1.msra.mxu0 %v250
    %1272 = vmatprep.subr.mxu0 %v243
    %1273 = vmatpush1.msra.mxu0 %v242
    %1274 = vmatprep.subr.mxu0 %v235
    %1275 = vmatpush1.msra.mxu0 %v234
    %1276 = vmatprep.subr.mxu0 %v227
    %1277 = vmatpush1.msra.mxu0 %v226
    %1278 = vmatprep.subr.mxu0 %v219
    %1279 = vmatpush1.msra.mxu0 %v218
    %1280 = vmatprep.subr.mxu0 %v211
    %1281 = vmatpush1.msra.mxu0 %v210
    %1282 = vmatprep.subr.mxu0 %v459
    %1283 = vmatpush2.msra.mxu0 %v458
    %1284 = vmatprep.subr.mxu0 %v451
    %1285 = vmatpush2.msra.mxu0 %v450
    %1286 = vmatprep.subr.mxu0 %v443
    %1287 = vmatpush2.msra.mxu0 %v442
    %1288 = vmatprep.subr.mxu0 %v435
    %1289 = vmatpush2.msra.mxu0 %v434
    %1290 = vmatprep.subr.mxu0 %v427
    %1291 = vmatpush2.msra.mxu0 %v426
    %1292 = vmatprep.subr.mxu0 %v419
    %1293 = vmatpush2.msra.mxu0 %v418
    %1294 = vmatprep.subr.mxu0 %v411
    %1295 = vmatpush2.msra.mxu0 %v410
    %1296 = vmatprep.subr.mxu0 %v403
    %1297 = vmatpush2.msra.mxu0 %v402
    %1298 = vmatprep.subr.mxu0 %v395
    %1299 = vmatpush2.msra.mxu0 %v394
    %1300 = vmatprep.subr.mxu0 %v387
    %1301 = vmatpush2.msra.mxu0 %v386
    %1302 = vmatprep.subr.mxu0 %v379
    %1303 = vmatpush2.msra.mxu0 %v378
    %1304 = vmatprep.subr.mxu0 %v371
    %1305 = vmatpush2.msra.mxu0 %v370
    %1306 = vmatprep.subr.mxu0 %v363
    %1307 = vmatpush2.msra.mxu0 %v362
    %1308 = vmatprep.subr.mxu0 %v355
    %1309 = vmatpush2.msra.mxu0 %v354
    %1310 = vmatprep.subr.mxu0 %v347
    %1311 = vmatpush2.msra.mxu0 %v346
    %1312 = vmatprep.subr.mxu0 %v339
    %1313 = vmatpush2.msra.mxu0 %v338
    %1314 = vmatprep.mubr.f32.mxu0 %v1247
    %1315 = vmatmul.mubr.f32.gmra.mxu0 %v1246
    %v1316 = vpop.f32.mrf.mxu0
    %v1317 = vadd.f32 0.0, %v1316
    %v1318 = vpop.f32.mrf.mxu0
    %v1319 = vadd.f32 0.0, %v1318
    %1320 = vdwg.mxu0
    %1321 = vmatprep.subr.mxu0 %v333
    %1322 = vmatpush1.msra.mxu0 %v332
    %1323 = vmatprep.subr.mxu0 %v325
    %1324 = vmatpush1.msra.mxu0 %v324
    %1325 = vmatprep.subr.mxu0 %v317
    %1326 = vmatpush1.msra.mxu0 %v316
    %1327 = vmatprep.subr.mxu0 %v309
    %1328 = vmatpush1.msra.mxu0 %v308
    %1329 = vmatprep.subr.mxu0 %v301
    %1330 = vmatpush1.msra.mxu0 %v300
    %1331 = vmatprep.subr.mxu0 %v293
    %1332 = vmatpush1.msra.mxu0 %v292
    %1333 = vmatprep.subr.mxu0 %v285
    %1334 = vmatpush1.msra.mxu0 %v284
    %1335 = vmatprep.subr.mxu0 %v277
    %1336 = vmatpush1.msra.mxu0 %v276
    %1337 = vmatprep.subr.mxu0 %v269
    %1338 = vmatpush1.msra.mxu0 %v268
    %1339 = vmatprep.subr.mxu0 %v261
    %1340 = vmatpush1.msra.mxu0 %v260
    %1341 = vmatprep.subr.mxu0 %v253
    %1342 = vmatpush1.msra.mxu0 %v252
    %1343 = vmatprep.subr.mxu0 %v245
    %1344 = vmatpush1.msra.mxu0 %v244
    %1345 = vmatprep.subr.mxu0 %v237
    %1346 = vmatpush1.msra.mxu0 %v236
    %1347 = vmatprep.subr.mxu0 %v229
    %1348 = vmatpush1.msra.mxu0 %v228
    %1349 = vmatprep.subr.mxu0 %v221
    %1350 = vmatpush1.msra.mxu0 %v220
    %1351 = vmatprep.subr.mxu0 %v213
    %1352 = vmatpush1.msra.mxu0 %v212
    %1353 = vmatprep.subr.mxu0 %v461
    %1354 = vmatpush2.msra.mxu0 %v460
    %1355 = vmatprep.subr.mxu0 %v453
    %1356 = vmatpush2.msra.mxu0 %v452
    %1357 = vmatprep.subr.mxu0 %v445
    %1358 = vmatpush2.msra.mxu0 %v444
    %1359 = vmatprep.subr.mxu0 %v437
    %1360 = vmatpush2.msra.mxu0 %v436
    %1361 = vmatprep.subr.mxu0 %v429
    %1362 = vmatpush2.msra.mxu0 %v428
    %1363 = vmatprep.subr.mxu0 %v421
    %1364 = vmatpush2.msra.mxu0 %v420
    %1365 = vmatprep.subr.mxu0 %v413
    %1366 = vmatpush2.msra.mxu0 %v412
    %1367 = vmatprep.subr.mxu0 %v405
    %1368 = vmatpush2.msra.mxu0 %v404
    %1369 = vmatprep.subr.mxu0 %v397
    %1370 = vmatpush2.msra.mxu0 %v396
    %1371 = vmatprep.subr.mxu0 %v389
    %1372 = vmatpush2.msra.mxu0 %v388
    %1373 = vmatprep.subr.mxu0 %v381
    %1374 = vmatpush2.msra.mxu0 %v380
    %1375 = vmatprep.subr.mxu0 %v373
    %1376 = vmatpush2.msra.mxu0 %v372
    %1377 = vmatprep.subr.mxu0 %v365
    %1378 = vmatpush2.msra.mxu0 %v364
    %1379 = vmatprep.subr.mxu0 %v357
    %1380 = vmatpush2.msra.mxu0 %v356
    %1381 = vmatprep.subr.mxu0 %v349
    %1382 = vmatpush2.msra.mxu0 %v348
    %1383 = vmatprep.subr.mxu0 %v341
    %1384 = vmatpush2.msra.mxu0 %v340
    %1385 = vmatprep.mubr.f32.mxu0 %v1247
    %1386 = vmatmul.mubr.f32.gmra.mxu0 %v1246
    %v1387 = vpop.f32.mrf.mxu0
    %v1388 = vadd.f32 0.0, %v1387
    %v1389 = vpop.f32.mrf.mxu0
    %v1390 = vadd.f32 0.0, %v1389
    %1391 = vdwg.mxu0
    %1392 = vmatprep.subr.mxu0 %v335
    %1393 = vmatpush1.msra.mxu0 %v334
    %1394 = vmatprep.subr.mxu0 %v327
    %1395 = vmatpush1.msra.mxu0 %v326
    %1396 = vmatprep.subr.mxu0 %v319
    %1397 = vmatpush1.msra.mxu0 %v318
    %1398 = vmatprep.subr.mxu0 %v311
    %1399 = vmatpush1.msra.mxu0 %v310
    %1400 = vmatprep.subr.mxu0 %v303
    %1401 = vmatpush1.msra.mxu0 %v302
    %1402 = vmatprep.subr.mxu0 %v295
    %1403 = vmatpush1.msra.mxu0 %v294
    %1404 = vmatprep.subr.mxu0 %v287
    %1405 = vmatpush1.msra.mxu0 %v286
    %1406 = vmatprep.subr.mxu0 %v279
    %1407 = vmatpush1.msra.mxu0 %v278
    %1408 = vmatprep.subr.mxu0 %v271
    %1409 = vmatpush1.msra.mxu0 %v270
    %1410 = vmatprep.subr.mxu0 %v263
    %1411 = vmatpush1.msra.mxu0 %v262
    %1412 = vmatprep.subr.mxu0 %v255
    %1413 = vmatpush1.msra.mxu0 %v254
    %1414 = vmatprep.subr.mxu0 %v247
    %1415 = vmatpush1.msra.mxu0 %v246
    %1416 = vmatprep.subr.mxu0 %v239
    %1417 = vmatpush1.msra.mxu0 %v238
    %1418 = vmatprep.subr.mxu0 %v231
    %1419 = vmatpush1.msra.mxu0 %v230
    %1420 = vmatprep.subr.mxu0 %v223
    %1421 = vmatpush1.msra.mxu0 %v222
    %1422 = vmatprep.subr.mxu0 %v215
    %1423 = vmatpush1.msra.mxu0 %v214
    %1424 = vmatprep.subr.mxu0 %v463
    %1425 = vmatpush2.msra.mxu0 %v462
    %1426 = vmatprep.subr.mxu0 %v455
    %1427 = vmatpush2.msra.mxu0 %v454
    %1428 = vmatprep.subr.mxu0 %v447
    %1429 = vmatpush2.msra.mxu0 %v446
    %1430 = vmatprep.subr.mxu0 %v439
    %1431 = vmatpush2.msra.mxu0 %v438
    %1432 = vmatprep.subr.mxu0 %v431
    %1433 = vmatpush2.msra.mxu0 %v430
    %1434 = vmatprep.subr.mxu0 %v423
    %1435 = vmatpush2.msra.mxu0 %v422
    %1436 = vmatprep.subr.mxu0 %v415
    %1437 = vmatpush2.msra.mxu0 %v414
    %1438 = vmatprep.subr.mxu0 %v407
    %1439 = vmatpush2.msra.mxu0 %v406
    %1440 = vmatprep.subr.mxu0 %v399
    %1441 = vmatpush2.msra.mxu0 %v398
    %1442 = vmatprep.subr.mxu0 %v391
    %1443 = vmatpush2.msra.mxu0 %v390
    %1444 = vmatprep.subr.mxu0 %v383
    %1445 = vmatpush2.msra.mxu0 %v382
    %1446 = vmatprep.subr.mxu0 %v375
    %1447 = vmatpush2.msra.mxu0 %v374
    %1448 = vmatprep.subr.mxu0 %v367
    %1449 = vmatpush2.msra.mxu0 %v366
    %1450 = vmatprep.subr.mxu0 %v359
    %1451 = vmatpush2.msra.mxu0 %v358
    %1452 = vmatprep.subr.mxu0 %v351
    %1453 = vmatpush2.msra.mxu0 %v350
    %1454 = vmatprep.subr.mxu0 %v343
    %1455 = vmatpush2.msra.mxu0 %v342
    %1456 = vmatprep.mubr.f32.mxu0 %v1247
    %1457 = vmatmul.mubr.f32.gmra.mxu0 %v1246
    %v1458 = vpop.f32.mrf.mxu0
    %v1459 = vadd.f32 0.0, %v1458
    %v1460 = vpop.f32.mrf.mxu0
    %v1461 = vadd.f32 0.0, %v1460
    %1462 = vdwg.mxu0
    %1463 = vmatprep.subr.mxu0 %v337
    %1464 = vmatpush1.msra.mxu0 %v336
    %1465 = vmatprep.subr.mxu0 %v329
    %1466 = vmatpush1.msra.mxu0 %v328
    %1467 = vmatprep.subr.mxu0 %v321
    %1468 = vmatpush1.msra.mxu0 %v320
    %1469 = vmatprep.subr.mxu0 %v313
    %1470 = vmatpush1.msra.mxu0 %v312
    %1471 = vmatprep.subr.mxu0 %v305
    %1472 = vmatpush1.msra.mxu0 %v304
    %1473 = vmatprep.subr.mxu0 %v297
    %1474 = vmatpush1.msra.mxu0 %v296
    %1475 = vmatprep.subr.mxu0 %v289
    %1476 = vmatpush1.msra.mxu0 %v288
    %1477 = vmatprep.subr.mxu0 %v281
    %1478 = vmatpush1.msra.mxu0 %v280
    %1479 = vmatprep.subr.mxu0 %v273
    %1480 = vmatpush1.msra.mxu0 %v272
    %1481 = vmatprep.subr.mxu0 %v265
    %1482 = vmatpush1.msra.mxu0 %v264
    %1483 = vmatprep.subr.mxu0 %v257
    %1484 = vmatpush1.msra.mxu0 %v256
    %1485 = vmatprep.subr.mxu0 %v249
    %1486 = vmatpush1.msra.mxu0 %v248
    %1487 = vmatprep.subr.mxu0 %v241
    %1488 = vmatpush1.msra.mxu0 %v240
    %1489 = vmatprep.subr.mxu0 %v233
    %1490 = vmatpush1.msra.mxu0 %v232
    %1491 = vmatprep.subr.mxu0 %v225
    %1492 = vmatpush1.msra.mxu0 %v224
    %1493 = vmatprep.subr.mxu0 %v217
    %1494 = vmatpush1.msra.mxu0 %v216
    %1495 = vmatprep.subr.mxu0 %v465
    %1496 = vmatpush2.msra.mxu0 %v464
    %1497 = vmatprep.subr.mxu0 %v457
    %1498 = vmatpush2.msra.mxu0 %v456
    %1499 = vmatprep.subr.mxu0 %v449
    %1500 = vmatpush2.msra.mxu0 %v448
    %1501 = vmatprep.subr.mxu0 %v441
    %1502 = vmatpush2.msra.mxu0 %v440
    %1503 = vmatprep.subr.mxu0 %v433
    %1504 = vmatpush2.msra.mxu0 %v432
    %1505 = vmatprep.subr.mxu0 %v425
    %1506 = vmatpush2.msra.mxu0 %v424
    %1507 = vmatprep.subr.mxu0 %v417
    %1508 = vmatpush2.msra.mxu0 %v416
    %1509 = vmatprep.subr.mxu0 %v409
    %1510 = vmatpush2.msra.mxu0 %v408
    %1511 = vmatprep.subr.mxu0 %v401
    %1512 = vmatpush2.msra.mxu0 %v400
    %1513 = vmatprep.subr.mxu0 %v393
    %1514 = vmatpush2.msra.mxu0 %v392
    %1515 = vmatprep.subr.mxu0 %v385
    %1516 = vmatpush2.msra.mxu0 %v384
    %1517 = vmatprep.subr.mxu0 %v377
    %1518 = vmatpush2.msra.mxu0 %v376
    %1519 = vmatprep.subr.mxu0 %v369
    %1520 = vmatpush2.msra.mxu0 %v368
    %1521 = vmatprep.subr.mxu0 %v361
    %1522 = vmatpush2.msra.mxu0 %v360
    %1523 = vmatprep.subr.mxu0 %v353
    %1524 = vmatpush2.msra.mxu0 %v352
    %1525 = vmatprep.subr.mxu0 %v345
    %1526 = vmatpush2.msra.mxu0 %v344
    %1527 = vmatprep.mubr.f32.mxu0 %v1247
    %1528 = vmatmul.mubr.f32.gmra.mxu0 %v1246
    %v1529 = vpop.f32.mrf.mxu0
    %v1530 = vadd.f32 0.0, %v1529
    %v1531 = vpop.f32.mrf.mxu0
    %v1532 = vadd.f32 0.0, %v1531
    %1533 = vdwg.mxu0
    %v1542 = vrot.slane %v1317, 6
    %v1543 = vrot.slane %v1319, 6
    %v1544 = vrot.slane %v1388, 6
    %v1545 = vrot.slane %v1390, 6
    %v1546 = vrot.slane %v1459, 6
    %v1547 = vrot.slane %v1461, 6
    %v1548 = vrot.slane %v1530, 6
    %v1549 = vrot.slane %v1532, 6
    %v1558 = vadd.f32 %v202, %v1542
    %v1559 = vadd.f32 %v203, %v1543
    %v1560 = vadd.f32 %v204, %v1544
    %v1561 = vadd.f32 %v205, %v1545
    %v1562 = vadd.f32 %v206, %v1546
    %v1563 = vadd.f32 %v207, %v1547
    %v1564 = vadd.f32 %v208, %v1548
    %v1565 = vadd.f32 %v209, %v1549
    %v1566 = vxor.u32 %v1558, 2147483648
    %v1567 = vxor.u32 %v1559, 2147483648
    %v1568 = vmul.f32 %v1566, 1.442695
    %v1569 = vpow.pop %v1568
    %v1570 = vmul.f32 %v1567, 1.442695
    %v1571 = vpow.pop %v1570
    %v1572 = vadd.f32 %v1569, 1.0
    %v1573 = vadd.f32 %v1571, 1.0
    %v1574 = vrcp.pop %v1572
    %v1575 = vmul.f32 1.0, %v1574
    %v1576 = vrcp.pop %v1573
    %v1577 = vmul.f32 1.0, %v1576
    %v1578 = vxor.u32 %v1560, 2147483648
    %v1579 = vxor.u32 %v1561, 2147483648
    %v1580 = vmul.f32 %v1578, 1.442695
    %v1581 = vpow.pop %v1580
    %v1582 = vmul.f32 %v1579, 1.442695
    %v1583 = vpow.pop %v1582
    %v1584 = vadd.f32 %v1581, 1.0
    %v1585 = vadd.f32 %v1583, 1.0
    %v1586 = vrcp.pop %v1584
    %v1587 = vmul.f32 1.0, %v1586
    %v1588 = vrcp.pop %v1585
    %v1589 = vmul.f32 1.0, %v1588
    %v1590 = vtanh.pop %v1562
    %v1591 = vtanh.pop %v1563
    %v1592 = vxor.u32 %v1564, 2147483648
    %v1593 = vxor.u32 %v1565, 2147483648
    %v1594 = vmul.f32 %v1592, 1.442695
    %v1595 = vpow.pop %v1594
    %v1596 = vmul.f32 %v1593, 1.442695
    %v1597 = vpow.pop %v1596
    %v1598 = vadd.f32 %v1595, 1.0
    %v1599 = vadd.f32 %v1597, 1.0
    %v1600 = vrcp.pop %v1598
    %v1601 = vmul.f32 1.0, %v1600
    %v1602 = vrcp.pop %v1599
    %v1603 = vmul.f32 1.0, %v1602
    %v1606 = vrot.slane %v1218, 7
    %v1607 = vrot.slane %v1219, 7
    %v1610 = vmul.f32 %v1587, %v1606
    %v1611 = vmul.f32 %v1589, %v1607
    %v1612 = vmul.f32 %v1575, %v1590
    %v1613 = vmul.f32 %v1577, %v1591
    %v1614 = vadd.f32 %v1610, %v1612
    %v1615 = vadd.f32 %v1611, %v1613
    %v1616 = vtanh.pop %v1614
    %v1617 = vtanh.pop %v1615
    %v1618 = vmul.f32 %v1601, %v1616
    %v1619 = vmul.f32 %v1603, %v1617
    %v1622 = vcombine.low %v1618, %v1619
    %v1624 = vunpack.c.l.s4 1966171168
    %v1625 = vunpack.c.0.s8 %v1624
    %v1626 = vlaneseq
    %v1627 = vshrl.u32 %v1626, 7
    %v1628 = vsub.s32 %v1625, %v1627
    %v1629 = vrot.slane %v1622, %v1628
    %v1631 = vunpack.c.l.s4 1966171168
    %v1632 = vunpack.c.0.s8 %v1631
    %v1633 = vlaneseq
    %v1634 = vshrl.u32 %v1633, 7
    %v1635 = vsub.s32 %v1632, %v1634
    %v1636 = vrot.slane %v1629, %v1635
    %v1637 = vcombine.high %v1636, %v1636
    %s1639 = scalar_lea.vmem [#allocation2], 2
    %1640 = vst.msk [vmem:[%s1639] ss:$8 sm:$0x3] %vm851, %v1637
    %1641 = vst.msk [vmem:[%s1639] ss:$8 sm:$0x0] %vm851, %v1637
    %v1642 = vrot.slane %v1618, 2
    %v1643 = vrot.slane %v1619, 2
    %1646 = vmatprep.subr.mxu0 %v331
    %1647 = vmatpush1.msra.mxu0 %v330
    %1648 = vmatprep.subr.mxu0 %v323
    %1649 = vmatpush1.msra.mxu0 %v322
    %1650 = vmatprep.subr.mxu0 %v315
    %1651 = vmatpush1.msra.mxu0 %v314
    %1652 = vmatprep.subr.mxu0 %v307
    %1653 = vmatpush1.msra.mxu0 %v306
    %1654 = vmatprep.subr.mxu0 %v299
    %1655 = vmatpush1.msra.mxu0 %v298
    %1656 = vmatprep.subr.mxu0 %v291
    %1657 = vmatpush1.msra.mxu0 %v290
    %1658 = vmatprep.subr.mxu0 %v283
    %1659 = vmatpush1.msra.mxu0 %v282
    %1660 = vmatprep.subr.mxu0 %v275
    %1661 = vmatpush1.msra.mxu0 %v274
    %1662 = vmatprep.subr.mxu0 %v267
    %1663 = vmatpush1.msra.mxu0 %v266
    %1664 = vmatprep.subr.mxu0 %v259
    %1665 = vmatpush1.msra.mxu0 %v258
    %1666 = vmatprep.subr.mxu0 %v251
    %1667 = vmatpush1.msra.mxu0 %v250
    %1668 = vmatprep.subr.mxu0 %v243
    %1669 = vmatpush1.msra.mxu0 %v242
    %1670 = vmatprep.subr.mxu0 %v235
    %1671 = vmatpush1.msra.mxu0 %v234
    %1672 = vmatprep.subr.mxu0 %v227
    %1673 = vmatpush1.msra.mxu0 %v226
    %1674 = vmatprep.subr.mxu0 %v219
    %1675 = vmatpush1.msra.mxu0 %v218
    %1676 = vmatprep.subr.mxu0 %v211
    %1677 = vmatpush1.msra.mxu0 %v210
    %1678 = vmatprep.subr.mxu0 %v459
    %1679 = vmatpush2.msra.mxu0 %v458
    %1680 = vmatprep.subr.mxu0 %v451
    %1681 = vmatpush2.msra.mxu0 %v450
    %1682 = vmatprep.subr.mxu0 %v443
    %1683 = vmatpush2.msra.mxu0 %v442
    %1684 = vmatprep.subr.mxu0 %v435
    %1685 = vmatpush2.msra.mxu0 %v434
    %1686 = vmatprep.subr.mxu0 %v427
    %1687 = vmatpush2.msra.mxu0 %v426
    %1688 = vmatprep.subr.mxu0 %v419
    %1689 = vmatpush2.msra.mxu0 %v418
    %1690 = vmatprep.subr.mxu0 %v411
    %1691 = vmatpush2.msra.mxu0 %v410
    %1692 = vmatprep.subr.mxu0 %v403
    %1693 = vmatpush2.msra.mxu0 %v402
    %1694 = vmatprep.subr.mxu0 %v395
    %1695 = vmatpush2.msra.mxu0 %v394
    %1696 = vmatprep.subr.mxu0 %v387
    %1697 = vmatpush2.msra.mxu0 %v386
    %1698 = vmatprep.subr.mxu0 %v379
    %1699 = vmatpush2.msra.mxu0 %v378
    %1700 = vmatprep.subr.mxu0 %v371
    %1701 = vmatpush2.msra.mxu0 %v370
    %1702 = vmatprep.subr.mxu0 %v363
    %1703 = vmatpush2.msra.mxu0 %v362
    %1704 = vmatprep.subr.mxu0 %v355
    %1705 = vmatpush2.msra.mxu0 %v354
    %1706 = vmatprep.subr.mxu0 %v347
    %1707 = vmatpush2.msra.mxu0 %v346
    %1708 = vmatprep.subr.mxu0 %v339
    %1709 = vmatpush2.msra.mxu0 %v338
    %1710 = vmatprep.mubr.f32.mxu0 %v1643
    %1711 = vmatmul.mubr.f32.gmra.mxu0 %v1642
    %v1712 = vpop.f32.mrf.mxu0
    %v1713 = vadd.f32 0.0, %v1712
    %v1714 = vpop.f32.mrf.mxu0
    %v1715 = vadd.f32 0.0, %v1714
    %1716 = vdwg.mxu0
    %1717 = vmatprep.subr.mxu0 %v333
    %1718 = vmatpush1.msra.mxu0 %v332
    %1719 = vmatprep.subr.mxu0 %v325
    %1720 = vmatpush1.msra.mxu0 %v324
    %1721 = vmatprep.subr.mxu0 %v317
    %1722 = vmatpush1.msra.mxu0 %v316
    %1723 = vmatprep.subr.mxu0 %v309
    %1724 = vmatpush1.msra.mxu0 %v308
    %1725 = vmatprep.subr.mxu0 %v301
    %1726 = vmatpush1.msra.mxu0 %v300
    %1727 = vmatprep.subr.mxu0 %v293
    %1728 = vmatpush1.msra.mxu0 %v292
    %1729 = vmatprep.subr.mxu0 %v285
    %1730 = vmatpush1.msra.mxu0 %v284
    %1731 = vmatprep.subr.mxu0 %v277
    %1732 = vmatpush1.msra.mxu0 %v276
    %1733 = vmatprep.subr.mxu0 %v269
    %1734 = vmatpush1.msra.mxu0 %v268
    %1735 = vmatprep.subr.mxu0 %v261
    %1736 = vmatpush1.msra.mxu0 %v260
    %1737 = vmatprep.subr.mxu0 %v253
    %1738 = vmatpush1.msra.mxu0 %v252
    %1739 = vmatprep.subr.mxu0 %v245
    %1740 = vmatpush1.msra.mxu0 %v244
    %1741 = vmatprep.subr.mxu0 %v237
    %1742 = vmatpush1.msra.mxu0 %v236
    %1743 = vmatprep.subr.mxu0 %v229
    %1744 = vmatpush1.msra.mxu0 %v228
    %1745 = vmatprep.subr.mxu0 %v221
    %1746 = vmatpush1.msra.mxu0 %v220
    %1747 = vmatprep.subr.mxu0 %v213
    %1748 = vmatpush1.msra.mxu0 %v212
    %1749 = vmatprep.subr.mxu0 %v461
    %1750 = vmatpush2.msra.mxu0 %v460
    %1751 = vmatprep.subr.mxu0 %v453
    %1752 = vmatpush2.msra.mxu0 %v452
    %1753 = vmatprep.subr.mxu0 %v445
    %1754 = vmatpush2.msra.mxu0 %v444
    %1755 = vmatprep.subr.mxu0 %v437
    %1756 = vmatpush2.msra.mxu0 %v436
    %1757 = vmatprep.subr.mxu0 %v429
    %1758 = vmatpush2.msra.mxu0 %v428
    %1759 = vmatprep.subr.mxu0 %v421
    %1760 = vmatpush2.msra.mxu0 %v420
    %1761 = vmatprep.subr.mxu0 %v413
    %1762 = vmatpush2.msra.mxu0 %v412
    %1763 = vmatprep.subr.mxu0 %v405
    %1764 = vmatpush2.msra.mxu0 %v404
    %1765 = vmatprep.subr.mxu0 %v397
    %1766 = vmatpush2.msra.mxu0 %v396
    %1767 = vmatprep.subr.mxu0 %v389
    %1768 = vmatpush2.msra.mxu0 %v388
    %1769 = vmatprep.subr.mxu0 %v381
    %1770 = vmatpush2.msra.mxu0 %v380
    %1771 = vmatprep.subr.mxu0 %v373
    %1772 = vmatpush2.msra.mxu0 %v372
    %1773 = vmatprep.subr.mxu0 %v365
    %1774 = vmatpush2.msra.mxu0 %v364
    %1775 = vmatprep.subr.mxu0 %v357
    %1776 = vmatpush2.msra.mxu0 %v356
    %1777 = vmatprep.subr.mxu0 %v349
    %1778 = vmatpush2.msra.mxu0 %v348
    %1779 = vmatprep.subr.mxu0 %v341
    %1780 = vmatpush2.msra.mxu0 %v340
    %1781 = vmatprep.mubr.f32.mxu0 %v1643
    %1782 = vmatmul.mubr.f32.gmra.mxu0 %v1642
    %v1783 = vpop.f32.mrf.mxu0
    %v1784 = vadd.f32 0.0, %v1783
    %v1785 = vpop.f32.mrf.mxu0
    %v1786 = vadd.f32 0.0, %v1785
    %1787 = vdwg.mxu0
    %1788 = vmatprep.subr.mxu0 %v335
    %1789 = vmatpush1.msra.mxu0 %v334
    %1790 = vmatprep.subr.mxu0 %v327
    %1791 = vmatpush1.msra.mxu0 %v326
    %1792 = vmatprep.subr.mxu0 %v319
    %1793 = vmatpush1.msra.mxu0 %v318
    %1794 = vmatprep.subr.mxu0 %v311
    %1795 = vmatpush1.msra.mxu0 %v310
    %1796 = vmatprep.subr.mxu0 %v303
    %1797 = vmatpush1.msra.mxu0 %v302
    %1798 = vmatprep.subr.mxu0 %v295
    %1799 = vmatpush1.msra.mxu0 %v294
    %1800 = vmatprep.subr.mxu0 %v287
    %1801 = vmatpush1.msra.mxu0 %v286
    %1802 = vmatprep.subr.mxu0 %v279
    %1803 = vmatpush1.msra.mxu0 %v278
    %1804 = vmatprep.subr.mxu0 %v271
    %1805 = vmatpush1.msra.mxu0 %v270
    %1806 = vmatprep.subr.mxu0 %v263
    %1807 = vmatpush1.msra.mxu0 %v262
    %1808 = vmatprep.subr.mxu0 %v255
    %1809 = vmatpush1.msra.mxu0 %v254
    %1810 = vmatprep.subr.mxu0 %v247
    %1811 = vmatpush1.msra.mxu0 %v246
    %1812 = vmatprep.subr.mxu0 %v239
    %1813 = vmatpush1.msra.mxu0 %v238
    %1814 = vmatprep.subr.mxu0 %v231
    %1815 = vmatpush1.msra.mxu0 %v230
    %1816 = vmatprep.subr.mxu0 %v223
    %1817 = vmatpush1.msra.mxu0 %v222
    %1818 = vmatprep.subr.mxu0 %v215
    %1819 = vmatpush1.msra.mxu0 %v214
    %1820 = vmatprep.subr.mxu0 %v463
    %1821 = vmatpush2.msra.mxu0 %v462
    %1822 = vmatprep.subr.mxu0 %v455
    %1823 = vmatpush2.msra.mxu0 %v454
    %1824 = vmatprep.subr.mxu0 %v447
    %1825 = vmatpush2.msra.mxu0 %v446
    %1826 = vmatprep.subr.mxu0 %v439
    %1827 = vmatpush2.msra.mxu0 %v438
    %1828 = vmatprep.subr.mxu0 %v431
    %1829 = vmatpush2.msra.mxu0 %v430
    %1830 = vmatprep.subr.mxu0 %v423
    %1831 = vmatpush2.msra.mxu0 %v422
    %1832 = vmatprep.subr.mxu0 %v415
    %1833 = vmatpush2.msra.mxu0 %v414
    %1834 = vmatprep.subr.mxu0 %v407
    %1835 = vmatpush2.msra.mxu0 %v406
    %1836 = vmatprep.subr.mxu0 %v399
    %1837 = vmatpush2.msra.mxu0 %v398
    %1838 = vmatprep.subr.mxu0 %v391
    %1839 = vmatpush2.msra.mxu0 %v390
    %1840 = vmatprep.subr.mxu0 %v383
    %1841 = vmatpush2.msra.mxu0 %v382
    %1842 = vmatprep.subr.mxu0 %v375
    %1843 = vmatpush2.msra.mxu0 %v374
    %1844 = vmatprep.subr.mxu0 %v367
    %1845 = vmatpush2.msra.mxu0 %v366
    %1846 = vmatprep.subr.mxu0 %v359
    %1847 = vmatpush2.msra.mxu0 %v358
    %1848 = vmatprep.subr.mxu0 %v351
    %1849 = vmatpush2.msra.mxu0 %v350
    %1850 = vmatprep.subr.mxu0 %v343
    %1851 = vmatpush2.msra.mxu0 %v342
    %1852 = vmatprep.mubr.f32.mxu0 %v1643
    %1853 = vmatmul.mubr.f32.gmra.mxu0 %v1642
    %v1854 = vpop.f32.mrf.mxu0
    %v1855 = vadd.f32 0.0, %v1854
    %v1856 = vpop.f32.mrf.mxu0
    %v1857 = vadd.f32 0.0, %v1856
    %1858 = vdwg.mxu0
    %1859 = vmatprep.subr.mxu0 %v337
    %1860 = vmatpush1.msra.mxu0 %v336
    %1861 = vmatprep.subr.mxu0 %v329
    %1862 = vmatpush1.msra.mxu0 %v328
    %1863 = vmatprep.subr.mxu0 %v321
    %1864 = vmatpush1.msra.mxu0 %v320
    %1865 = vmatprep.subr.mxu0 %v313
    %1866 = vmatpush1.msra.mxu0 %v312
    %1867 = vmatprep.subr.mxu0 %v305
    %1868 = vmatpush1.msra.mxu0 %v304
    %1869 = vmatprep.subr.mxu0 %v297
    %1870 = vmatpush1.msra.mxu0 %v296
    %1871 = vmatprep.subr.mxu0 %v289
    %1872 = vmatpush1.msra.mxu0 %v288
    %1873 = vmatprep.subr.mxu0 %v281
    %1874 = vmatpush1.msra.mxu0 %v280
    %1875 = vmatprep.subr.mxu0 %v273
    %1876 = vmatpush1.msra.mxu0 %v272
    %1877 = vmatprep.subr.mxu0 %v265
    %1878 = vmatpush1.msra.mxu0 %v264
    %1879 = vmatprep.subr.mxu0 %v257
    %1880 = vmatpush1.msra.mxu0 %v256
    %1881 = vmatprep.subr.mxu0 %v249
    %1882 = vmatpush1.msra.mxu0 %v248
    %1883 = vmatprep.subr.mxu0 %v241
    %1884 = vmatpush1.msra.mxu0 %v240
    %1885 = vmatprep.subr.mxu0 %v233
    %1886 = vmatpush1.msra.mxu0 %v232
    %1887 = vmatprep.subr.mxu0 %v225
    %1888 = vmatpush1.msra.mxu0 %v224
    %1889 = vmatprep.subr.mxu0 %v217
    %1890 = vmatpush1.msra.mxu0 %v216
    %1891 = vmatprep.subr.mxu0 %v465
    %1892 = vmatpush2.msra.mxu0 %v464
    %1893 = vmatprep.subr.mxu0 %v457
    %1894 = vmatpush2.msra.mxu0 %v456
    %1895 = vmatprep.subr.mxu0 %v449
    %1896 = vmatpush2.msra.mxu0 %v448
    %1897 = vmatprep.subr.mxu0 %v441
    %1898 = vmatpush2.msra.mxu0 %v440
    %1899 = vmatprep.subr.mxu0 %v433
    %1900 = vmatpush2.msra.mxu0 %v432
    %1901 = vmatprep.subr.mxu0 %v425
    %1902 = vmatpush2.msra.mxu0 %v424
    %1903 = vmatprep.subr.mxu0 %v417
    %1904 = vmatpush2.msra.mxu0 %v416
    %1905 = vmatprep.subr.mxu0 %v409
    %1906 = vmatpush2.msra.mxu0 %v408
    %1907 = vmatprep.subr.mxu0 %v401
    %1908 = vmatpush2.msra.mxu0 %v400
    %1909 = vmatprep.subr.mxu0 %v393
    %1910 = vmatpush2.msra.mxu0 %v392
    %1911 = vmatprep.subr.mxu0 %v385
    %1912 = vmatpush2.msra.mxu0 %v384
    %1913 = vmatprep.subr.mxu0 %v377
    %1914 = vmatpush2.msra.mxu0 %v376
    %1915 = vmatprep.subr.mxu0 %v369
    %1916 = vmatpush2.msra.mxu0 %v368
    %1917 = vmatprep.subr.mxu0 %v361
    %1918 = vmatpush2.msra.mxu0 %v360
    %1919 = vmatprep.subr.mxu0 %v353
    %1920 = vmatpush2.msra.mxu0 %v352
    %1921 = vmatprep.subr.mxu0 %v345
    %1922 = vmatpush2.msra.mxu0 %v344
    %1923 = vmatprep.mubr.f32.mxu0 %v1643
    %1924 = vmatmul.mubr.f32.gmra.mxu0 %v1642
    %v1925 = vpop.f32.mrf.mxu0
    %v1926 = vadd.f32 0.0, %v1925
    %v1927 = vpop.f32.mrf.mxu0
    %v1928 = vadd.f32 0.0, %v1927
    %1929 = vdwg.mxu0
    %v1938 = vrot.slane %v1713, 5
    %v1939 = vrot.slane %v1715, 5
    %v1940 = vrot.slane %v1784, 5
    %v1941 = vrot.slane %v1786, 5
    %v1942 = vrot.slane %v1855, 5
    %v1943 = vrot.slane %v1857, 5
    %v1944 = vrot.slane %v1926, 5
    %v1945 = vrot.slane %v1928, 5
    %v1954 = vadd.f32 %v202, %v1938
    %v1955 = vadd.f32 %v203, %v1939
    %v1956 = vadd.f32 %v204, %v1940
    %v1957 = vadd.f32 %v205, %v1941
    %v1958 = vadd.f32 %v206, %v1942
    %v1959 = vadd.f32 %v207, %v1943
    %v1960 = vadd.f32 %v208, %v1944
    %v1961 = vadd.f32 %v209, %v1945
    %v1962 = vxor.u32 %v1954, 2147483648
    %v1963 = vxor.u32 %v1955, 2147483648
    %v1964 = vmul.f32 %v1962, 1.442695
    %v1965 = vpow.pop %v1964
    %v1966 = vmul.f32 %v1963, 1.442695
    %v1967 = vpow.pop %v1966
    %v1968 = vadd.f32 %v1965, 1.0
    %v1969 = vadd.f32 %v1967, 1.0
    %v1970 = vrcp.pop %v1968
    %v1971 = vmul.f32 1.0, %v1970
    %v1972 = vrcp.pop %v1969
    %v1973 = vmul.f32 1.0, %v1972
    %v1974 = vxor.u32 %v1956, 2147483648
    %v1975 = vxor.u32 %v1957, 2147483648
    %v1976 = vmul.f32 %v1974, 1.442695
    %v1977 = vpow.pop %v1976
    %v1978 = vmul.f32 %v1975, 1.442695
    %v1979 = vpow.pop %v1978
    %v1980 = vadd.f32 %v1977, 1.0
    %v1981 = vadd.f32 %v1979, 1.0
    %v1982 = vrcp.pop %v1980
    %v1983 = vmul.f32 1.0, %v1982
    %v1984 = vrcp.pop %v1981
    %v1985 = vmul.f32 1.0, %v1984
    %v1986 = vtanh.pop %v1958
    %v1987 = vtanh.pop %v1959
    %v1988 = vxor.u32 %v1960, 2147483648
    %v1989 = vxor.u32 %v1961, 2147483648
    %v1990 = vmul.f32 %v1988, 1.442695
    %v1991 = vpow.pop %v1990
    %v1992 = vmul.f32 %v1989, 1.442695
    %v1993 = vpow.pop %v1992
    %v1994 = vadd.f32 %v1991, 1.0
    %v1995 = vadd.f32 %v1993, 1.0
    %v1996 = vrcp.pop %v1994
    %v1997 = vmul.f32 1.0, %v1996
    %v1998 = vrcp.pop %v1995
    %v1999 = vmul.f32 1.0, %v1998
    %v2002 = vrot.slane %v1614, 7
    %v2003 = vrot.slane %v1615, 7
    %v2006 = vmul.f32 %v1983, %v2002
    %v2007 = vmul.f32 %v1985, %v2003
    %v2008 = vmul.f32 %v1971, %v1986
    %v2009 = vmul.f32 %v1973, %v1987
    %v2010 = vadd.f32 %v2006, %v2008
    %v2011 = vadd.f32 %v2007, %v2009
    %v2012 = vtanh.pop %v2010
    %v2013 = vtanh.pop %v2011
    %v2014 = vmul.f32 %v1997, %v2012
    %v2015 = vmul.f32 %v1999, %v2013
    %v2018 = vcombine.low %v2014, %v2015
    %v2020 = vunpack.c.l.s4 1966171168
    %v2021 = vunpack.c.0.s8 %v2020
    %v2022 = vlaneseq
    %v2023 = vshrl.u32 %v2022, 7
    %v2024 = vsub.s32 %v2021, %v2023
    %v2025 = vrot.slane %v2018, %v2024
    %v2026 = vcombine.high %v2025, %v2025
    %v2028 = vunpack.c.l.s4 1966171168
    %v2029 = vunpack.c.0.s8 %v2028
    %v2030 = vlaneseq
    %v2031 = vshrl.u32 %v2030, 7
    %v2032 = vsub.s32 %v2029, %v2031
    %v2033 = vrot.slane %v2026, %v2032
    %v2034 = vcombine.high %v2033, %v2033
    %s2036 = scalar_lea.vmem [#allocation2], 3
    %2037 = vst.msk [vmem:[%s2036] ss:$8 sm:$0x3] %vm851, %v2034
    %2038 = vst.msk [vmem:[%s2036] ss:$8 sm:$0x0] %vm851, %v2034
    %v2039 = vrot.slane %v2014, 3
    %v2040 = vrot.slane %v2015, 3
    %2043 = vmatprep.subr.mxu0 %v331
    %2044 = vmatpush1.msra.mxu0 %v330
    %2045 = vmatprep.subr.mxu0 %v323
    %2046 = vmatpush1.msra.mxu0 %v322
    %2047 = vmatprep.subr.mxu0 %v315
    %2048 = vmatpush1.msra.mxu0 %v314
    %2049 = vmatprep.subr.mxu0 %v307
    %2050 = vmatpush1.msra.mxu0 %v306
    %2051 = vmatprep.subr.mxu0 %v299
    %2052 = vmatpush1.msra.mxu0 %v298
    %2053 = vmatprep.subr.mxu0 %v291
    %2054 = vmatpush1.msra.mxu0 %v290
    %2055 = vmatprep.subr.mxu0 %v283
    %2056 = vmatpush1.msra.mxu0 %v282
    %2057 = vmatprep.subr.mxu0 %v275
    %2058 = vmatpush1.msra.mxu0 %v274
    %2059 = vmatprep.subr.mxu0 %v267
    %2060 = vmatpush1.msra.mxu0 %v266
    %2061 = vmatprep.subr.mxu0 %v259
    %2062 = vmatpush1.msra.mxu0 %v258
    %2063 = vmatprep.subr.mxu0 %v251
    %2064 = vmatpush1.msra.mxu0 %v250
    %2065 = vmatprep.subr.mxu0 %v243
    %2066 = vmatpush1.msra.mxu0 %v242
    %2067 = vmatprep.subr.mxu0 %v235
    %2068 = vmatpush1.msra.mxu0 %v234
    %2069 = vmatprep.subr.mxu0 %v227
    %2070 = vmatpush1.msra.mxu0 %v226
    %2071 = vmatprep.subr.mxu0 %v219
    %2072 = vmatpush1.msra.mxu0 %v218
    %2073 = vmatprep.subr.mxu0 %v211
    %2074 = vmatpush1.msra.mxu0 %v210
    %2075 = vmatprep.subr.mxu0 %v459
    %2076 = vmatpush2.msra.mxu0 %v458
    %2077 = vmatprep.subr.mxu0 %v451
    %2078 = vmatpush2.msra.mxu0 %v450
    %2079 = vmatprep.subr.mxu0 %v443
    %2080 = vmatpush2.msra.mxu0 %v442
    %2081 = vmatprep.subr.mxu0 %v435
    %2082 = vmatpush2.msra.mxu0 %v434
    %2083 = vmatprep.subr.mxu0 %v427
    %2084 = vmatpush2.msra.mxu0 %v426
    %2085 = vmatprep.subr.mxu0 %v419
    %2086 = vmatpush2.msra.mxu0 %v418
    %2087 = vmatprep.subr.mxu0 %v411
    %2088 = vmatpush2.msra.mxu0 %v410
    %2089 = vmatprep.subr.mxu0 %v403
    %2090 = vmatpush2.msra.mxu0 %v402
    %2091 = vmatprep.subr.mxu0 %v395
    %2092 = vmatpush2.msra.mxu0 %v394
    %2093 = vmatprep.subr.mxu0 %v387
    %2094 = vmatpush2.msra.mxu0 %v386
    %2095 = vmatprep.subr.mxu0 %v379
    %2096 = vmatpush2.msra.mxu0 %v378
    %2097 = vmatprep.subr.mxu0 %v371
    %2098 = vmatpush2.msra.mxu0 %v370
    %2099 = vmatprep.subr.mxu0 %v363
    %2100 = vmatpush2.msra.mxu0 %v362
    %2101 = vmatprep.subr.mxu0 %v355
    %2102 = vmatpush2.msra.mxu0 %v354
    %2103 = vmatprep.subr.mxu0 %v347
    %2104 = vmatpush2.msra.mxu0 %v346
    %2105 = vmatprep.subr.mxu0 %v339
    %2106 = vmatpush2.msra.mxu0 %v338
    %2107 = vmatprep.mubr.f32.mxu0 %v2040
    %2108 = vmatmul.mubr.f32.gmra.mxu0 %v2039
    %v2109 = vpop.f32.mrf.mxu0
    %v2110 = vadd.f32 0.0, %v2109
    %v2111 = vpop.f32.mrf.mxu0
    %v2112 = vadd.f32 0.0, %v2111
    %2113 = vdwg.mxu0
    %2114 = vmatprep.subr.mxu0 %v333
    %2115 = vmatpush1.msra.mxu0 %v332
    %2116 = vmatprep.subr.mxu0 %v325
    %2117 = vmatpush1.msra.mxu0 %v324
    %2118 = vmatprep.subr.mxu0 %v317
    %2119 = vmatpush1.msra.mxu0 %v316
    %2120 = vmatprep.subr.mxu0 %v309
    %2121 = vmatpush1.msra.mxu0 %v308
    %2122 = vmatprep.subr.mxu0 %v301
    %2123 = vmatpush1.msra.mxu0 %v300
    %2124 = vmatprep.subr.mxu0 %v293
    %2125 = vmatpush1.msra.mxu0 %v292
    %2126 = vmatprep.subr.mxu0 %v285
    %2127 = vmatpush1.msra.mxu0 %v284
    %2128 = vmatprep.subr.mxu0 %v277
    %2129 = vmatpush1.msra.mxu0 %v276
    %2130 = vmatprep.subr.mxu0 %v269
    %2131 = vmatpush1.msra.mxu0 %v268
    %2132 = vmatprep.subr.mxu0 %v261
    %2133 = vmatpush1.msra.mxu0 %v260
    %2134 = vmatprep.subr.mxu0 %v253
    %2135 = vmatpush1.msra.mxu0 %v252
    %2136 = vmatprep.subr.mxu0 %v245
    %2137 = vmatpush1.msra.mxu0 %v244
    %2138 = vmatprep.subr.mxu0 %v237
    %2139 = vmatpush1.msra.mxu0 %v236
    %2140 = vmatprep.subr.mxu0 %v229
    %2141 = vmatpush1.msra.mxu0 %v228
    %2142 = vmatprep.subr.mxu0 %v221
    %2143 = vmatpush1.msra.mxu0 %v220
    %2144 = vmatprep.subr.mxu0 %v213
    %2145 = vmatpush1.msra.mxu0 %v212
    %2146 = vmatprep.subr.mxu0 %v461
    %2147 = vmatpush2.msra.mxu0 %v460
    %2148 = vmatprep.subr.mxu0 %v453
    %2149 = vmatpush2.msra.mxu0 %v452
    %2150 = vmatprep.subr.mxu0 %v445
    %2151 = vmatpush2.msra.mxu0 %v444
    %2152 = vmatprep.subr.mxu0 %v437
    %2153 = vmatpush2.msra.mxu0 %v436
    %2154 = vmatprep.subr.mxu0 %v429
    %2155 = vmatpush2.msra.mxu0 %v428
    %2156 = vmatprep.subr.mxu0 %v421
    %2157 = vmatpush2.msra.mxu0 %v420
    %2158 = vmatprep.subr.mxu0 %v413
    %2159 = vmatpush2.msra.mxu0 %v412
    %2160 = vmatprep.subr.mxu0 %v405
    %2161 = vmatpush2.msra.mxu0 %v404
    %2162 = vmatprep.subr.mxu0 %v397
    %2163 = vmatpush2.msra.mxu0 %v396
    %2164 = vmatprep.subr.mxu0 %v389
    %2165 = vmatpush2.msra.mxu0 %v388
    %2166 = vmatprep.subr.mxu0 %v381
    %2167 = vmatpush2.msra.mxu0 %v380
    %2168 = vmatprep.subr.mxu0 %v373
    %2169 = vmatpush2.msra.mxu0 %v372
    %2170 = vmatprep.subr.mxu0 %v365
    %2171 = vmatpush2.msra.mxu0 %v364
    %2172 = vmatprep.subr.mxu0 %v357
    %2173 = vmatpush2.msra.mxu0 %v356
    %2174 = vmatprep.subr.mxu0 %v349
    %2175 = vmatpush2.msra.mxu0 %v348
    %2176 = vmatprep.subr.mxu0 %v341
    %2177 = vmatpush2.msra.mxu0 %v340
    %2178 = vmatprep.mubr.f32.mxu0 %v2040
    %2179 = vmatmul.mubr.f32.gmra.mxu0 %v2039
    %v2180 = vpop.f32.mrf.mxu0
    %v2181 = vadd.f32 0.0, %v2180
    %v2182 = vpop.f32.mrf.mxu0
    %v2183 = vadd.f32 0.0, %v2182
    %2184 = vdwg.mxu0
    %2185 = vmatprep.subr.mxu0 %v335
    %2186 = vmatpush1.msra.mxu0 %v334
    %2187 = vmatprep.subr.mxu0 %v327
    %2188 = vmatpush1.msra.mxu0 %v326
    %2189 = vmatprep.subr.mxu0 %v319
    %2190 = vmatpush1.msra.mxu0 %v318
    %2191 = vmatprep.subr.mxu0 %v311
    %2192 = vmatpush1.msra.mxu0 %v310
    %2193 = vmatprep.subr.mxu0 %v303
    %2194 = vmatpush1.msra.mxu0 %v302
    %2195 = vmatprep.subr.mxu0 %v295
    %2196 = vmatpush1.msra.mxu0 %v294
    %2197 = vmatprep.subr.mxu0 %v287
    %2198 = vmatpush1.msra.mxu0 %v286
    %2199 = vmatprep.subr.mxu0 %v279
    %2200 = vmatpush1.msra.mxu0 %v278
    %2201 = vmatprep.subr.mxu0 %v271
    %2202 = vmatpush1.msra.mxu0 %v270
    %2203 = vmatprep.subr.mxu0 %v263
    %2204 = vmatpush1.msra.mxu0 %v262
    %2205 = vmatprep.subr.mxu0 %v255
    %2206 = vmatpush1.msra.mxu0 %v254
    %2207 = vmatprep.subr.mxu0 %v247
    %2208 = vmatpush1.msra.mxu0 %v246
    %2209 = vmatprep.subr.mxu0 %v239
    %2210 = vmatpush1.msra.mxu0 %v238
    %2211 = vmatprep.subr.mxu0 %v231
    %2212 = vmatpush1.msra.mxu0 %v230
    %2213 = vmatprep.subr.mxu0 %v223
    %2214 = vmatpush1.msra.mxu0 %v222
    %2215 = vmatprep.subr.mxu0 %v215
    %2216 = vmatpush1.msra.mxu0 %v214
    %2217 = vmatprep.subr.mxu0 %v463
    %2218 = vmatpush2.msra.mxu0 %v462
    %2219 = vmatprep.subr.mxu0 %v455
    %2220 = vmatpush2.msra.mxu0 %v454
    %2221 = vmatprep.subr.mxu0 %v447
    %2222 = vmatpush2.msra.mxu0 %v446
    %2223 = vmatprep.subr.mxu0 %v439
    %2224 = vmatpush2.msra.mxu0 %v438
    %2225 = vmatprep.subr.mxu0 %v431
    %2226 = vmatpush2.msra.mxu0 %v430
    %2227 = vmatprep.subr.mxu0 %v423
    %2228 = vmatpush2.msra.mxu0 %v422
    %2229 = vmatprep.subr.mxu0 %v415
    %2230 = vmatpush2.msra.mxu0 %v414
    %2231 = vmatprep.subr.mxu0 %v407
    %2232 = vmatpush2.msra.mxu0 %v406
    %2233 = vmatprep.subr.mxu0 %v399
    %2234 = vmatpush2.msra.mxu0 %v398
    %2235 = vmatprep.subr.mxu0 %v391
    %2236 = vmatpush2.msra.mxu0 %v390
    %2237 = vmatprep.subr.mxu0 %v383
    %2238 = vmatpush2.msra.mxu0 %v382
    %2239 = vmatprep.subr.mxu0 %v375
    %2240 = vmatpush2.msra.mxu0 %v374
    %2241 = vmatprep.subr.mxu0 %v367
    %2242 = vmatpush2.msra.mxu0 %v366
    %2243 = vmatprep.subr.mxu0 %v359
    %2244 = vmatpush2.msra.mxu0 %v358
    %2245 = vmatprep.subr.mxu0 %v351
    %2246 = vmatpush2.msra.mxu0 %v350
    %2247 = vmatprep.subr.mxu0 %v343
    %2248 = vmatpush2.msra.mxu0 %v342
    %2249 = vmatprep.mubr.f32.mxu0 %v2040
    %2250 = vmatmul.mubr.f32.gmra.mxu0 %v2039
    %v2251 = vpop.f32.mrf.mxu0
    %v2252 = vadd.f32 0.0, %v2251
    %v2253 = vpop.f32.mrf.mxu0
    %v2254 = vadd.f32 0.0, %v2253
    %2255 = vdwg.mxu0
    %2256 = vmatprep.subr.mxu0 %v337
    %2257 = vmatpush1.msra.mxu0 %v336
    %2258 = vmatprep.subr.mxu0 %v329
    %2259 = vmatpush1.msra.mxu0 %v328
    %2260 = vmatprep.subr.mxu0 %v321
    %2261 = vmatpush1.msra.mxu0 %v320
    %2262 = vmatprep.subr.mxu0 %v313
    %2263 = vmatpush1.msra.mxu0 %v312
    %2264 = vmatprep.subr.mxu0 %v305
    %2265 = vmatpush1.msra.mxu0 %v304
    %2266 = vmatprep.subr.mxu0 %v297
    %2267 = vmatpush1.msra.mxu0 %v296
    %2268 = vmatprep.subr.mxu0 %v289
    %2269 = vmatpush1.msra.mxu0 %v288
    %2270 = vmatprep.subr.mxu0 %v281
    %2271 = vmatpush1.msra.mxu0 %v280
    %2272 = vmatprep.subr.mxu0 %v273
    %2273 = vmatpush1.msra.mxu0 %v272
    %2274 = vmatprep.subr.mxu0 %v265
    %2275 = vmatpush1.msra.mxu0 %v264
    %2276 = vmatprep.subr.mxu0 %v257
    %2277 = vmatpush1.msra.mxu0 %v256
    %2278 = vmatprep.subr.mxu0 %v249
    %2279 = vmatpush1.msra.mxu0 %v248
    %2280 = vmatprep.subr.mxu0 %v241
    %2281 = vmatpush1.msra.mxu0 %v240
    %2282 = vmatprep.subr.mxu0 %v233
    %2283 = vmatpush1.msra.mxu0 %v232
    %2284 = vmatprep.subr.mxu0 %v225
    %2285 = vmatpush1.msra.mxu0 %v224
    %2286 = vmatprep.subr.mxu0 %v217
    %2287 = vmatpush1.msra.mxu0 %v216
    %2288 = vmatprep.subr.mxu0 %v465
    %2289 = vmatpush2.msra.mxu0 %v464
    %2290 = vmatprep.subr.mxu0 %v457
    %2291 = vmatpush2.msra.mxu0 %v456
    %2292 = vmatprep.subr.mxu0 %v449
    %2293 = vmatpush2.msra.mxu0 %v448
    %2294 = vmatprep.subr.mxu0 %v441
    %2295 = vmatpush2.msra.mxu0 %v440
    %2296 = vmatprep.subr.mxu0 %v433
    %2297 = vmatpush2.msra.mxu0 %v432
    %2298 = vmatprep.subr.mxu0 %v425
    %2299 = vmatpush2.msra.mxu0 %v424
    %2300 = vmatprep.subr.mxu0 %v417
    %2301 = vmatpush2.msra.mxu0 %v416
    %2302 = vmatprep.subr.mxu0 %v409
    %2303 = vmatpush2.msra.mxu0 %v408
    %2304 = vmatprep.subr.mxu0 %v401
    %2305 = vmatpush2.msra.mxu0 %v400
    %2306 = vmatprep.subr.mxu0 %v393
    %2307 = vmatpush2.msra.mxu0 %v392
    %2308 = vmatprep.subr.mxu0 %v385
    %2309 = vmatpush2.msra.mxu0 %v384
    %2310 = vmatprep.subr.mxu0 %v377
    %2311 = vmatpush2.msra.mxu0 %v376
    %2312 = vmatprep.subr.mxu0 %v369
    %2313 = vmatpush2.msra.mxu0 %v368
    %2314 = vmatprep.subr.mxu0 %v361
    %2315 = vmatpush2.msra.mxu0 %v360
    %2316 = vmatprep.subr.mxu0 %v353
    %2317 = vmatpush2.msra.mxu0 %v352
    %2318 = vmatprep.subr.mxu0 %v345
    %2319 = vmatpush2.msra.mxu0 %v344
    %2320 = vmatprep.mubr.f32.mxu0 %v2040
    %2321 = vmatmul.mubr.f32.gmra.mxu0 %v2039
    %v2322 = vpop.f32.mrf.mxu0
    %v2323 = vadd.f32 0.0, %v2322
    %v2324 = vpop.f32.mrf.mxu0
    %v2325 = vadd.f32 0.0, %v2324
    %2326 = vdwg.mxu0
    %v2335 = vrot.slane %v2110, 4
    %v2336 = vrot.slane %v2112, 4
    %v2337 = vrot.slane %v2181, 4
    %v2338 = vrot.slane %v2183, 4
    %v2339 = vrot.slane %v2252, 4
    %v2340 = vrot.slane %v2254, 4
    %v2341 = vrot.slane %v2323, 4
    %v2342 = vrot.slane %v2325, 4
    %v2351 = vadd.f32 %v202, %v2335
    %v2352 = vadd.f32 %v203, %v2336
    %v2353 = vadd.f32 %v204, %v2337
    %v2354 = vadd.f32 %v205, %v2338
    %v2355 = vadd.f32 %v206, %v2339
    %v2356 = vadd.f32 %v207, %v2340
    %v2357 = vadd.f32 %v208, %v2341
    %v2358 = vadd.f32 %v209, %v2342
    %v2359 = vxor.u32 %v2351, 2147483648
    %v2360 = vxor.u32 %v2352, 2147483648
    %v2361 = vmul.f32 %v2359, 1.442695
    %v2362 = vpow.pop %v2361
    %v2363 = vmul.f32 %v2360, 1.442695
    %v2364 = vpow.pop %v2363
    %v2365 = vadd.f32 %v2362, 1.0
    %v2366 = vadd.f32 %v2364, 1.0
    %v2367 = vrcp.pop %v2365
    %v2368 = vmul.f32 1.0, %v2367
    %v2369 = vrcp.pop %v2366
    %v2370 = vmul.f32 1.0, %v2369
    %v2371 = vxor.u32 %v2353, 2147483648
    %v2372 = vxor.u32 %v2354, 2147483648
    %v2373 = vmul.f32 %v2371, 1.442695
    %v2374 = vpow.pop %v2373
    %v2375 = vmul.f32 %v2372, 1.442695
    %v2376 = vpow.pop %v2375
    %v2377 = vadd.f32 %v2374, 1.0
    %v2378 = vadd.f32 %v2376, 1.0
    %v2379 = vrcp.pop %v2377
    %v2380 = vmul.f32 1.0, %v2379
    %v2381 = vrcp.pop %v2378
    %v2382 = vmul.f32 1.0, %v2381
    %v2383 = vtanh.pop %v2355
    %v2384 = vtanh.pop %v2356
    %v2385 = vxor.u32 %v2357, 2147483648
    %v2386 = vxor.u32 %v2358, 2147483648
    %v2387 = vmul.f32 %v2385, 1.442695
    %v2388 = vpow.pop %v2387
    %v2389 = vmul.f32 %v2386, 1.442695
    %v2390 = vpow.pop %v2389
    %v2391 = vadd.f32 %v2388, 1.0
    %v2392 = vadd.f32 %v2390, 1.0
    %v2393 = vrcp.pop %v2391
    %v2394 = vmul.f32 1.0, %v2393
    %v2395 = vrcp.pop %v2392
    %v2396 = vmul.f32 1.0, %v2395
    %v2399 = vrot.slane %v2010, 7
    %v2400 = vrot.slane %v2011, 7
    %v2403 = vmul.f32 %v2380, %v2399
    %v2404 = vmul.f32 %v2382, %v2400
    %v2405 = vmul.f32 %v2368, %v2383
    %v2406 = vmul.f32 %v2370, %v2384
    %v2407 = vadd.f32 %v2403, %v2405
    %v2408 = vadd.f32 %v2404, %v2406
    %v2409 = vtanh.pop %v2407
    %v2410 = vtanh.pop %v2408
    %v2411 = vmul.f32 %v2394, %v2409
    %v2412 = vmul.f32 %v2396, %v2410
    %v2415 = vcombine.high %v2411, %v2412
    %v2417 = vunpack.c.l.s4 1966171168
    %v2418 = vunpack.c.0.s8 %v2417
    %v2419 = vlaneseq
    %v2420 = vshrl.u32 %v2419, 7
    %v2421 = vsub.s32 %v2418, %v2420
    %v2422 = vrot.slane %v2415, %v2421
    %v2424 = vunpack.c.l.s4 1966171168
    %v2425 = vunpack.c.0.s8 %v2424
    %v2426 = vlaneseq
    %v2427 = vshrl.u32 %v2426, 7
    %v2428 = vsub.s32 %v2425, %v2427
    %v2429 = vrot.slane %v2422, %v2428
    %s2431 = scalar_lea.vmem [#allocation2], 4
    %2432 = vst.msk [vmem:[%s2431] ss:$8 sm:$0x3] %vm851, %v2429
    %2433 = vst.msk [vmem:[%s2431] ss:$8 sm:$0x0] %vm851, %v2429
    %v2434 = vrot.slane %v2411, 4
    %v2435 = vrot.slane %v2412, 4
    %2438 = vmatprep.subr.mxu0 %v331
    %2439 = vmatpush1.msra.mxu0 %v330
    %2440 = vmatprep.subr.mxu0 %v323
    %2441 = vmatpush1.msra.mxu0 %v322
    %2442 = vmatprep.subr.mxu0 %v315
    %2443 = vmatpush1.msra.mxu0 %v314
    %2444 = vmatprep.subr.mxu0 %v307
    %2445 = vmatpush1.msra.mxu0 %v306
    %2446 = vmatprep.subr.mxu0 %v299
    %2447 = vmatpush1.msra.mxu0 %v298
    %2448 = vmatprep.subr.mxu0 %v291
    %2449 = vmatpush1.msra.mxu0 %v290
    %2450 = vmatprep.subr.mxu0 %v283
    %2451 = vmatpush1.msra.mxu0 %v282
    %2452 = vmatprep.subr.mxu0 %v275
    %2453 = vmatpush1.msra.mxu0 %v274
    %2454 = vmatprep.subr.mxu0 %v267
    %2455 = vmatpush1.msra.mxu0 %v266
    %2456 = vmatprep.subr.mxu0 %v259
    %2457 = vmatpush1.msra.mxu0 %v258
    %2458 = vmatprep.subr.mxu0 %v251
    %2459 = vmatpush1.msra.mxu0 %v250
    %2460 = vmatprep.subr.mxu0 %v243
    %2461 = vmatpush1.msra.mxu0 %v242
    %2462 = vmatprep.subr.mxu0 %v235
    %2463 = vmatpush1.msra.mxu0 %v234
    %2464 = vmatprep.subr.mxu0 %v227
    %2465 = vmatpush1.msra.mxu0 %v226
    %2466 = vmatprep.subr.mxu0 %v219
    %2467 = vmatpush1.msra.mxu0 %v218
    %2468 = vmatprep.subr.mxu0 %v211
    %2469 = vmatpush1.msra.mxu0 %v210
    %2470 = vmatprep.subr.mxu0 %v459
    %2471 = vmatpush2.msra.mxu0 %v458
    %2472 = vmatprep.subr.mxu0 %v451
    %2473 = vmatpush2.msra.mxu0 %v450
    %2474 = vmatprep.subr.mxu0 %v443
    %2475 = vmatpush2.msra.mxu0 %v442
    %2476 = vmatprep.subr.mxu0 %v435
    %2477 = vmatpush2.msra.mxu0 %v434
    %2478 = vmatprep.subr.mxu0 %v427
    %2479 = vmatpush2.msra.mxu0 %v426
    %2480 = vmatprep.subr.mxu0 %v419
    %2481 = vmatpush2.msra.mxu0 %v418
    %2482 = vmatprep.subr.mxu0 %v411
    %2483 = vmatpush2.msra.mxu0 %v410
    %2484 = vmatprep.subr.mxu0 %v403
    %2485 = vmatpush2.msra.mxu0 %v402
    %2486 = vmatprep.subr.mxu0 %v395
    %2487 = vmatpush2.msra.mxu0 %v394
    %2488 = vmatprep.subr.mxu0 %v387
    %2489 = vmatpush2.msra.mxu0 %v386
    %2490 = vmatprep.subr.mxu0 %v379
    %2491 = vmatpush2.msra.mxu0 %v378
    %2492 = vmatprep.subr.mxu0 %v371
    %2493 = vmatpush2.msra.mxu0 %v370
    %2494 = vmatprep.subr.mxu0 %v363
    %2495 = vmatpush2.msra.mxu0 %v362
    %2496 = vmatprep.subr.mxu0 %v355
    %2497 = vmatpush2.msra.mxu0 %v354
    %2498 = vmatprep.subr.mxu0 %v347
    %2499 = vmatpush2.msra.mxu0 %v346
    %2500 = vmatprep.subr.mxu0 %v339
    %2501 = vmatpush2.msra.mxu0 %v338
    %2502 = vmatprep.mubr.f32.mxu0 %v2435
    %2503 = vmatmul.mubr.f32.gmra.mxu0 %v2434
    %v2504 = vpop.f32.mrf.mxu0
    %v2505 = vadd.f32 0.0, %v2504
    %v2506 = vpop.f32.mrf.mxu0
    %v2507 = vadd.f32 0.0, %v2506
    %2508 = vdwg.mxu0
    %2509 = vmatprep.subr.mxu0 %v333
    %2510 = vmatpush1.msra.mxu0 %v332
    %2511 = vmatprep.subr.mxu0 %v325
    %2512 = vmatpush1.msra.mxu0 %v324
    %2513 = vmatprep.subr.mxu0 %v317
    %2514 = vmatpush1.msra.mxu0 %v316
    %2515 = vmatprep.subr.mxu0 %v309
    %2516 = vmatpush1.msra.mxu0 %v308
    %2517 = vmatprep.subr.mxu0 %v301
    %2518 = vmatpush1.msra.mxu0 %v300
    %2519 = vmatprep.subr.mxu0 %v293
    %2520 = vmatpush1.msra.mxu0 %v292
    %2521 = vmatprep.subr.mxu0 %v285
    %2522 = vmatpush1.msra.mxu0 %v284
    %2523 = vmatprep.subr.mxu0 %v277
    %2524 = vmatpush1.msra.mxu0 %v276
    %2525 = vmatprep.subr.mxu0 %v269
    %2526 = vmatpush1.msra.mxu0 %v268
    %2527 = vmatprep.subr.mxu0 %v261
    %2528 = vmatpush1.msra.mxu0 %v260
    %2529 = vmatprep.subr.mxu0 %v253
    %2530 = vmatpush1.msra.mxu0 %v252
    %2531 = vmatprep.subr.mxu0 %v245
    %2532 = vmatpush1.msra.mxu0 %v244
    %2533 = vmatprep.subr.mxu0 %v237
    %2534 = vmatpush1.msra.mxu0 %v236
    %2535 = vmatprep.subr.mxu0 %v229
    %2536 = vmatpush1.msra.mxu0 %v228
    %2537 = vmatprep.subr.mxu0 %v221
    %2538 = vmatpush1.msra.mxu0 %v220
    %2539 = vmatprep.subr.mxu0 %v213
    %2540 = vmatpush1.msra.mxu0 %v212
    %2541 = vmatprep.subr.mxu0 %v461
    %2542 = vmatpush2.msra.mxu0 %v460
    %2543 = vmatprep.subr.mxu0 %v453
    %2544 = vmatpush2.msra.mxu0 %v452
    %2545 = vmatprep.subr.mxu0 %v445
    %2546 = vmatpush2.msra.mxu0 %v444
    %2547 = vmatprep.subr.mxu0 %v437
    %2548 = vmatpush2.msra.mxu0 %v436
    %2549 = vmatprep.subr.mxu0 %v429
    %2550 = vmatpush2.msra.mxu0 %v428
    %2551 = vmatprep.subr.mxu0 %v421
    %2552 = vmatpush2.msra.mxu0 %v420
    %2553 = vmatprep.subr.mxu0 %v413
    %2554 = vmatpush2.msra.mxu0 %v412
    %2555 = vmatprep.subr.mxu0 %v405
    %2556 = vmatpush2.msra.mxu0 %v404
    %2557 = vmatprep.subr.mxu0 %v397
    %2558 = vmatpush2.msra.mxu0 %v396
    %2559 = vmatprep.subr.mxu0 %v389
    %2560 = vmatpush2.msra.mxu0 %v388
    %2561 = vmatprep.subr.mxu0 %v381
    %2562 = vmatpush2.msra.mxu0 %v380
    %2563 = vmatprep.subr.mxu0 %v373
    %2564 = vmatpush2.msra.mxu0 %v372
    %2565 = vmatprep.subr.mxu0 %v365
    %2566 = vmatpush2.msra.mxu0 %v364
    %2567 = vmatprep.subr.mxu0 %v357
    %2568 = vmatpush2.msra.mxu0 %v356
    %2569 = vmatprep.subr.mxu0 %v349
    %2570 = vmatpush2.msra.mxu0 %v348
    %2571 = vmatprep.subr.mxu0 %v341
    %2572 = vmatpush2.msra.mxu0 %v340
    %2573 = vmatprep.mubr.f32.mxu0 %v2435
    %2574 = vmatmul.mubr.f32.gmra.mxu0 %v2434
    %v2575 = vpop.f32.mrf.mxu0
    %v2576 = vadd.f32 0.0, %v2575
    %v2577 = vpop.f32.mrf.mxu0
    %v2578 = vadd.f32 0.0, %v2577
    %2579 = vdwg.mxu0
    %2580 = vmatprep.subr.mxu0 %v335
    %2581 = vmatpush1.msra.mxu0 %v334
    %2582 = vmatprep.subr.mxu0 %v327
    %2583 = vmatpush1.msra.mxu0 %v326
    %2584 = vmatprep.subr.mxu0 %v319
    %2585 = vmatpush1.msra.mxu0 %v318
    %2586 = vmatprep.subr.mxu0 %v311
    %2587 = vmatpush1.msra.mxu0 %v310
    %2588 = vmatprep.subr.mxu0 %v303
    %2589 = vmatpush1.msra.mxu0 %v302
    %2590 = vmatprep.subr.mxu0 %v295
    %2591 = vmatpush1.msra.mxu0 %v294
    %2592 = vmatprep.subr.mxu0 %v287
    %2593 = vmatpush1.msra.mxu0 %v286
    %2594 = vmatprep.subr.mxu0 %v279
    %2595 = vmatpush1.msra.mxu0 %v278
    %2596 = vmatprep.subr.mxu0 %v271
    %2597 = vmatpush1.msra.mxu0 %v270
    %2598 = vmatprep.subr.mxu0 %v263
    %2599 = vmatpush1.msra.mxu0 %v262
    %2600 = vmatprep.subr.mxu0 %v255
    %2601 = vmatpush1.msra.mxu0 %v254
    %2602 = vmatprep.subr.mxu0 %v247
    %2603 = vmatpush1.msra.mxu0 %v246
    %2604 = vmatprep.subr.mxu0 %v239
    %2605 = vmatpush1.msra.mxu0 %v238
    %2606 = vmatprep.subr.mxu0 %v231
    %2607 = vmatpush1.msra.mxu0 %v230
    %2608 = vmatprep.subr.mxu0 %v223
    %2609 = vmatpush1.msra.mxu0 %v222
    %2610 = vmatprep.subr.mxu0 %v215
    %2611 = vmatpush1.msra.mxu0 %v214
    %2612 = vmatprep.subr.mxu0 %v463
    %2613 = vmatpush2.msra.mxu0 %v462
    %2614 = vmatprep.subr.mxu0 %v455
    %2615 = vmatpush2.msra.mxu0 %v454
    %2616 = vmatprep.subr.mxu0 %v447
    %2617 = vmatpush2.msra.mxu0 %v446
    %2618 = vmatprep.subr.mxu0 %v439
    %2619 = vmatpush2.msra.mxu0 %v438
    %2620 = vmatprep.subr.mxu0 %v431
    %2621 = vmatpush2.msra.mxu0 %v430
    %2622 = vmatprep.subr.mxu0 %v423
    %2623 = vmatpush2.msra.mxu0 %v422
    %2624 = vmatprep.subr.mxu0 %v415
    %2625 = vmatpush2.msra.mxu0 %v414
    %2626 = vmatprep.subr.mxu0 %v407
    %2627 = vmatpush2.msra.mxu0 %v406
    %2628 = vmatprep.subr.mxu0 %v399
    %2629 = vmatpush2.msra.mxu0 %v398
    %2630 = vmatprep.subr.mxu0 %v391
    %2631 = vmatpush2.msra.mxu0 %v390
    %2632 = vmatprep.subr.mxu0 %v383
    %2633 = vmatpush2.msra.mxu0 %v382
    %2634 = vmatprep.subr.mxu0 %v375
    %2635 = vmatpush2.msra.mxu0 %v374
    %2636 = vmatprep.subr.mxu0 %v367
    %2637 = vmatpush2.msra.mxu0 %v366
    %2638 = vmatprep.subr.mxu0 %v359
    %2639 = vmatpush2.msra.mxu0 %v358
    %2640 = vmatprep.subr.mxu0 %v351
    %2641 = vmatpush2.msra.mxu0 %v350
    %2642 = vmatprep.subr.mxu0 %v343
    %2643 = vmatpush2.msra.mxu0 %v342
    %2644 = vmatprep.mubr.f32.mxu0 %v2435
    %2645 = vmatmul.mubr.f32.gmra.mxu0 %v2434
    %v2646 = vpop.f32.mrf.mxu0
    %v2647 = vadd.f32 0.0, %v2646
    %v2648 = vpop.f32.mrf.mxu0
    %v2649 = vadd.f32 0.0, %v2648
    %2650 = vdwg.mxu0
    %2651 = vmatprep.subr.mxu0 %v337
    %2652 = vmatpush1.msra.mxu0 %v336
    %2653 = vmatprep.subr.mxu0 %v329
    %2654 = vmatpush1.msra.mxu0 %v328
    %2655 = vmatprep.subr.mxu0 %v321
    %2656 = vmatpush1.msra.mxu0 %v320
    %2657 = vmatprep.subr.mxu0 %v313
    %2658 = vmatpush1.msra.mxu0 %v312
    %2659 = vmatprep.subr.mxu0 %v305
    %2660 = vmatpush1.msra.mxu0 %v304
    %2661 = vmatprep.subr.mxu0 %v297
    %2662 = vmatpush1.msra.mxu0 %v296
    %2663 = vmatprep.subr.mxu0 %v289
    %2664 = vmatpush1.msra.mxu0 %v288
    %2665 = vmatprep.subr.mxu0 %v281
    %2666 = vmatpush1.msra.mxu0 %v280
    %2667 = vmatprep.subr.mxu0 %v273
    %2668 = vmatpush1.msra.mxu0 %v272
    %2669 = vmatprep.subr.mxu0 %v265
    %2670 = vmatpush1.msra.mxu0 %v264
    %2671 = vmatprep.subr.mxu0 %v257
    %2672 = vmatpush1.msra.mxu0 %v256
    %2673 = vmatprep.subr.mxu0 %v249
    %2674 = vmatpush1.msra.mxu0 %v248
    %2675 = vmatprep.subr.mxu0 %v241
    %2676 = vmatpush1.msra.mxu0 %v240
    %2677 = vmatprep.subr.mxu0 %v233
    %2678 = vmatpush1.msra.mxu0 %v232
    %2679 = vmatprep.subr.mxu0 %v225
    %2680 = vmatpush1.msra.mxu0 %v224
    %2681 = vmatprep.subr.mxu0 %v217
    %2682 = vmatpush1.msra.mxu0 %v216
    %2683 = vmatprep.subr.mxu0 %v465
    %2684 = vmatpush2.msra.mxu0 %v464
    %2685 = vmatprep.subr.mxu0 %v457
    %2686 = vmatpush2.msra.mxu0 %v456
    %2687 = vmatprep.subr.mxu0 %v449
    %2688 = vmatpush2.msra.mxu0 %v448
    %2689 = vmatprep.subr.mxu0 %v441
    %2690 = vmatpush2.msra.mxu0 %v440
    %2691 = vmatprep.subr.mxu0 %v433
    %2692 = vmatpush2.msra.mxu0 %v432
    %2693 = vmatprep.subr.mxu0 %v425
    %2694 = vmatpush2.msra.mxu0 %v424
    %2695 = vmatprep.subr.mxu0 %v417
    %2696 = vmatpush2.msra.mxu0 %v416
    %2697 = vmatprep.subr.mxu0 %v409
    %2698 = vmatpush2.msra.mxu0 %v408
    %2699 = vmatprep.subr.mxu0 %v401
    %2700 = vmatpush2.msra.mxu0 %v400
    %2701 = vmatprep.subr.mxu0 %v393
    %2702 = vmatpush2.msra.mxu0 %v392
    %2703 = vmatprep.subr.mxu0 %v385
    %2704 = vmatpush2.msra.mxu0 %v384
    %2705 = vmatprep.subr.mxu0 %v377
    %2706 = vmatpush2.msra.mxu0 %v376
    %2707 = vmatprep.subr.mxu0 %v369
    %2708 = vmatpush2.msra.mxu0 %v368
    %2709 = vmatprep.subr.mxu0 %v361
    %2710 = vmatpush2.msra.mxu0 %v360
    %2711 = vmatprep.subr.mxu0 %v353
    %2712 = vmatpush2.msra.mxu0 %v352
    %2713 = vmatprep.subr.mxu0 %v345
    %2714 = vmatpush2.msra.mxu0 %v344
    %2715 = vmatprep.mubr.f32.mxu0 %v2435
    %2716 = vmatmul.mubr.f32.gmra.mxu0 %v2434
    %v2717 = vpop.f32.mrf.mxu0
    %v2718 = vadd.f32 0.0, %v2717
    %v2719 = vpop.f32.mrf.mxu0
    %v2720 = vadd.f32 0.0, %v2719
    %2721 = vdwg.mxu0
    %v2730 = vrot.slane %v2505, 3
    %v2731 = vrot.slane %v2507, 3
    %v2732 = vrot.slane %v2576, 3
    %v2733 = vrot.slane %v2578, 3
    %v2734 = vrot.slane %v2647, 3
    %v2735 = vrot.slane %v2649, 3
    %v2736 = vrot.slane %v2718, 3
    %v2737 = vrot.slane %v2720, 3
    %v2746 = vadd.f32 %v202, %v2730
    %v2747 = vadd.f32 %v203, %v2731
    %v2748 = vadd.f32 %v204, %v2732
    %v2749 = vadd.f32 %v205, %v2733
    %v2750 = vadd.f32 %v206, %v2734
    %v2751 = vadd.f32 %v207, %v2735
    %v2752 = vadd.f32 %v208, %v2736
    %v2753 = vadd.f32 %v209, %v2737
    %v2754 = vxor.u32 %v2746, 2147483648
    %v2755 = vxor.u32 %v2747, 2147483648
    %v2756 = vmul.f32 %v2754, 1.442695
    %v2757 = vpow.pop %v2756
    %v2758 = vmul.f32 %v2755, 1.442695
    %v2759 = vpow.pop %v2758
    %v2760 = vadd.f32 %v2757, 1.0
    %v2761 = vadd.f32 %v2759, 1.0
    %v2762 = vrcp.pop %v2760
    %v2763 = vmul.f32 1.0, %v2762
    %v2764 = vrcp.pop %v2761
    %v2765 = vmul.f32 1.0, %v2764
    %v2766 = vxor.u32 %v2748, 2147483648
    %v2767 = vxor.u32 %v2749, 2147483648
    %v2768 = vmul.f32 %v2766, 1.442695
    %v2769 = vpow.pop %v2768
    %v2770 = vmul.f32 %v2767, 1.442695
    %v2771 = vpow.pop %v2770
    %v2772 = vadd.f32 %v2769, 1.0
    %v2773 = vadd.f32 %v2771, 1.0
    %v2774 = vrcp.pop %v2772
    %v2775 = vmul.f32 1.0, %v2774
    %v2776 = vrcp.pop %v2773
    %v2777 = vmul.f32 1.0, %v2776
    %v2778 = vtanh.pop %v2750
    %v2779 = vtanh.pop %v2751
    %v2780 = vxor.u32 %v2752, 2147483648
    %v2781 = vxor.u32 %v2753, 2147483648
    %v2782 = vmul.f32 %v2780, 1.442695
    %v2783 = vpow.pop %v2782
    %v2784 = vmul.f32 %v2781, 1.442695
    %v2785 = vpow.pop %v2784
    %v2786 = vadd.f32 %v2783, 1.0
    %v2787 = vadd.f32 %v2785, 1.0
    %v2788 = vrcp.pop %v2786
    %v2789 = vmul.f32 1.0, %v2788
    %v2790 = vrcp.pop %v2787
    %v2791 = vmul.f32 1.0, %v2790
    %v2794 = vrot.slane %v2407, 7
    %v2795 = vrot.slane %v2408, 7
    %v2798 = vmul.f32 %v2775, %v2794
    %v2799 = vmul.f32 %v2777, %v2795
    %v2800 = vmul.f32 %v2763, %v2778
    %v2801 = vmul.f32 %v2765, %v2779
    %v2802 = vadd.f32 %v2798, %v2800
    %v2803 = vadd.f32 %v2799, %v2801
    %v2804 = vtanh.pop %v2802
    %v2805 = vtanh.pop %v2803
    %v2806 = vmul.f32 %v2789, %v2804
    %v2807 = vmul.f32 %v2791, %v2805
    %v2810 = vcombine.high %v2806, %v2807
    %v2812 = vunpack.c.l.s4 1966171168
    %v2813 = vunpack.c.0.s8 %v2812
    %v2814 = vlaneseq
    %v2815 = vshrl.u32 %v2814, 7
    %v2816 = vsub.s32 %v2813, %v2815
    %v2817 = vrot.slane %v2810, %v2816
    %v2818 = vcombine.high %v2817, %v2817
    %v2820 = vunpack.c.l.s4 1966171168
    %v2821 = vunpack.c.0.s8 %v2820
    %v2822 = vlaneseq
    %v2823 = vshrl.u32 %v2822, 7
    %v2824 = vsub.s32 %v2821, %v2823
    %v2825 = vrot.slane %v2818, %v2824
    %s2827 = scalar_lea.vmem [#allocation2], 5
    %2828 = vst.msk [vmem:[%s2827] ss:$8 sm:$0x3] %vm851, %v2825
    %2829 = vst.msk [vmem:[%s2827] ss:$8 sm:$0x0] %vm851, %v2825
    %v2830 = vrot.slane %v2806, 5
    %v2831 = vrot.slane %v2807, 5
    %2834 = vmatprep.subr.mxu0 %v331
    %2835 = vmatpush1.msra.mxu0 %v330
    %2836 = vmatprep.subr.mxu0 %v323
    %2837 = vmatpush1.msra.mxu0 %v322
    %2838 = vmatprep.subr.mxu0 %v315
    %2839 = vmatpush1.msra.mxu0 %v314
    %2840 = vmatprep.subr.mxu0 %v307
    %2841 = vmatpush1.msra.mxu0 %v306
    %2842 = vmatprep.subr.mxu0 %v299
    %2843 = vmatpush1.msra.mxu0 %v298
    %2844 = vmatprep.subr.mxu0 %v291
    %2845 = vmatpush1.msra.mxu0 %v290
    %2846 = vmatprep.subr.mxu0 %v283
    %2847 = vmatpush1.msra.mxu0 %v282
    %2848 = vmatprep.subr.mxu0 %v275
    %2849 = vmatpush1.msra.mxu0 %v274
    %2850 = vmatprep.subr.mxu0 %v267
    %2851 = vmatpush1.msra.mxu0 %v266
    %2852 = vmatprep.subr.mxu0 %v259
    %2853 = vmatpush1.msra.mxu0 %v258
    %2854 = vmatprep.subr.mxu0 %v251
    %2855 = vmatpush1.msra.mxu0 %v250
    %2856 = vmatprep.subr.mxu0 %v243
    %2857 = vmatpush1.msra.mxu0 %v242
    %2858 = vmatprep.subr.mxu0 %v235
    %2859 = vmatpush1.msra.mxu0 %v234
    %2860 = vmatprep.subr.mxu0 %v227
    %2861 = vmatpush1.msra.mxu0 %v226
    %2862 = vmatprep.subr.mxu0 %v219
    %2863 = vmatpush1.msra.mxu0 %v218
    %2864 = vmatprep.subr.mxu0 %v211
    %2865 = vmatpush1.msra.mxu0 %v210
    %2866 = vmatprep.subr.mxu0 %v459
    %2867 = vmatpush2.msra.mxu0 %v458
    %2868 = vmatprep.subr.mxu0 %v451
    %2869 = vmatpush2.msra.mxu0 %v450
    %2870 = vmatprep.subr.mxu0 %v443
    %2871 = vmatpush2.msra.mxu0 %v442
    %2872 = vmatprep.subr.mxu0 %v435
    %2873 = vmatpush2.msra.mxu0 %v434
    %2874 = vmatprep.subr.mxu0 %v427
    %2875 = vmatpush2.msra.mxu0 %v426
    %2876 = vmatprep.subr.mxu0 %v419
    %2877 = vmatpush2.msra.mxu0 %v418
    %2878 = vmatprep.subr.mxu0 %v411
    %2879 = vmatpush2.msra.mxu0 %v410
    %2880 = vmatprep.subr.mxu0 %v403
    %2881 = vmatpush2.msra.mxu0 %v402
    %2882 = vmatprep.subr.mxu0 %v395
    %2883 = vmatpush2.msra.mxu0 %v394
    %2884 = vmatprep.subr.mxu0 %v387
    %2885 = vmatpush2.msra.mxu0 %v386
    %2886 = vmatprep.subr.mxu0 %v379
    %2887 = vmatpush2.msra.mxu0 %v378
    %2888 = vmatprep.subr.mxu0 %v371
    %2889 = vmatpush2.msra.mxu0 %v370
    %2890 = vmatprep.subr.mxu0 %v363
    %2891 = vmatpush2.msra.mxu0 %v362
    %2892 = vmatprep.subr.mxu0 %v355
    %2893 = vmatpush2.msra.mxu0 %v354
    %2894 = vmatprep.subr.mxu0 %v347
    %2895 = vmatpush2.msra.mxu0 %v346
    %2896 = vmatprep.subr.mxu0 %v339
    %2897 = vmatpush2.msra.mxu0 %v338
    %2898 = vmatprep.mubr.f32.mxu0 %v2831
    %2899 = vmatmul.mubr.f32.gmra.mxu0 %v2830
    %v2900 = vpop.f32.mrf.mxu0
    %v2901 = vadd.f32 0.0, %v2900
    %v2902 = vpop.f32.mrf.mxu0
    %v2903 = vadd.f32 0.0, %v2902
    %2904 = vdwg.mxu0
    %2905 = vmatprep.subr.mxu0 %v333
    %2906 = vmatpush1.msra.mxu0 %v332
    %2907 = vmatprep.subr.mxu0 %v325
    %2908 = vmatpush1.msra.mxu0 %v324
    %2909 = vmatprep.subr.mxu0 %v317
    %2910 = vmatpush1.msra.mxu0 %v316
    %2911 = vmatprep.subr.mxu0 %v309
    %2912 = vmatpush1.msra.mxu0 %v308
    %2913 = vmatprep.subr.mxu0 %v301
    %2914 = vmatpush1.msra.mxu0 %v300
    %2915 = vmatprep.subr.mxu0 %v293
    %2916 = vmatpush1.msra.mxu0 %v292
    %2917 = vmatprep.subr.mxu0 %v285
    %2918 = vmatpush1.msra.mxu0 %v284
    %2919 = vmatprep.subr.mxu0 %v277
    %2920 = vmatpush1.msra.mxu0 %v276
    %2921 = vmatprep.subr.mxu0 %v269
    %2922 = vmatpush1.msra.mxu0 %v268
    %2923 = vmatprep.subr.mxu0 %v261
    %2924 = vmatpush1.msra.mxu0 %v260
    %2925 = vmatprep.subr.mxu0 %v253
    %2926 = vmatpush1.msra.mxu0 %v252
    %2927 = vmatprep.subr.mxu0 %v245
    %2928 = vmatpush1.msra.mxu0 %v244
    %2929 = vmatprep.subr.mxu0 %v237
    %2930 = vmatpush1.msra.mxu0 %v236
    %2931 = vmatprep.subr.mxu0 %v229
    %2932 = vmatpush1.msra.mxu0 %v228
    %2933 = vmatprep.subr.mxu0 %v221
    %2934 = vmatpush1.msra.mxu0 %v220
    %2935 = vmatprep.subr.mxu0 %v213
    %2936 = vmatpush1.msra.mxu0 %v212
    %2937 = vmatprep.subr.mxu0 %v461
    %2938 = vmatpush2.msra.mxu0 %v460
    %2939 = vmatprep.subr.mxu0 %v453
    %2940 = vmatpush2.msra.mxu0 %v452
    %2941 = vmatprep.subr.mxu0 %v445
    %2942 = vmatpush2.msra.mxu0 %v444
    %2943 = vmatprep.subr.mxu0 %v437
    %2944 = vmatpush2.msra.mxu0 %v436
    %2945 = vmatprep.subr.mxu0 %v429
    %2946 = vmatpush2.msra.mxu0 %v428
    %2947 = vmatprep.subr.mxu0 %v421
    %2948 = vmatpush2.msra.mxu0 %v420
    %2949 = vmatprep.subr.mxu0 %v413
    %2950 = vmatpush2.msra.mxu0 %v412
    %2951 = vmatprep.subr.mxu0 %v405
    %2952 = vmatpush2.msra.mxu0 %v404
    %2953 = vmatprep.subr.mxu0 %v397
    %2954 = vmatpush2.msra.mxu0 %v396
    %2955 = vmatprep.subr.mxu0 %v389
    %2956 = vmatpush2.msra.mxu0 %v388
    %2957 = vmatprep.subr.mxu0 %v381
    %2958 = vmatpush2.msra.mxu0 %v380
    %2959 = vmatprep.subr.mxu0 %v373
    %2960 = vmatpush2.msra.mxu0 %v372
    %2961 = vmatprep.subr.mxu0 %v365
    %2962 = vmatpush2.msra.mxu0 %v364
    %2963 = vmatprep.subr.mxu0 %v357
    %2964 = vmatpush2.msra.mxu0 %v356
    %2965 = vmatprep.subr.mxu0 %v349
    %2966 = vmatpush2.msra.mxu0 %v348
    %2967 = vmatprep.subr.mxu0 %v341
    %2968 = vmatpush2.msra.mxu0 %v340
    %2969 = vmatprep.mubr.f32.mxu0 %v2831
    %2970 = vmatmul.mubr.f32.gmra.mxu0 %v2830
    %v2971 = vpop.f32.mrf.mxu0
    %v2972 = vadd.f32 0.0, %v2971
    %v2973 = vpop.f32.mrf.mxu0
    %v2974 = vadd.f32 0.0, %v2973
    %2975 = vdwg.mxu0
    %2976 = vmatprep.subr.mxu0 %v335
    %2977 = vmatpush1.msra.mxu0 %v334
    %2978 = vmatprep.subr.mxu0 %v327
    %2979 = vmatpush1.msra.mxu0 %v326
    %2980 = vmatprep.subr.mxu0 %v319
    %2981 = vmatpush1.msra.mxu0 %v318
    %2982 = vmatprep.subr.mxu0 %v311
    %2983 = vmatpush1.msra.mxu0 %v310
    %2984 = vmatprep.subr.mxu0 %v303
    %2985 = vmatpush1.msra.mxu0 %v302
    %2986 = vmatprep.subr.mxu0 %v295
    %2987 = vmatpush1.msra.mxu0 %v294
    %2988 = vmatprep.subr.mxu0 %v287
    %2989 = vmatpush1.msra.mxu0 %v286
    %2990 = vmatprep.subr.mxu0 %v279
    %2991 = vmatpush1.msra.mxu0 %v278
    %2992 = vmatprep.subr.mxu0 %v271
    %2993 = vmatpush1.msra.mxu0 %v270
    %2994 = vmatprep.subr.mxu0 %v263
    %2995 = vmatpush1.msra.mxu0 %v262
    %2996 = vmatprep.subr.mxu0 %v255
    %2997 = vmatpush1.msra.mxu0 %v254
    %2998 = vmatprep.subr.mxu0 %v247
    %2999 = vmatpush1.msra.mxu0 %v246
    %3000 = vmatprep.subr.mxu0 %v239
    %3001 = vmatpush1.msra.mxu0 %v238
    %3002 = vmatprep.subr.mxu0 %v231
    %3003 = vmatpush1.msra.mxu0 %v230
    %3004 = vmatprep.subr.mxu0 %v223
    %3005 = vmatpush1.msra.mxu0 %v222
    %3006 = vmatprep.subr.mxu0 %v215
    %3007 = vmatpush1.msra.mxu0 %v214
    %3008 = vmatprep.subr.mxu0 %v463
    %3009 = vmatpush2.msra.mxu0 %v462
    %3010 = vmatprep.subr.mxu0 %v455
    %3011 = vmatpush2.msra.mxu0 %v454
    %3012 = vmatprep.subr.mxu0 %v447
    %3013 = vmatpush2.msra.mxu0 %v446
    %3014 = vmatprep.subr.mxu0 %v439
    %3015 = vmatpush2.msra.mxu0 %v438
    %3016 = vmatprep.subr.mxu0 %v431
    %3017 = vmatpush2.msra.mxu0 %v430
    %3018 = vmatprep.subr.mxu0 %v423
    %3019 = vmatpush2.msra.mxu0 %v422
    %3020 = vmatprep.subr.mxu0 %v415
    %3021 = vmatpush2.msra.mxu0 %v414
    %3022 = vmatprep.subr.mxu0 %v407
    %3023 = vmatpush2.msra.mxu0 %v406
    %3024 = vmatprep.subr.mxu0 %v399
    %3025 = vmatpush2.msra.mxu0 %v398
    %3026 = vmatprep.subr.mxu0 %v391
    %3027 = vmatpush2.msra.mxu0 %v390
    %3028 = vmatprep.subr.mxu0 %v383
    %3029 = vmatpush2.msra.mxu0 %v382
    %3030 = vmatprep.subr.mxu0 %v375
    %3031 = vmatpush2.msra.mxu0 %v374
    %3032 = vmatprep.subr.mxu0 %v367
    %3033 = vmatpush2.msra.mxu0 %v366
    %3034 = vmatprep.subr.mxu0 %v359
    %3035 = vmatpush2.msra.mxu0 %v358
    %3036 = vmatprep.subr.mxu0 %v351
    %3037 = vmatpush2.msra.mxu0 %v350
    %3038 = vmatprep.subr.mxu0 %v343
    %3039 = vmatpush2.msra.mxu0 %v342
    %3040 = vmatprep.mubr.f32.mxu0 %v2831
    %3041 = vmatmul.mubr.f32.gmra.mxu0 %v2830
    %v3042 = vpop.f32.mrf.mxu0
    %v3043 = vadd.f32 0.0, %v3042
    %v3044 = vpop.f32.mrf.mxu0
    %v3045 = vadd.f32 0.0, %v3044
    %3046 = vdwg.mxu0
    %3047 = vmatprep.subr.mxu0 %v337
    %3048 = vmatpush1.msra.mxu0 %v336
    %3049 = vmatprep.subr.mxu0 %v329
    %3050 = vmatpush1.msra.mxu0 %v328
    %3051 = vmatprep.subr.mxu0 %v321
    %3052 = vmatpush1.msra.mxu0 %v320
    %3053 = vmatprep.subr.mxu0 %v313
    %3054 = vmatpush1.msra.mxu0 %v312
    %3055 = vmatprep.subr.mxu0 %v305
    %3056 = vmatpush1.msra.mxu0 %v304
    %3057 = vmatprep.subr.mxu0 %v297
    %3058 = vmatpush1.msra.mxu0 %v296
    %3059 = vmatprep.subr.mxu0 %v289
    %3060 = vmatpush1.msra.mxu0 %v288
    %3061 = vmatprep.subr.mxu0 %v281
    %3062 = vmatpush1.msra.mxu0 %v280
    %3063 = vmatprep.subr.mxu0 %v273
    %3064 = vmatpush1.msra.mxu0 %v272
    %3065 = vmatprep.subr.mxu0 %v265
    %3066 = vmatpush1.msra.mxu0 %v264
    %3067 = vmatprep.subr.mxu0 %v257
    %3068 = vmatpush1.msra.mxu0 %v256
    %3069 = vmatprep.subr.mxu0 %v249
    %3070 = vmatpush1.msra.mxu0 %v248
    %3071 = vmatprep.subr.mxu0 %v241
    %3072 = vmatpush1.msra.mxu0 %v240
    %3073 = vmatprep.subr.mxu0 %v233
    %3074 = vmatpush1.msra.mxu0 %v232
    %3075 = vmatprep.subr.mxu0 %v225
    %3076 = vmatpush1.msra.mxu0 %v224
    %3077 = vmatprep.subr.mxu0 %v217
    %3078 = vmatpush1.msra.mxu0 %v216
    %3079 = vmatprep.subr.mxu0 %v465
    %3080 = vmatpush2.msra.mxu0 %v464
    %3081 = vmatprep.subr.mxu0 %v457
    %3082 = vmatpush2.msra.mxu0 %v456
    %3083 = vmatprep.subr.mxu0 %v449
    %3084 = vmatpush2.msra.mxu0 %v448
    %3085 = vmatprep.subr.mxu0 %v441
    %3086 = vmatpush2.msra.mxu0 %v440
    %3087 = vmatprep.subr.mxu0 %v433
    %3088 = vmatpush2.msra.mxu0 %v432
    %3089 = vmatprep.subr.mxu0 %v425
    %3090 = vmatpush2.msra.mxu0 %v424
    %3091 = vmatprep.subr.mxu0 %v417
    %3092 = vmatpush2.msra.mxu0 %v416
    %3093 = vmatprep.subr.mxu0 %v409
    %3094 = vmatpush2.msra.mxu0 %v408
    %3095 = vmatprep.subr.mxu0 %v401
    %3096 = vmatpush2.msra.mxu0 %v400
    %3097 = vmatprep.subr.mxu0 %v393
    %3098 = vmatpush2.msra.mxu0 %v392
    %3099 = vmatprep.subr.mxu0 %v385
    %3100 = vmatpush2.msra.mxu0 %v384
    %3101 = vmatprep.subr.mxu0 %v377
    %3102 = vmatpush2.msra.mxu0 %v376
    %3103 = vmatprep.subr.mxu0 %v369
    %3104 = vmatpush2.msra.mxu0 %v368
    %3105 = vmatprep.subr.mxu0 %v361
    %3106 = vmatpush2.msra.mxu0 %v360
    %3107 = vmatprep.subr.mxu0 %v353
    %3108 = vmatpush2.msra.mxu0 %v352
    %3109 = vmatprep.subr.mxu0 %v345
    %3110 = vmatpush2.msra.mxu0 %v344
    %3111 = vmatprep.mubr.f32.mxu0 %v2831
    %3112 = vmatmul.mubr.f32.gmra.mxu0 %v2830
    %v3113 = vpop.f32.mrf.mxu0
    %v3114 = vadd.f32 0.0, %v3113
    %v3115 = vpop.f32.mrf.mxu0
    %v3116 = vadd.f32 0.0, %v3115
    %3117 = vdwg.mxu0
    %v3126 = vrot.slane %v2901, 2
    %v3127 = vrot.slane %v2903, 2
    %v3128 = vrot.slane %v2972, 2
    %v3129 = vrot.slane %v2974, 2
    %v3130 = vrot.slane %v3043, 2
    %v3131 = vrot.slane %v3045, 2
    %v3132 = vrot.slane %v3114, 2
    %v3133 = vrot.slane %v3116, 2
    %v3142 = vadd.f32 %v202, %v3126
    %v3143 = vadd.f32 %v203, %v3127
    %v3144 = vadd.f32 %v204, %v3128
    %v3145 = vadd.f32 %v205, %v3129
    %v3146 = vadd.f32 %v206, %v3130
    %v3147 = vadd.f32 %v207, %v3131
    %v3148 = vadd.f32 %v208, %v3132
    %v3149 = vadd.f32 %v209, %v3133
    %v3150 = vxor.u32 %v3142, 2147483648
    %v3151 = vxor.u32 %v3143, 2147483648
    %v3152 = vmul.f32 %v3150, 1.442695
    %v3153 = vpow.pop %v3152
    %v3154 = vmul.f32 %v3151, 1.442695
    %v3155 = vpow.pop %v3154
    %v3156 = vadd.f32 %v3153, 1.0
    %v3157 = vadd.f32 %v3155, 1.0
    %v3158 = vrcp.pop %v3156
    %v3159 = vmul.f32 1.0, %v3158
    %v3160 = vrcp.pop %v3157
    %v3161 = vmul.f32 1.0, %v3160
    %v3162 = vxor.u32 %v3144, 2147483648
    %v3163 = vxor.u32 %v3145, 2147483648
    %v3164 = vmul.f32 %v3162, 1.442695
    %v3165 = vpow.pop %v3164
    %v3166 = vmul.f32 %v3163, 1.442695
    %v3167 = vpow.pop %v3166
    %v3168 = vadd.f32 %v3165, 1.0
    %v3169 = vadd.f32 %v3167, 1.0
    %v3170 = vrcp.pop %v3168
    %v3171 = vmul.f32 1.0, %v3170
    %v3172 = vrcp.pop %v3169
    %v3173 = vmul.f32 1.0, %v3172
    %v3174 = vtanh.pop %v3146
    %v3175 = vtanh.pop %v3147
    %v3176 = vxor.u32 %v3148, 2147483648
    %v3177 = vxor.u32 %v3149, 2147483648
    %v3178 = vmul.f32 %v3176, 1.442695
    %v3179 = vpow.pop %v3178
    %v3180 = vmul.f32 %v3177, 1.442695
    %v3181 = vpow.pop %v3180
    %v3182 = vadd.f32 %v3179, 1.0
    %v3183 = vadd.f32 %v3181, 1.0
    %v3184 = vrcp.pop %v3182
    %v3185 = vmul.f32 1.0, %v3184
    %v3186 = vrcp.pop %v3183
    %v3187 = vmul.f32 1.0, %v3186
    %v3190 = vrot.slane %v2802, 7
    %v3191 = vrot.slane %v2803, 7
    %v3194 = vmul.f32 %v3171, %v3190
    %v3195 = vmul.f32 %v3173, %v3191
    %v3196 = vmul.f32 %v3159, %v3174
    %v3197 = vmul.f32 %v3161, %v3175
    %v3198 = vadd.f32 %v3194, %v3196
    %v3199 = vadd.f32 %v3195, %v3197
    %v3200 = vtanh.pop %v3198
    %v3201 = vtanh.pop %v3199
    %v3202 = vmul.f32 %v3185, %v3200
    %v3203 = vmul.f32 %v3187, %v3201
    %v3206 = vcombine.high %v3202, %v3203
    %v3208 = vunpack.c.l.s4 1966171168
    %v3209 = vunpack.c.0.s8 %v3208
    %v3210 = vlaneseq
    %v3211 = vshrl.u32 %v3210, 7
    %v3212 = vsub.s32 %v3209, %v3211
    %v3213 = vrot.slane %v3206, %v3212
    %v3215 = vunpack.c.l.s4 1966171168
    %v3216 = vunpack.c.0.s8 %v3215
    %v3217 = vlaneseq
    %v3218 = vshrl.u32 %v3217, 7
    %v3219 = vsub.s32 %v3216, %v3218
    %v3220 = vrot.slane %v3213, %v3219
    %v3221 = vcombine.high %v3220, %v3220
    %s3223 = scalar_lea.vmem [#allocation2], 6
    %3224 = vst.msk [vmem:[%s3223] ss:$8 sm:$0x3] %vm851, %v3221
    %3225 = vst.msk [vmem:[%s3223] ss:$8 sm:$0x0] %vm851, %v3221
    %v3226 = vrot.slane %v3202, 6
    %v3227 = vrot.slane %v3203, 6
    %3230 = vmatprep.subr.mxu0 %v331
    %3231 = vmatpush1.msra.mxu0 %v330
    %3232 = vmatprep.subr.mxu0 %v323
    %3233 = vmatpush1.msra.mxu0 %v322
    %3234 = vmatprep.subr.mxu0 %v315
    %3235 = vmatpush1.msra.mxu0 %v314
    %3236 = vmatprep.subr.mxu0 %v307
    %3237 = vmatpush1.msra.mxu0 %v306
    %3238 = vmatprep.subr.mxu0 %v299
    %3239 = vmatpush1.msra.mxu0 %v298
    %3240 = vmatprep.subr.mxu0 %v291
    %3241 = vmatpush1.msra.mxu0 %v290
    %3242 = vmatprep.subr.mxu0 %v283
    %3243 = vmatpush1.msra.mxu0 %v282
    %3244 = vmatprep.subr.mxu0 %v275
    %3245 = vmatpush1.msra.mxu0 %v274
    %3246 = vmatprep.subr.mxu0 %v267
    %3247 = vmatpush1.msra.mxu0 %v266
    %3248 = vmatprep.subr.mxu0 %v259
    %3249 = vmatpush1.msra.mxu0 %v258
    %3250 = vmatprep.subr.mxu0 %v251
    %3251 = vmatpush1.msra.mxu0 %v250
    %3252 = vmatprep.subr.mxu0 %v243
    %3253 = vmatpush1.msra.mxu0 %v242
    %3254 = vmatprep.subr.mxu0 %v235
    %3255 = vmatpush1.msra.mxu0 %v234
    %3256 = vmatprep.subr.mxu0 %v227
    %3257 = vmatpush1.msra.mxu0 %v226
    %3258 = vmatprep.subr.mxu0 %v219
    %3259 = vmatpush1.msra.mxu0 %v218
    %3260 = vmatprep.subr.mxu0 %v211
    %3261 = vmatpush1.msra.mxu0 %v210
    %3262 = vmatprep.subr.mxu0 %v459
    %3263 = vmatpush2.msra.mxu0 %v458
    %3264 = vmatprep.subr.mxu0 %v451
    %3265 = vmatpush2.msra.mxu0 %v450
    %3266 = vmatprep.subr.mxu0 %v443
    %3267 = vmatpush2.msra.mxu0 %v442
    %3268 = vmatprep.subr.mxu0 %v435
    %3269 = vmatpush2.msra.mxu0 %v434
    %3270 = vmatprep.subr.mxu0 %v427
    %3271 = vmatpush2.msra.mxu0 %v426
    %3272 = vmatprep.subr.mxu0 %v419
    %3273 = vmatpush2.msra.mxu0 %v418
    %3274 = vmatprep.subr.mxu0 %v411
    %3275 = vmatpush2.msra.mxu0 %v410
    %3276 = vmatprep.subr.mxu0 %v403
    %3277 = vmatpush2.msra.mxu0 %v402
    %3278 = vmatprep.subr.mxu0 %v395
    %3279 = vmatpush2.msra.mxu0 %v394
    %3280 = vmatprep.subr.mxu0 %v387
    %3281 = vmatpush2.msra.mxu0 %v386
    %3282 = vmatprep.subr.mxu0 %v379
    %3283 = vmatpush2.msra.mxu0 %v378
    %3284 = vmatprep.subr.mxu0 %v371
    %3285 = vmatpush2.msra.mxu0 %v370
    %3286 = vmatprep.subr.mxu0 %v363
    %3287 = vmatpush2.msra.mxu0 %v362
    %3288 = vmatprep.subr.mxu0 %v355
    %3289 = vmatpush2.msra.mxu0 %v354
    %3290 = vmatprep.subr.mxu0 %v347
    %3291 = vmatpush2.msra.mxu0 %v346
    %3292 = vmatprep.subr.mxu0 %v339
    %3293 = vmatpush2.msra.mxu0 %v338
    %3294 = vmatprep.mubr.f32.mxu0 %v3227
    %3295 = vmatmul.mubr.f32.gmra.mxu0 %v3226
    %v3296 = vpop.f32.mrf.mxu0
    %v3297 = vadd.f32 0.0, %v3296
    %v3298 = vpop.f32.mrf.mxu0
    %v3299 = vadd.f32 0.0, %v3298
    %3300 = vdwg.mxu0
    %3301 = vmatprep.subr.mxu0 %v333
    %3302 = vmatpush1.msra.mxu0 %v332
    %3303 = vmatprep.subr.mxu0 %v325
    %3304 = vmatpush1.msra.mxu0 %v324
    %3305 = vmatprep.subr.mxu0 %v317
    %3306 = vmatpush1.msra.mxu0 %v316
    %3307 = vmatprep.subr.mxu0 %v309
    %3308 = vmatpush1.msra.mxu0 %v308
    %3309 = vmatprep.subr.mxu0 %v301
    %3310 = vmatpush1.msra.mxu0 %v300
    %3311 = vmatprep.subr.mxu0 %v293
    %3312 = vmatpush1.msra.mxu0 %v292
    %3313 = vmatprep.subr.mxu0 %v285
    %3314 = vmatpush1.msra.mxu0 %v284
    %3315 = vmatprep.subr.mxu0 %v277
    %3316 = vmatpush1.msra.mxu0 %v276
    %3317 = vmatprep.subr.mxu0 %v269
    %3318 = vmatpush1.msra.mxu0 %v268
    %3319 = vmatprep.subr.mxu0 %v261
    %3320 = vmatpush1.msra.mxu0 %v260
    %3321 = vmatprep.subr.mxu0 %v253
    %3322 = vmatpush1.msra.mxu0 %v252
    %3323 = vmatprep.subr.mxu0 %v245
    %3324 = vmatpush1.msra.mxu0 %v244
    %3325 = vmatprep.subr.mxu0 %v237
    %3326 = vmatpush1.msra.mxu0 %v236
    %3327 = vmatprep.subr.mxu0 %v229
    %3328 = vmatpush1.msra.mxu0 %v228
    %3329 = vmatprep.subr.mxu0 %v221
    %3330 = vmatpush1.msra.mxu0 %v220
    %3331 = vmatprep.subr.mxu0 %v213
    %3332 = vmatpush1.msra.mxu0 %v212
    %3333 = vmatprep.subr.mxu0 %v461
    %3334 = vmatpush2.msra.mxu0 %v460
    %3335 = vmatprep.subr.mxu0 %v453
    %3336 = vmatpush2.msra.mxu0 %v452
    %3337 = vmatprep.subr.mxu0 %v445
    %3338 = vmatpush2.msra.mxu0 %v444
    %3339 = vmatprep.subr.mxu0 %v437
    %3340 = vmatpush2.msra.mxu0 %v436
    %3341 = vmatprep.subr.mxu0 %v429
    %3342 = vmatpush2.msra.mxu0 %v428
    %3343 = vmatprep.subr.mxu0 %v421
    %3344 = vmatpush2.msra.mxu0 %v420
    %3345 = vmatprep.subr.mxu0 %v413
    %3346 = vmatpush2.msra.mxu0 %v412
    %3347 = vmatprep.subr.mxu0 %v405
    %3348 = vmatpush2.msra.mxu0 %v404
    %3349 = vmatprep.subr.mxu0 %v397
    %3350 = vmatpush2.msra.mxu0 %v396
    %3351 = vmatprep.subr.mxu0 %v389
    %3352 = vmatpush2.msra.mxu0 %v388
    %3353 = vmatprep.subr.mxu0 %v381
    %3354 = vmatpush2.msra.mxu0 %v380
    %3355 = vmatprep.subr.mxu0 %v373
    %3356 = vmatpush2.msra.mxu0 %v372
    %3357 = vmatprep.subr.mxu0 %v365
    %3358 = vmatpush2.msra.mxu0 %v364
    %3359 = vmatprep.subr.mxu0 %v357
    %3360 = vmatpush2.msra.mxu0 %v356
    %3361 = vmatprep.subr.mxu0 %v349
    %3362 = vmatpush2.msra.mxu0 %v348
    %3363 = vmatprep.subr.mxu0 %v341
    %3364 = vmatpush2.msra.mxu0 %v340
    %3365 = vmatprep.mubr.f32.mxu0 %v3227
    %3366 = vmatmul.mubr.f32.gmra.mxu0 %v3226
    %v3367 = vpop.f32.mrf.mxu0
    %v3368 = vadd.f32 0.0, %v3367
    %v3369 = vpop.f32.mrf.mxu0
    %v3370 = vadd.f32 0.0, %v3369
    %3371 = vdwg.mxu0
    %3372 = vmatprep.subr.mxu0 %v335
    %3373 = vmatpush1.msra.mxu0 %v334
    %3374 = vmatprep.subr.mxu0 %v327
    %3375 = vmatpush1.msra.mxu0 %v326
    %3376 = vmatprep.subr.mxu0 %v319
    %3377 = vmatpush1.msra.mxu0 %v318
    %3378 = vmatprep.subr.mxu0 %v311
    %3379 = vmatpush1.msra.mxu0 %v310
    %3380 = vmatprep.subr.mxu0 %v303
    %3381 = vmatpush1.msra.mxu0 %v302
    %3382 = vmatprep.subr.mxu0 %v295
    %3383 = vmatpush1.msra.mxu0 %v294
    %3384 = vmatprep.subr.mxu0 %v287
    %3385 = vmatpush1.msra.mxu0 %v286
    %3386 = vmatprep.subr.mxu0 %v279
    %3387 = vmatpush1.msra.mxu0 %v278
    %3388 = vmatprep.subr.mxu0 %v271
    %3389 = vmatpush1.msra.mxu0 %v270
    %3390 = vmatprep.subr.mxu0 %v263
    %3391 = vmatpush1.msra.mxu0 %v262
    %3392 = vmatprep.subr.mxu0 %v255
    %3393 = vmatpush1.msra.mxu0 %v254
    %3394 = vmatprep.subr.mxu0 %v247
    %3395 = vmatpush1.msra.mxu0 %v246
    %3396 = vmatprep.subr.mxu0 %v239
    %3397 = vmatpush1.msra.mxu0 %v238
    %3398 = vmatprep.subr.mxu0 %v231
    %3399 = vmatpush1.msra.mxu0 %v230
    %3400 = vmatprep.subr.mxu0 %v223
    %3401 = vmatpush1.msra.mxu0 %v222
    %3402 = vmatprep.subr.mxu0 %v215
    %3403 = vmatpush1.msra.mxu0 %v214
    %3404 = vmatprep.subr.mxu0 %v463
    %3405 = vmatpush2.msra.mxu0 %v462
    %3406 = vmatprep.subr.mxu0 %v455
    %3407 = vmatpush2.msra.mxu0 %v454
    %3408 = vmatprep.subr.mxu0 %v447
    %3409 = vmatpush2.msra.mxu0 %v446
    %3410 = vmatprep.subr.mxu0 %v439
    %3411 = vmatpush2.msra.mxu0 %v438
    %3412 = vmatprep.subr.mxu0 %v431
    %3413 = vmatpush2.msra.mxu0 %v430
    %3414 = vmatprep.subr.mxu0 %v423
    %3415 = vmatpush2.msra.mxu0 %v422
    %3416 = vmatprep.subr.mxu0 %v415
    %3417 = vmatpush2.msra.mxu0 %v414
    %3418 = vmatprep.subr.mxu0 %v407
    %3419 = vmatpush2.msra.mxu0 %v406
    %3420 = vmatprep.subr.mxu0 %v399
    %3421 = vmatpush2.msra.mxu0 %v398
    %3422 = vmatprep.subr.mxu0 %v391
    %3423 = vmatpush2.msra.mxu0 %v390
    %3424 = vmatprep.subr.mxu0 %v383
    %3425 = vmatpush2.msra.mxu0 %v382
    %3426 = vmatprep.subr.mxu0 %v375
    %3427 = vmatpush2.msra.mxu0 %v374
    %3428 = vmatprep.subr.mxu0 %v367
    %3429 = vmatpush2.msra.mxu0 %v366
    %3430 = vmatprep.subr.mxu0 %v359
    %3431 = vmatpush2.msra.mxu0 %v358
    %3432 = vmatprep.subr.mxu0 %v351
    %3433 = vmatpush2.msra.mxu0 %v350
    %3434 = vmatprep.subr.mxu0 %v343
    %3435 = vmatpush2.msra.mxu0 %v342
    %3436 = vmatprep.mubr.f32.mxu0 %v3227
    %3437 = vmatmul.mubr.f32.gmra.mxu0 %v3226
    %v3438 = vpop.f32.mrf.mxu0
    %v3439 = vadd.f32 0.0, %v3438
    %v3440 = vpop.f32.mrf.mxu0
    %v3441 = vadd.f32 0.0, %v3440
    %3442 = vdwg.mxu0
    %3443 = vmatprep.subr.mxu0 %v337
    %3444 = vmatpush1.msra.mxu0 %v336
    %3445 = vmatprep.subr.mxu0 %v329
    %3446 = vmatpush1.msra.mxu0 %v328
    %3447 = vmatprep.subr.mxu0 %v321
    %3448 = vmatpush1.msra.mxu0 %v320
    %3449 = vmatprep.subr.mxu0 %v313
    %3450 = vmatpush1.msra.mxu0 %v312
    %3451 = vmatprep.subr.mxu0 %v305
    %3452 = vmatpush1.msra.mxu0 %v304
    %3453 = vmatprep.subr.mxu0 %v297
    %3454 = vmatpush1.msra.mxu0 %v296
    %3455 = vmatprep.subr.mxu0 %v289
    %3456 = vmatpush1.msra.mxu0 %v288
    %3457 = vmatprep.subr.mxu0 %v281
    %3458 = vmatpush1.msra.mxu0 %v280
    %3459 = vmatprep.subr.mxu0 %v273
    %3460 = vmatpush1.msra.mxu0 %v272
    %3461 = vmatprep.subr.mxu0 %v265
    %3462 = vmatpush1.msra.mxu0 %v264
    %3463 = vmatprep.subr.mxu0 %v257
    %3464 = vmatpush1.msra.mxu0 %v256
    %3465 = vmatprep.subr.mxu0 %v249
    %3466 = vmatpush1.msra.mxu0 %v248
    %3467 = vmatprep.subr.mxu0 %v241
    %3468 = vmatpush1.msra.mxu0 %v240
    %3469 = vmatprep.subr.mxu0 %v233
    %3470 = vmatpush1.msra.mxu0 %v232
    %3471 = vmatprep.subr.mxu0 %v225
    %3472 = vmatpush1.msra.mxu0 %v224
    %3473 = vmatprep.subr.mxu0 %v217
    %3474 = vmatpush1.msra.mxu0 %v216
    %3475 = vmatprep.subr.mxu0 %v465
    %3476 = vmatpush2.msra.mxu0 %v464
    %3477 = vmatprep.subr.mxu0 %v457
    %3478 = vmatpush2.msra.mxu0 %v456
    %3479 = vmatprep.subr.mxu0 %v449
    %3480 = vmatpush2.msra.mxu0 %v448
    %3481 = vmatprep.subr.mxu0 %v441
    %3482 = vmatpush2.msra.mxu0 %v440
    %3483 = vmatprep.subr.mxu0 %v433
    %3484 = vmatpush2.msra.mxu0 %v432
    %3485 = vmatprep.subr.mxu0 %v425
    %3486 = vmatpush2.msra.mxu0 %v424
    %3487 = vmatprep.subr.mxu0 %v417
    %3488 = vmatpush2.msra.mxu0 %v416
    %3489 = vmatprep.subr.mxu0 %v409
    %3490 = vmatpush2.msra.mxu0 %v408
    %3491 = vmatprep.subr.mxu0 %v401
    %3492 = vmatpush2.msra.mxu0 %v400
    %3493 = vmatprep.subr.mxu0 %v393
    %3494 = vmatpush2.msra.mxu0 %v392
    %3495 = vmatprep.subr.mxu0 %v385
    %3496 = vmatpush2.msra.mxu0 %v384
    %3497 = vmatprep.subr.mxu0 %v377
    %3498 = vmatpush2.msra.mxu0 %v376
    %3499 = vmatprep.subr.mxu0 %v369
    %3500 = vmatpush2.msra.mxu0 %v368
    %3501 = vmatprep.subr.mxu0 %v361
    %3502 = vmatpush2.msra.mxu0 %v360
    %3503 = vmatprep.subr.mxu0 %v353
    %3504 = vmatpush2.msra.mxu0 %v352
    %3505 = vmatprep.subr.mxu0 %v345
    %3506 = vmatpush2.msra.mxu0 %v344
    %3507 = vmatprep.mubr.f32.mxu0 %v3227
    %3508 = vmatmul.mubr.f32.gmra.mxu0 %v3226
    %v3509 = vpop.f32.mrf.mxu0
    %v3510 = vadd.f32 0.0, %v3509
    %v3511 = vpop.f32.mrf.mxu0
    %v3512 = vadd.f32 0.0, %v3511
    %3513 = vdwg.mxu0
    %v3522 = vrot.slane %v3297, 1
    %v3523 = vrot.slane %v3299, 1
    %v3524 = vrot.slane %v3368, 1
    %v3525 = vrot.slane %v3370, 1
    %v3526 = vrot.slane %v3439, 1
    %v3527 = vrot.slane %v3441, 1
    %v3528 = vrot.slane %v3510, 1
    %v3529 = vrot.slane %v3512, 1
    %v3538 = vadd.f32 %v202, %v3522
    %v3539 = vadd.f32 %v203, %v3523
    %v3540 = vadd.f32 %v204, %v3524
    %v3541 = vadd.f32 %v205, %v3525
    %v3542 = vadd.f32 %v206, %v3526
    %v3543 = vadd.f32 %v207, %v3527
    %v3544 = vadd.f32 %v208, %v3528
    %v3545 = vadd.f32 %v209, %v3529
    %v3546 = vxor.u32 %v3538, 2147483648
    %v3547 = vxor.u32 %v3539, 2147483648
    %v3548 = vmul.f32 %v3546, 1.442695
    %v3549 = vpow.pop %v3548
    %v3550 = vmul.f32 %v3547, 1.442695
    %v3551 = vpow.pop %v3550
    %v3552 = vadd.f32 %v3549, 1.0
    %v3553 = vadd.f32 %v3551, 1.0
    %v3554 = vrcp.pop %v3552
    %v3555 = vmul.f32 1.0, %v3554
    %v3556 = vrcp.pop %v3553
    %v3557 = vmul.f32 1.0, %v3556
    %v3558 = vxor.u32 %v3540, 2147483648
    %v3559 = vxor.u32 %v3541, 2147483648
    %v3560 = vmul.f32 %v3558, 1.442695
    %v3561 = vpow.pop %v3560
    %v3562 = vmul.f32 %v3559, 1.442695
    %v3563 = vpow.pop %v3562
    %v3564 = vadd.f32 %v3561, 1.0
    %v3565 = vadd.f32 %v3563, 1.0
    %v3566 = vrcp.pop %v3564
    %v3567 = vmul.f32 1.0, %v3566
    %v3568 = vrcp.pop %v3565
    %v3569 = vmul.f32 1.0, %v3568
    %v3570 = vtanh.pop %v3542
    %v3571 = vtanh.pop %v3543
    %v3572 = vxor.u32 %v3544, 2147483648
    %v3573 = vxor.u32 %v3545, 2147483648
    %v3574 = vmul.f32 %v3572, 1.442695
    %v3575 = vpow.pop %v3574
    %v3576 = vmul.f32 %v3573, 1.442695
    %v3577 = vpow.pop %v3576
    %v3578 = vadd.f32 %v3575, 1.0
    %v3579 = vadd.f32 %v3577, 1.0
    %v3580 = vrcp.pop %v3578
    %v3581 = vmul.f32 1.0, %v3580
    %v3582 = vrcp.pop %v3579
    %v3583 = vmul.f32 1.0, %v3582
    %v3586 = vrot.slane %v3198, 7
    %v3587 = vrot.slane %v3199, 7
    %v3590 = vmul.f32 %v3567, %v3586
    %v3591 = vmul.f32 %v3569, %v3587
    %v3592 = vmul.f32 %v3555, %v3570
    %v3593 = vmul.f32 %v3557, %v3571
    %v3594 = vadd.f32 %v3590, %v3592
    %v3595 = vadd.f32 %v3591, %v3593
    %v3596 = vtanh.pop %v3594
    %v3597 = vtanh.pop %v3595
    %v3598 = vmul.f32 %v3581, %v3596
    %v3599 = vmul.f32 %v3583, %v3597
    %v3602 = vcombine.high %v3598, %v3599
    %v3604 = vunpack.c.l.s4 1966171168
    %v3605 = vunpack.c.0.s8 %v3604
    %v3606 = vlaneseq
    %v3607 = vshrl.u32 %v3606, 7
    %v3608 = vsub.s32 %v3605, %v3607
    %v3609 = vrot.slane %v3602, %v3608
    %v3610 = vcombine.high %v3609, %v3609
    %v3612 = vunpack.c.l.s4 1966171168
    %v3613 = vunpack.c.0.s8 %v3612
    %v3614 = vlaneseq
    %v3615 = vshrl.u32 %v3614, 7
    %v3616 = vsub.s32 %v3613, %v3615
    %v3617 = vrot.slane %v3610, %v3616
    %v3618 = vcombine.high %v3617, %v3617
    %s3620 = scalar_lea.vmem [#allocation2], 7
    %3621 = vst.msk [vmem:[%s3620] ss:$8 sm:$0x3] %vm851, %v3618
    %3622 = vst.msk [vmem:[%s3620] ss:$8 sm:$0x0] %vm851, %v3618
    %3623 = vst.msk [vmem:[#allocation12] sm:$0x3] %vm851, %v3618
    %v3626 = vcombine.high %v3594, %v3595
    %v3628 = vunpack.c.l.s4 1966171168
    %v3629 = vunpack.c.0.s8 %v3628
    %v3630 = vlaneseq
    %v3631 = vshrl.u32 %v3630, 7
    %v3632 = vsub.s32 %v3629, %v3631
    %v3633 = vrot.slane %v3626, %v3632
    %v3634 = vcombine.high %v3633, %v3633
    %v3636 = vunpack.c.l.s4 1966171168
    %v3637 = vunpack.c.0.s8 %v3636
    %v3638 = vlaneseq
    %v3639 = vshrl.u32 %v3638, 7
    %v3640 = vsub.s32 %v3637, %v3639
    %v3641 = vrot.slane %v3634, %v3640
    %v3642 = vcombine.high %v3641, %v3641
    %3644 = vst.msk [vmem:[#allocation13] sm:$0x3] %vm851, %v3642
    %v3645 = vld [vmem:[#allocation2] sm:$0xff]
    %v3646 = vld [vmem:[#allocation2 + $0x8] sm:$0xff]
    %v3647 = vld [vmem:[#allocation6] sm:$0xff]
    %v3648 = vld [vmem:[#allocation6 + $0x8] sm:$0xff]
    %v3649 = vld [vmem:[#allocation6 + $0x10] sm:$0xff]
    %v3650 = vld [vmem:[#allocation6 + $0x18] sm:$0xff]
    %v3651 = vld [vmem:[#allocation6 + $0x20] sm:$0xff]
    %v3652 = vld [vmem:[#allocation6 + $0x28] sm:$0xff]
    %v3653 = vld [vmem:[#allocation6 + $0x30] sm:$0xff]
    %v3654 = vld [vmem:[#allocation6 + $0x38] sm:$0xff]
    %v3655 = vld [vmem:[#allocation6 + $0x40] sm:$0xff]
    %v3656 = vld [vmem:[#allocation6 + $0x48] sm:$0xff]
    %v3657 = vld [vmem:[#allocation6 + $0x50] sm:$0xff]
    %v3658 = vld [vmem:[#allocation6 + $0x58] sm:$0xff]
    %v3659 = vld [vmem:[#allocation6 + $0x60] sm:$0xff]
    %v3660 = vld [vmem:[#allocation6 + $0x68] sm:$0xff]
    %v3661 = vld [vmem:[#allocation6 + $0x70] sm:$0xff]
    %v3662 = vld [vmem:[#allocation6 + $0x78] sm:$0xff]
    %v3663 = vld [vmem:[#allocation6 + $0x80] sm:$0xff]
    %v3664 = vld [vmem:[#allocation6 + $0x88] sm:$0xff]
    %v3665 = vld [vmem:[#allocation6 + $0x90] sm:$0xff]
    %v3666 = vld [vmem:[#allocation6 + $0x98] sm:$0xff]
    %v3667 = vld [vmem:[#allocation6 + $0xa0] sm:$0xff]
    %v3668 = vld [vmem:[#allocation6 + $0xa8] sm:$0xff]
    %v3669 = vld [vmem:[#allocation6 + $0xb0] sm:$0xff]
    %v3670 = vld [vmem:[#allocation6 + $0xb8] sm:$0xff]
    %v3671 = vld [vmem:[#allocation6 + $0xc0] sm:$0xff]
    %v3672 = vld [vmem:[#allocation6 + $0xc8] sm:$0xff]
    %v3673 = vld [vmem:[#allocation6 + $0xd0] sm:$0xff]
    %v3674 = vld [vmem:[#allocation6 + $0xd8] sm:$0xff]
    %v3675 = vld [vmem:[#allocation6 + $0xe0] sm:$0xff]
    %v3676 = vld [vmem:[#allocation6 + $0xe8] sm:$0xff]
    %v3677 = vld [vmem:[#allocation6 + $0xf0] sm:$0xff]
    %v3678 = vld [vmem:[#allocation6 + $0xf8] sm:$0xff]
    %v3679 = vld [vmem:[#allocation6 + $0x100] sm:$0xff]
    %v3680 = vld [vmem:[#allocation6 + $0x108] sm:$0xff]
    %v3681 = vld [vmem:[#allocation6 + $0x110] sm:$0xff]
    %v3682 = vld [vmem:[#allocation6 + $0x118] sm:$0xff]
    %v3683 = vld [vmem:[#allocation6 + $0x120] sm:$0xff]
    %v3684 = vld [vmem:[#allocation6 + $0x128] sm:$0xff]
    %v3685 = vld [vmem:[#allocation6 + $0x130] sm:$0xff]
    %v3686 = vld [vmem:[#allocation6 + $0x138] sm:$0xff]
    %v3687 = vld [vmem:[#allocation6 + $0x140] sm:$0xff]
    %v3688 = vld [vmem:[#allocation6 + $0x148] sm:$0xff]
    %v3689 = vld [vmem:[#allocation6 + $0x150] sm:$0xff]
    %v3690 = vld [vmem:[#allocation6 + $0x158] sm:$0xff]
    %v3691 = vld [vmem:[#allocation6 + $0x160] sm:$0xff]
    %v3692 = vld [vmem:[#allocation6 + $0x168] sm:$0xff]
    %v3693 = vld [vmem:[#allocation6 + $0x170] sm:$0xff]
    %v3694 = vld [vmem:[#allocation6 + $0x178] sm:$0xff]
    %v3695 = vld [vmem:[#allocation6 + $0x180] sm:$0xff]
    %v3696 = vld [vmem:[#allocation6 + $0x188] sm:$0xff]
    %v3697 = vld [vmem:[#allocation6 + $0x190] sm:$0xff]
    %v3698 = vld [vmem:[#allocation6 + $0x198] sm:$0xff]
    %v3699 = vld [vmem:[#allocation6 + $0x1a0] sm:$0xff]
    %v3700 = vld [vmem:[#allocation6 + $0x1a8] sm:$0xff]
    %v3701 = vld [vmem:[#allocation6 + $0x1b0] sm:$0xff]
    %v3702 = vld [vmem:[#allocation6 + $0x1b8] sm:$0xff]
    %v3703 = vld [vmem:[#allocation6 + $0x1c0] sm:$0xff]
    %v3704 = vld [vmem:[#allocation6 + $0x1c8] sm:$0xff]
    %v3705 = vld [vmem:[#allocation6 + $0x1d0] sm:$0xff]
    %v3706 = vld [vmem:[#allocation6 + $0x1d8] sm:$0xff]
    %v3707 = vld [vmem:[#allocation6 + $0x1e0] sm:$0xff]
    %v3708 = vld [vmem:[#allocation6 + $0x1e8] sm:$0xff]
    %v3709 = vld [vmem:[#allocation6 + $0x1f0] sm:$0xff]
    %v3710 = vld [vmem:[#allocation6 + $0x1f8] sm:$0xff]
    %v3711 = vld [vmem:[#allocation6 + $0x200] sm:$0xff]
    %v3712 = vld [vmem:[#allocation6 + $0x208] sm:$0xff]
    %v3713 = vld [vmem:[#allocation6 + $0x210] sm:$0xff]
    %v3714 = vld [vmem:[#allocation6 + $0x218] sm:$0xff]
    %v3715 = vld [vmem:[#allocation6 + $0x220] sm:$0xff]
    %v3716 = vld [vmem:[#allocation6 + $0x228] sm:$0xff]
    %v3717 = vld [vmem:[#allocation6 + $0x230] sm:$0xff]
    %v3718 = vld [vmem:[#allocation6 + $0x238] sm:$0xff]
    %v3719 = vld [vmem:[#allocation6 + $0x240] sm:$0xff]
    %v3720 = vld [vmem:[#allocation6 + $0x248] sm:$0xff]
    %v3721 = vld [vmem:[#allocation6 + $0x250] sm:$0xff]
    %v3722 = vld [vmem:[#allocation6 + $0x258] sm:$0xff]
    %v3723 = vld [vmem:[#allocation6 + $0x260] sm:$0xff]
    %v3724 = vld [vmem:[#allocation6 + $0x268] sm:$0xff]
    %v3725 = vld [vmem:[#allocation6 + $0x270] sm:$0xff]
    %v3726 = vld [vmem:[#allocation6 + $0x278] sm:$0xff]
    %v3727 = vld [vmem:[#allocation6 + $0x280] sm:$0xff]
    %v3728 = vld [vmem:[#allocation6 + $0x288] sm:$0xff]
    %v3729 = vld [vmem:[#allocation6 + $0x290] sm:$0xff]
    %v3730 = vld [vmem:[#allocation6 + $0x298] sm:$0xff]
    %v3731 = vld [vmem:[#allocation6 + $0x2a0] sm:$0xff]
    %v3732 = vld [vmem:[#allocation6 + $0x2a8] sm:$0xff]
    %v3733 = vld [vmem:[#allocation6 + $0x2b0] sm:$0xff]
    %v3734 = vld [vmem:[#allocation6 + $0x2b8] sm:$0xff]
    %v3735 = vld [vmem:[#allocation6 + $0x2c0] sm:$0xff]
    %v3736 = vld [vmem:[#allocation6 + $0x2c8] sm:$0xff]
    %v3737 = vld [vmem:[#allocation6 + $0x2d0] sm:$0xff]
    %v3738 = vld [vmem:[#allocation6 + $0x2d8] sm:$0xff]
    %v3739 = vld [vmem:[#allocation6 + $0x2e0] sm:$0xff]
    %v3740 = vld [vmem:[#allocation6 + $0x2e8] sm:$0xff]
    %v3741 = vld [vmem:[#allocation6 + $0x2f0] sm:$0xff]
    %v3742 = vld [vmem:[#allocation6 + $0x2f8] sm:$0xff]
    %v3743 = vld [vmem:[#allocation6 + $0x300] sm:$0xff]
    %v3744 = vld [vmem:[#allocation6 + $0x308] sm:$0xff]
    %v3745 = vld [vmem:[#allocation6 + $0x310] sm:$0xff]
    %v3746 = vld [vmem:[#allocation6 + $0x318] sm:$0xff]
    %v3747 = vld [vmem:[#allocation6 + $0x320] sm:$0xff]
    %v3748 = vld [vmem:[#allocation6 + $0x328] sm:$0xff]
    %v3749 = vld [vmem:[#allocation6 + $0x330] sm:$0xff]
    %v3750 = vld [vmem:[#allocation6 + $0x338] sm:$0xff]
    %v3751 = vld [vmem:[#allocation6 + $0x340] sm:$0xff]
    %v3752 = vld [vmem:[#allocation6 + $0x348] sm:$0xff]
    %v3753 = vld [vmem:[#allocation6 + $0x350] sm:$0xff]
    %v3754 = vld [vmem:[#allocation6 + $0x358] sm:$0xff]
    %v3755 = vld [vmem:[#allocation6 + $0x360] sm:$0xff]
    %v3756 = vld [vmem:[#allocation6 + $0x368] sm:$0xff]
    %v3757 = vld [vmem:[#allocation6 + $0x370] sm:$0xff]
    %v3758 = vld [vmem:[#allocation6 + $0x378] sm:$0xff]
    %v3759 = vld [vmem:[#allocation6 + $0x380] sm:$0xff]
    %v3760 = vld [vmem:[#allocation6 + $0x388] sm:$0xff]
    %v3761 = vld [vmem:[#allocation6 + $0x390] sm:$0xff]
    %v3762 = vld [vmem:[#allocation6 + $0x398] sm:$0xff]
    %v3763 = vld [vmem:[#allocation6 + $0x3a0] sm:$0xff]
    %v3764 = vld [vmem:[#allocation6 + $0x3a8] sm:$0xff]
    %v3765 = vld [vmem:[#allocation6 + $0x3b0] sm:$0xff]
    %v3766 = vld [vmem:[#allocation6 + $0x3b8] sm:$0xff]
    %v3767 = vld [vmem:[#allocation6 + $0x3c0] sm:$0xff]
    %v3768 = vld [vmem:[#allocation6 + $0x3c8] sm:$0xff]
    %v3769 = vld [vmem:[#allocation6 + $0x3d0] sm:$0xff]
    %v3770 = vld [vmem:[#allocation6 + $0x3d8] sm:$0xff]
    %v3771 = vld [vmem:[#allocation6 + $0x3e0] sm:$0xff]
    %v3772 = vld [vmem:[#allocation6 + $0x3e8] sm:$0xff]
    %v3773 = vld [vmem:[#allocation6 + $0x3f0] sm:$0xff]
    %v3774 = vld [vmem:[#allocation6 + $0x3f8] sm:$0xff]
    %v3775 = vld [vmem:[#allocation6 + $0x400] sm:$0xff]
    %v3776 = vld [vmem:[#allocation6 + $0x408] sm:$0xff]
    %v3777 = vld [vmem:[#allocation6 + $0x410] sm:$0xff]
    %v3778 = vld [vmem:[#allocation6 + $0x418] sm:$0xff]
    %v3779 = vld [vmem:[#allocation6 + $0x420] sm:$0xff]
    %v3780 = vld [vmem:[#allocation6 + $0x428] sm:$0xff]
    %v3781 = vld [vmem:[#allocation6 + $0x430] sm:$0xff]
    %v3782 = vld [vmem:[#allocation6 + $0x438] sm:$0xff]
    %v3783 = vld [vmem:[#allocation6 + $0x440] sm:$0xff]
    %v3784 = vld [vmem:[#allocation6 + $0x448] sm:$0xff]
    %v3785 = vld [vmem:[#allocation6 + $0x450] sm:$0xff]
    %v3786 = vld [vmem:[#allocation6 + $0x458] sm:$0xff]
    %v3787 = vld [vmem:[#allocation6 + $0x460] sm:$0xff]
    %v3788 = vld [vmem:[#allocation6 + $0x468] sm:$0xff]
    %v3789 = vld [vmem:[#allocation6 + $0x470] sm:$0xff]
    %v3790 = vld [vmem:[#allocation6 + $0x478] sm:$0xff]
    %v3791 = vld [vmem:[#allocation6 + $0x480] sm:$0xff]
    %v3792 = vld [vmem:[#allocation6 + $0x488] sm:$0xff]
    %v3793 = vld [vmem:[#allocation6 + $0x490] sm:$0xff]
    %v3794 = vld [vmem:[#allocation6 + $0x498] sm:$0xff]
    %v3795 = vld [vmem:[#allocation6 + $0x4a0] sm:$0xff]
    %v3796 = vld [vmem:[#allocation6 + $0x4a8] sm:$0xff]
    %v3797 = vld [vmem:[#allocation6 + $0x4b0] sm:$0xff]
    %v3798 = vld [vmem:[#allocation6 + $0x4b8] sm:$0xff]
    %v3799 = vld [vmem:[#allocation6 + $0x4c0] sm:$0xff]
    %v3800 = vld [vmem:[#allocation6 + $0x4c8] sm:$0xff]
    %v3801 = vld [vmem:[#allocation6 + $0x4d0] sm:$0xff]
    %v3802 = vld [vmem:[#allocation6 + $0x4d8] sm:$0xff]
    %v3803 = vld [vmem:[#allocation6 + $0x4e0] sm:$0xff]
    %v3804 = vld [vmem:[#allocation6 + $0x4e8] sm:$0xff]
    %v3805 = vld [vmem:[#allocation6 + $0x4f0] sm:$0xff]
    %v3806 = vld [vmem:[#allocation6 + $0x4f8] sm:$0xff]
    %v3807 = vld [vmem:[#allocation6 + $0x500] sm:$0xff]
    %v3808 = vld [vmem:[#allocation6 + $0x508] sm:$0xff]
    %v3809 = vld [vmem:[#allocation6 + $0x510] sm:$0xff]
    %v3810 = vld [vmem:[#allocation6 + $0x518] sm:$0xff]
    %v3811 = vld [vmem:[#allocation6 + $0x520] sm:$0xff]
    %v3812 = vld [vmem:[#allocation6 + $0x528] sm:$0xff]
    %v3813 = vld [vmem:[#allocation6 + $0x530] sm:$0xff]
    %v3814 = vld [vmem:[#allocation6 + $0x538] sm:$0xff]
    %v3815 = vld [vmem:[#allocation6 + $0x540] sm:$0xff]
    %v3816 = vld [vmem:[#allocation6 + $0x548] sm:$0xff]
    %v3817 = vld [vmem:[#allocation6 + $0x550] sm:$0xff]
    %v3818 = vld [vmem:[#allocation6 + $0x558] sm:$0xff]
    %v3819 = vld [vmem:[#allocation6 + $0x560] sm:$0xff]
    %v3820 = vld [vmem:[#allocation6 + $0x568] sm:$0xff]
    %v3821 = vld [vmem:[#allocation6 + $0x570] sm:$0xff]
    %v3822 = vld [vmem:[#allocation6 + $0x578] sm:$0xff]
    %v3823 = vld [vmem:[#allocation6 + $0x580] sm:$0xff]
    %v3824 = vld [vmem:[#allocation6 + $0x588] sm:$0xff]
    %v3825 = vld [vmem:[#allocation6 + $0x590] sm:$0xff]
    %v3826 = vld [vmem:[#allocation6 + $0x598] sm:$0xff]
    %v3827 = vld [vmem:[#allocation6 + $0x5a0] sm:$0xff]
    %v3828 = vld [vmem:[#allocation6 + $0x5a8] sm:$0xff]
    %v3829 = vld [vmem:[#allocation6 + $0x5b0] sm:$0xff]
    %v3830 = vld [vmem:[#allocation6 + $0x5b8] sm:$0xff]
    %v3831 = vld [vmem:[#allocation6 + $0x5c0] sm:$0xff]
    %v3832 = vld [vmem:[#allocation6 + $0x5c8] sm:$0xff]
    %v3833 = vld [vmem:[#allocation6 + $0x5d0] sm:$0xff]
    %v3834 = vld [vmem:[#allocation6 + $0x5d8] sm:$0xff]
    %v3835 = vld [vmem:[#allocation6 + $0x5e0] sm:$0xff]
    %v3836 = vld [vmem:[#allocation6 + $0x5e8] sm:$0xff]
    %v3837 = vld [vmem:[#allocation6 + $0x5f0] sm:$0xff]
    %v3838 = vld [vmem:[#allocation6 + $0x5f8] sm:$0xff]
    %v3839 = vld [vmem:[#allocation8] sm:$0x3f]
    %v3841 = vlaneseq
    %v3842 = vshrl.u32 %v3841, 7
    %v3843 = vsub.s32 0, %v3842
    %v3844 = vrot.slane %v3839, %v3843
    %v3845 = vlaneseq
    %v3846 = vshrl.u32 %v3845, 7
    %v3847 = vsub.s32 1, %v3846
    %v3848 = vrot.slane %v3839, %v3847
    %v3849 = vlaneseq
    %v3850 = vshrl.u32 %v3849, 7
    %v3851 = vsub.s32 2, %v3850
    %v3852 = vrot.slane %v3839, %v3851
    %v3853 = vlaneseq
    %v3854 = vshrl.u32 %v3853, 7
    %v3855 = vsub.s32 3, %v3854
    %v3856 = vrot.slane %v3839, %v3855
    %v3857 = vlaneseq
    %v3858 = vshrl.u32 %v3857, 7
    %v3859 = vsub.s32 4, %v3858
    %v3860 = vrot.slane %v3839, %v3859
    %v3861 = vlaneseq
    %v3862 = vshrl.u32 %v3861, 7
    %v3863 = vsub.s32 5, %v3862
    %v3864 = vrot.slane %v3839, %v3863
    %3871 = vmatprep.subr.mxu0 %v3738
    %3872 = vmatpush1.msra.mxu0 %v3737
    %3873 = vmatprep.subr.mxu0 %v3732
    %3874 = vmatpush1.msra.mxu0 %v3731
    %3875 = vmatprep.subr.mxu0 %v3726
    %3876 = vmatpush1.msra.mxu0 %v3725
    %3877 = vmatprep.subr.mxu0 %v3720
    %3878 = vmatpush1.msra.mxu0 %v3719
    %3879 = vmatprep.subr.mxu0 %v3714
    %3880 = vmatpush1.msra.mxu0 %v3713
    %3881 = vmatprep.subr.mxu0 %v3708
    %3882 = vmatpush1.msra.mxu0 %v3707
    %3883 = vmatprep.subr.mxu0 %v3702
    %3884 = vmatpush1.msra.mxu0 %v3701
    %3885 = vmatprep.subr.mxu0 %v3696
    %3886 = vmatpush1.msra.mxu0 %v3695
    %3887 = vmatprep.subr.mxu0 %v3690
    %3888 = vmatpush1.msra.mxu0 %v3689
    %3889 = vmatprep.subr.mxu0 %v3684
    %3890 = vmatpush1.msra.mxu0 %v3683
    %3891 = vmatprep.subr.mxu0 %v3678
    %3892 = vmatpush1.msra.mxu0 %v3677
    %3893 = vmatprep.subr.mxu0 %v3672
    %3894 = vmatpush1.msra.mxu0 %v3671
    %3895 = vmatprep.subr.mxu0 %v3666
    %3896 = vmatpush1.msra.mxu0 %v3665
    %3897 = vmatprep.subr.mxu0 %v3660
    %3898 = vmatpush1.msra.mxu0 %v3659
    %3899 = vmatprep.subr.mxu0 %v3654
    %3900 = vmatpush1.msra.mxu0 %v3653
    %3901 = vmatprep.subr.mxu0 %v3648
    %3902 = vmatpush1.msra.mxu0 %v3647
    %3903 = vmatprep.subr.mxu0 %v3834
    %3904 = vmatpush2.msra.mxu0 %v3833
    %3905 = vmatprep.subr.mxu0 %v3828
    %3906 = vmatpush2.msra.mxu0 %v3827
    %3907 = vmatprep.subr.mxu0 %v3822
    %3908 = vmatpush2.msra.mxu0 %v3821
    %3909 = vmatprep.subr.mxu0 %v3816
    %3910 = vmatpush2.msra.mxu0 %v3815
    %3911 = vmatprep.subr.mxu0 %v3810
    %3912 = vmatpush2.msra.mxu0 %v3809
    %3913 = vmatprep.subr.mxu0 %v3804
    %3914 = vmatpush2.msra.mxu0 %v3803
    %3915 = vmatprep.subr.mxu0 %v3798
    %3916 = vmatpush2.msra.mxu0 %v3797
    %3917 = vmatprep.subr.mxu0 %v3792
    %3918 = vmatpush2.msra.mxu0 %v3791
    %3919 = vmatprep.subr.mxu0 %v3786
    %3920 = vmatpush2.msra.mxu0 %v3785
    %3921 = vmatprep.subr.mxu0 %v3780
    %3922 = vmatpush2.msra.mxu0 %v3779
    %3923 = vmatprep.subr.mxu0 %v3774
    %3924 = vmatpush2.msra.mxu0 %v3773
    %3925 = vmatprep.subr.mxu0 %v3768
    %3926 = vmatpush2.msra.mxu0 %v3767
    %3927 = vmatprep.subr.mxu0 %v3762
    %3928 = vmatpush2.msra.mxu0 %v3761
    %3929 = vmatprep.subr.mxu0 %v3756
    %3930 = vmatpush2.msra.mxu0 %v3755
    %3931 = vmatprep.subr.mxu0 %v3750
    %3932 = vmatpush2.msra.mxu0 %v3749
    %3933 = vmatprep.subr.mxu0 %v3744
    %3934 = vmatpush2.msra.mxu0 %v3743
    %3935 = vmatprep.mubr.f32.mxu0 %v3646
    %3936 = vmatmul.mubr.f32.gmra.mxu0 %v3645
    %v3937 = vpop.f32.mrf.mxu0
    %v3938 = vadd.f32 %v3844, %v3937
    %v3939 = vpop.f32.mrf.mxu0
    %v3940 = vadd.f32 %v3848, %v3939
    %3941 = vdwg.mxu0
    %3942 = vmatprep.subr.mxu0 %v3740
    %3943 = vmatpush1.msra.mxu0 %v3739
    %3944 = vmatprep.subr.mxu0 %v3734
    %3945 = vmatpush1.msra.mxu0 %v3733
    %3946 = vmatprep.subr.mxu0 %v3728
    %3947 = vmatpush1.msra.mxu0 %v3727
    %3948 = vmatprep.subr.mxu0 %v3722
    %3949 = vmatpush1.msra.mxu0 %v3721
    %3950 = vmatprep.subr.mxu0 %v3716
    %3951 = vmatpush1.msra.mxu0 %v3715
    %3952 = vmatprep.subr.mxu0 %v3710
    %3953 = vmatpush1.msra.mxu0 %v3709
    %3954 = vmatprep.subr.mxu0 %v3704
    %3955 = vmatpush1.msra.mxu0 %v3703
    %3956 = vmatprep.subr.mxu0 %v3698
    %3957 = vmatpush1.msra.mxu0 %v3697
    %3958 = vmatprep.subr.mxu0 %v3692
    %3959 = vmatpush1.msra.mxu0 %v3691
    %3960 = vmatprep.subr.mxu0 %v3686
    %3961 = vmatpush1.msra.mxu0 %v3685
    %3962 = vmatprep.subr.mxu0 %v3680
    %3963 = vmatpush1.msra.mxu0 %v3679
    %3964 = vmatprep.subr.mxu0 %v3674
    %3965 = vmatpush1.msra.mxu0 %v3673
    %3966 = vmatprep.subr.mxu0 %v3668
    %3967 = vmatpush1.msra.mxu0 %v3667
    %3968 = vmatprep.subr.mxu0 %v3662
    %3969 = vmatpush1.msra.mxu0 %v3661
    %3970 = vmatprep.subr.mxu0 %v3656
    %3971 = vmatpush1.msra.mxu0 %v3655
    %3972 = vmatprep.subr.mxu0 %v3650
    %3973 = vmatpush1.msra.mxu0 %v3649
    %3974 = vmatprep.subr.mxu0 %v3836
    %3975 = vmatpush2.msra.mxu0 %v3835
    %3976 = vmatprep.subr.mxu0 %v3830
    %3977 = vmatpush2.msra.mxu0 %v3829
    %3978 = vmatprep.subr.mxu0 %v3824
    %3979 = vmatpush2.msra.mxu0 %v3823
    %3980 = vmatprep.subr.mxu0 %v3818
    %3981 = vmatpush2.msra.mxu0 %v3817
    %3982 = vmatprep.subr.mxu0 %v3812
    %3983 = vmatpush2.msra.mxu0 %v3811
    %3984 = vmatprep.subr.mxu0 %v3806
    %3985 = vmatpush2.msra.mxu0 %v3805
    %3986 = vmatprep.subr.mxu0 %v3800
    %3987 = vmatpush2.msra.mxu0 %v3799
    %3988 = vmatprep.subr.mxu0 %v3794
    %3989 = vmatpush2.msra.mxu0 %v3793
    %3990 = vmatprep.subr.mxu0 %v3788
    %3991 = vmatpush2.msra.mxu0 %v3787
    %3992 = vmatprep.subr.mxu0 %v3782
    %3993 = vmatpush2.msra.mxu0 %v3781
    %3994 = vmatprep.subr.mxu0 %v3776
    %3995 = vmatpush2.msra.mxu0 %v3775
    %3996 = vmatprep.subr.mxu0 %v3770
    %3997 = vmatpush2.msra.mxu0 %v3769
    %3998 = vmatprep.subr.mxu0 %v3764
    %3999 = vmatpush2.msra.mxu0 %v3763
    %4000 = vmatprep.subr.mxu0 %v3758
    %4001 = vmatpush2.msra.mxu0 %v3757
    %4002 = vmatprep.subr.mxu0 %v3752
    %4003 = vmatpush2.msra.mxu0 %v3751
    %4004 = vmatprep.subr.mxu0 %v3746
    %4005 = vmatpush2.msra.mxu0 %v3745
    %4006 = vmatprep.mubr.f32.mxu0 %v3646
    %4007 = vmatmul.mubr.f32.gmra.mxu0 %v3645
    %v4008 = vpop.f32.mrf.mxu0
    %v4009 = vadd.f32 %v3852, %v4008
    %v4010 = vpop.f32.mrf.mxu0
    %v4011 = vadd.f32 %v3856, %v4010
    %4012 = vdwg.mxu0
    %4013 = vmatprep.subr.mxu0 %v3742
    %4014 = vmatpush1.msra.mxu0 %v3741
    %4015 = vmatprep.subr.mxu0 %v3736
    %4016 = vmatpush1.msra.mxu0 %v3735
    %4017 = vmatprep.subr.mxu0 %v3730
    %4018 = vmatpush1.msra.mxu0 %v3729
    %4019 = vmatprep.subr.mxu0 %v3724
    %4020 = vmatpush1.msra.mxu0 %v3723
    %4021 = vmatprep.subr.mxu0 %v3718
    %4022 = vmatpush1.msra.mxu0 %v3717
    %4023 = vmatprep.subr.mxu0 %v3712
    %4024 = vmatpush1.msra.mxu0 %v3711
    %4025 = vmatprep.subr.mxu0 %v3706
    %4026 = vmatpush1.msra.mxu0 %v3705
    %4027 = vmatprep.subr.mxu0 %v3700
    %4028 = vmatpush1.msra.mxu0 %v3699
    %4029 = vmatprep.subr.mxu0 %v3694
    %4030 = vmatpush1.msra.mxu0 %v3693
    %4031 = vmatprep.subr.mxu0 %v3688
    %4032 = vmatpush1.msra.mxu0 %v3687
    %4033 = vmatprep.subr.mxu0 %v3682
    %4034 = vmatpush1.msra.mxu0 %v3681
    %4035 = vmatprep.subr.mxu0 %v3676
    %4036 = vmatpush1.msra.mxu0 %v3675
    %4037 = vmatprep.subr.mxu0 %v3670
    %4038 = vmatpush1.msra.mxu0 %v3669
    %4039 = vmatprep.subr.mxu0 %v3664
    %4040 = vmatpush1.msra.mxu0 %v3663
    %4041 = vmatprep.subr.mxu0 %v3658
    %4042 = vmatpush1.msra.mxu0 %v3657
    %4043 = vmatprep.subr.mxu0 %v3652
    %4044 = vmatpush1.msra.mxu0 %v3651
    %4045 = vmatprep.subr.mxu0 %v3838
    %4046 = vmatpush2.msra.mxu0 %v3837
    %4047 = vmatprep.subr.mxu0 %v3832
    %4048 = vmatpush2.msra.mxu0 %v3831
    %4049 = vmatprep.subr.mxu0 %v3826
    %4050 = vmatpush2.msra.mxu0 %v3825
    %4051 = vmatprep.subr.mxu0 %v3820
    %4052 = vmatpush2.msra.mxu0 %v3819
    %4053 = vmatprep.subr.mxu0 %v3814
    %4054 = vmatpush2.msra.mxu0 %v3813
    %4055 = vmatprep.subr.mxu0 %v3808
    %4056 = vmatpush2.msra.mxu0 %v3807
    %4057 = vmatprep.subr.mxu0 %v3802
    %4058 = vmatpush2.msra.mxu0 %v3801
    %4059 = vmatprep.subr.mxu0 %v3796
    %4060 = vmatpush2.msra.mxu0 %v3795
    %4061 = vmatprep.subr.mxu0 %v3790
    %4062 = vmatpush2.msra.mxu0 %v3789
    %4063 = vmatprep.subr.mxu0 %v3784
    %4064 = vmatpush2.msra.mxu0 %v3783
    %4065 = vmatprep.subr.mxu0 %v3778
    %4066 = vmatpush2.msra.mxu0 %v3777
    %4067 = vmatprep.subr.mxu0 %v3772
    %4068 = vmatpush2.msra.mxu0 %v3771
    %4069 = vmatprep.subr.mxu0 %v3766
    %4070 = vmatpush2.msra.mxu0 %v3765
    %4071 = vmatprep.subr.mxu0 %v3760
    %4072 = vmatpush2.msra.mxu0 %v3759
    %4073 = vmatprep.subr.mxu0 %v3754
    %4074 = vmatpush2.msra.mxu0 %v3753
    %4075 = vmatprep.subr.mxu0 %v3748
    %4076 = vmatpush2.msra.mxu0 %v3747
    %4077 = vmatprep.mubr.f32.mxu0 %v3646
    %4078 = vmatmul.mubr.f32.gmra.mxu0 %v3645
    %v4079 = vpop.f32.mrf.mxu0
    %v4080 = vadd.f32 %v3860, %v4079
    %v4081 = vpop.f32.mrf.mxu0
    %v4082 = vadd.f32 %v3864, %v4081
    %4083 = vdwg.mxu0
    %v4084 = vtanh.pop %v3938
    %v4085 = vtanh.pop %v3940
    %v4086 = vtanh.pop %v4009
    %v4087 = vtanh.pop %v4011
    %v4088 = vtanh.pop %v4080
    %v4089 = vtanh.pop %v4082
    %v4090 = vld [vmem:[#allocation9] sm:$0xff]
    %v4091 = vld [vmem:[#allocation9 + $0x8] sm:$0xff]
    %v4092 = vld [vmem:[#allocation9 + $0x10] sm:$0xff]
    %v4093 = vld [vmem:[#allocation9 + $0x18] sm:$0xff]
    %v4094 = vld [vmem:[#allocation9 + $0x20] sm:$0xff]
    %v4095 = vld [vmem:[#allocation9 + $0x28] sm:$0xff]
    %v4096 = vld [vmem:[#allocation9 + $0x30] sm:$0xff]
    %v4097 = vld [vmem:[#allocation9 + $0x38] sm:$0xff]
    %v4098 = vld [vmem:[#allocation9 + $0x40] sm:$0xff]
    %v4099 = vld [vmem:[#allocation9 + $0x48] sm:$0xff]
    %v4100 = vld [vmem:[#allocation9 + $0x50] sm:$0xff]
    %v4101 = vld [vmem:[#allocation9 + $0x58] sm:$0xff]
    %v4102 = vld [vmem:[#allocation9 + $0x60] sm:$0xff]
    %v4103 = vld [vmem:[#allocation9 + $0x68] sm:$0xff]
    %v4104 = vld [vmem:[#allocation9 + $0x70] sm:$0xff]
    %v4105 = vld [vmem:[#allocation9 + $0x78] sm:$0xff]
    %v4106 = vld [vmem:[#allocation9 + $0x80] sm:$0xff]
    %v4107 = vld [vmem:[#allocation9 + $0x88] sm:$0xff]
    %v4108 = vld [vmem:[#allocation9 + $0x90] sm:$0xff]
    %v4109 = vld [vmem:[#allocation9 + $0x98] sm:$0xff]
    %v4110 = vld [vmem:[#allocation9 + $0xa0] sm:$0xff]
    %v4111 = vld [vmem:[#allocation9 + $0xa8] sm:$0xff]
    %v4112 = vld [vmem:[#allocation9 + $0xb0] sm:$0xff]
    %v4113 = vld [vmem:[#allocation9 + $0xb8] sm:$0xff]
    %v4114 = vld [vmem:[#allocation9 + $0xc0] sm:$0xff]
    %v4115 = vld [vmem:[#allocation9 + $0xc8] sm:$0xff]
    %v4116 = vld [vmem:[#allocation9 + $0xd0] sm:$0xff]
    %v4117 = vld [vmem:[#allocation9 + $0xd8] sm:$0xff]
    %v4118 = vld [vmem:[#allocation9 + $0xe0] sm:$0xff]
    %v4119 = vld [vmem:[#allocation9 + $0xe8] sm:$0xff]
    %v4120 = vld [vmem:[#allocation9 + $0xf0] sm:$0xff]
    %v4121 = vld [vmem:[#allocation9 + $0xf8] sm:$0xff]
    %v4122 = vld [vmem:[#allocation9 + $0x100] sm:$0xff]
    %v4123 = vld [vmem:[#allocation9 + $0x108] sm:$0xff]
    %v4124 = vld [vmem:[#allocation9 + $0x110] sm:$0xff]
    %v4125 = vld [vmem:[#allocation9 + $0x118] sm:$0xff]
    %v4126 = vld [vmem:[#allocation9 + $0x120] sm:$0xff]
    %v4127 = vld [vmem:[#allocation9 + $0x128] sm:$0xff]
    %v4128 = vld [vmem:[#allocation9 + $0x130] sm:$0xff]
    %v4129 = vld [vmem:[#allocation9 + $0x138] sm:$0xff]
    %v4130 = vld [vmem:[#allocation9 + $0x140] sm:$0xff]
    %v4131 = vld [vmem:[#allocation9 + $0x148] sm:$0xff]
    %v4132 = vld [vmem:[#allocation9 + $0x150] sm:$0xff]
    %v4133 = vld [vmem:[#allocation9 + $0x158] sm:$0xff]
    %v4134 = vld [vmem:[#allocation9 + $0x160] sm:$0xff]
    %v4135 = vld [vmem:[#allocation9 + $0x168] sm:$0xff]
    %v4136 = vld [vmem:[#allocation9 + $0x170] sm:$0xff]
    %v4137 = vld [vmem:[#allocation9 + $0x178] sm:$0xff]
    %v4138 = vld [vmem:[#allocation9 + $0x180] sm:$0xff]
    %v4139 = vld [vmem:[#allocation9 + $0x188] sm:$0xff]
    %v4140 = vld [vmem:[#allocation9 + $0x190] sm:$0xff]
    %v4141 = vld [vmem:[#allocation9 + $0x198] sm:$0xff]
    %v4142 = vld [vmem:[#allocation9 + $0x1a0] sm:$0xff]
    %v4143 = vld [vmem:[#allocation9 + $0x1a8] sm:$0xff]
    %v4144 = vld [vmem:[#allocation9 + $0x1b0] sm:$0xff]
    %v4145 = vld [vmem:[#allocation9 + $0x1b8] sm:$0xff]
    %v4146 = vld [vmem:[#allocation9 + $0x1c0] sm:$0xff]
    %v4147 = vld [vmem:[#allocation9 + $0x1c8] sm:$0xff]
    %v4148 = vld [vmem:[#allocation9 + $0x1d0] sm:$0xff]
    %v4149 = vld [vmem:[#allocation9 + $0x1d8] sm:$0xff]
    %v4150 = vld [vmem:[#allocation9 + $0x1e0] sm:$0xff]
    %v4151 = vld [vmem:[#allocation9 + $0x1e8] sm:$0xff]
    %v4152 = vld [vmem:[#allocation9 + $0x1f0] sm:$0xff]
    %v4153 = vld [vmem:[#allocation9 + $0x1f8] sm:$0xff]
    %v4154 = vld [vmem:[#allocation9 + $0x200] sm:$0xff]
    %v4155 = vld [vmem:[#allocation9 + $0x208] sm:$0xff]
    %v4156 = vld [vmem:[#allocation9 + $0x210] sm:$0xff]
    %v4157 = vld [vmem:[#allocation9 + $0x218] sm:$0xff]
    %v4158 = vld [vmem:[#allocation9 + $0x220] sm:$0xff]
    %v4159 = vld [vmem:[#allocation9 + $0x228] sm:$0xff]
    %v4160 = vld [vmem:[#allocation9 + $0x230] sm:$0xff]
    %v4161 = vld [vmem:[#allocation9 + $0x238] sm:$0xff]
    %v4162 = vld [vmem:[#allocation9 + $0x240] sm:$0xff]
    %v4163 = vld [vmem:[#allocation9 + $0x248] sm:$0xff]
    %v4164 = vld [vmem:[#allocation9 + $0x250] sm:$0xff]
    %v4165 = vld [vmem:[#allocation9 + $0x258] sm:$0xff]
    %v4166 = vld [vmem:[#allocation9 + $0x260] sm:$0xff]
    %v4167 = vld [vmem:[#allocation9 + $0x268] sm:$0xff]
    %v4168 = vld [vmem:[#allocation9 + $0x270] sm:$0xff]
    %v4169 = vld [vmem:[#allocation9 + $0x278] sm:$0xff]
    %v4170 = vld [vmem:[#allocation9 + $0x280] sm:$0xff]
    %v4171 = vld [vmem:[#allocation9 + $0x288] sm:$0xff]
    %v4172 = vld [vmem:[#allocation9 + $0x290] sm:$0xff]
    %v4173 = vld [vmem:[#allocation9 + $0x298] sm:$0xff]
    %v4174 = vld [vmem:[#allocation9 + $0x2a0] sm:$0xff]
    %v4175 = vld [vmem:[#allocation9 + $0x2a8] sm:$0xff]
    %v4176 = vld [vmem:[#allocation9 + $0x2b0] sm:$0xff]
    %v4177 = vld [vmem:[#allocation9 + $0x2b8] sm:$0xff]
    %v4178 = vld [vmem:[#allocation9 + $0x2c0] sm:$0xff]
    %v4179 = vld [vmem:[#allocation9 + $0x2c8] sm:$0xff]
    %v4180 = vld [vmem:[#allocation9 + $0x2d0] sm:$0xff]
    %v4181 = vld [vmem:[#allocation9 + $0x2d8] sm:$0xff]
    %v4182 = vld [vmem:[#allocation9 + $0x2e0] sm:$0xff]
    %v4183 = vld [vmem:[#allocation9 + $0x2e8] sm:$0xff]
    %v4184 = vld [vmem:[#allocation9 + $0x2f0] sm:$0xff]
    %v4185 = vld [vmem:[#allocation9 + $0x2f8] sm:$0xff]
    %v4186 = vld [vmem:[#allocation11] sm:$0x1]
    %v4188 = vlaneseq
    %v4189 = vshrl.u32 %v4188, 7
    %v4190 = vsub.s32 0, %v4189
    %v4191 = vrot.slane %v4186, %v4190
    %4193 = vmatprep.subr.mxu0 0.0
    %4194 = vmatpush1.msra.mxu0 %v4105
    %4195 = vmatprep.subr.mxu0 0.0
    %4196 = vmatpush1.msra.mxu0 %v4104
    %4197 = vmatprep.subr.mxu0 0.0
    %4198 = vmatpush1.msra.mxu0 %v4103
    %4199 = vmatprep.subr.mxu0 0.0
    %4200 = vmatpush1.msra.mxu0 %v4102
    %4201 = vmatprep.subr.mxu0 0.0
    %4202 = vmatpush1.msra.mxu0 %v4101
    %4203 = vmatprep.subr.mxu0 0.0
    %4204 = vmatpush1.msra.mxu0 %v4100
    %4205 = vmatprep.subr.mxu0 0.0
    %4206 = vmatpush1.msra.mxu0 %v4099
    %4207 = vmatprep.subr.mxu0 0.0
    %4208 = vmatpush1.msra.mxu0 %v4098
    %4209 = vmatprep.subr.mxu0 0.0
    %4210 = vmatpush1.msra.mxu0 %v4097
    %4211 = vmatprep.subr.mxu0 0.0
    %4212 = vmatpush1.msra.mxu0 %v4096
    %4213 = vmatprep.subr.mxu0 0.0
    %4214 = vmatpush1.msra.mxu0 %v4095
    %4215 = vmatprep.subr.mxu0 0.0
    %4216 = vmatpush1.msra.mxu0 %v4094
    %4217 = vmatprep.subr.mxu0 0.0
    %4218 = vmatpush1.msra.mxu0 %v4093
    %4219 = vmatprep.subr.mxu0 0.0
    %4220 = vmatpush1.msra.mxu0 %v4092
    %4221 = vmatprep.subr.mxu0 0.0
    %4222 = vmatpush1.msra.mxu0 %v4091
    %4223 = vmatprep.subr.mxu0 0.0
    %4224 = vmatpush1.msra.mxu0 %v4090
    %4225 = vmatprep.subr.mxu0 0.0
    %4226 = vmatpush2.msra.mxu0 %v4121
    %4227 = vmatprep.subr.mxu0 0.0
    %4228 = vmatpush2.msra.mxu0 %v4120
    %4229 = vmatprep.subr.mxu0 0.0
    %4230 = vmatpush2.msra.mxu0 %v4119
    %4231 = vmatprep.subr.mxu0 0.0
    %4232 = vmatpush2.msra.mxu0 %v4118
    %4233 = vmatprep.subr.mxu0 0.0
    %4234 = vmatpush2.msra.mxu0 %v4117
    %4235 = vmatprep.subr.mxu0 0.0
    %4236 = vmatpush2.msra.mxu0 %v4116
    %4237 = vmatprep.subr.mxu0 0.0
    %4238 = vmatpush2.msra.mxu0 %v4115
    %4239 = vmatprep.subr.mxu0 0.0
    %4240 = vmatpush2.msra.mxu0 %v4114
    %4241 = vmatprep.subr.mxu0 0.0
    %4242 = vmatpush2.msra.mxu0 %v4113
    %4243 = vmatprep.subr.mxu0 0.0
    %4244 = vmatpush2.msra.mxu0 %v4112
    %4245 = vmatprep.subr.mxu0 0.0
    %4246 = vmatpush2.msra.mxu0 %v4111
    %4247 = vmatprep.subr.mxu0 0.0
    %4248 = vmatpush2.msra.mxu0 %v4110
    %4249 = vmatprep.subr.mxu0 0.0
    %4250 = vmatpush2.msra.mxu0 %v4109
    %4251 = vmatprep.subr.mxu0 0.0
    %4252 = vmatpush2.msra.mxu0 %v4108
    %4253 = vmatprep.subr.mxu0 0.0
    %4254 = vmatpush2.msra.mxu0 %v4107
    %4255 = vmatprep.subr.mxu0 0.0
    %4256 = vmatpush2.msra.mxu0 %v4106
    %4257 = vmatprep.mubr.f32.mxu0 %v4085
    %4258 = vmatmul.mubr.f32.gmra.mxu0 %v4084
    %v4259 = vpop.f32.mrf.mxu0
    %v4260 = vadd.f32 %v4191, %v4259
    %v4261 = vpop.f32.mrf.mxu0
    %4262 = vdwg.mxu0
    %4263 = vmatprep.subr.mxu0 0.0
    %4264 = vmatpush1.msra.mxu0 %v4137
    %4265 = vmatprep.subr.mxu0 0.0
    %4266 = vmatpush1.msra.mxu0 %v4136
    %4267 = vmatprep.subr.mxu0 0.0
    %4268 = vmatpush1.msra.mxu0 %v4135
    %4269 = vmatprep.subr.mxu0 0.0
    %4270 = vmatpush1.msra.mxu0 %v4134
    %4271 = vmatprep.subr.mxu0 0.0
    %4272 = vmatpush1.msra.mxu0 %v4133
    %4273 = vmatprep.subr.mxu0 0.0
    %4274 = vmatpush1.msra.mxu0 %v4132
    %4275 = vmatprep.subr.mxu0 0.0
    %4276 = vmatpush1.msra.mxu0 %v4131
    %4277 = vmatprep.subr.mxu0 0.0
    %4278 = vmatpush1.msra.mxu0 %v4130
    %4279 = vmatprep.subr.mxu0 0.0
    %4280 = vmatpush1.msra.mxu0 %v4129
    %4281 = vmatprep.subr.mxu0 0.0
    %4282 = vmatpush1.msra.mxu0 %v4128
    %4283 = vmatprep.subr.mxu0 0.0
    %4284 = vmatpush1.msra.mxu0 %v4127
    %4285 = vmatprep.subr.mxu0 0.0
    %4286 = vmatpush1.msra.mxu0 %v4126
    %4287 = vmatprep.subr.mxu0 0.0
    %4288 = vmatpush1.msra.mxu0 %v4125
    %4289 = vmatprep.subr.mxu0 0.0
    %4290 = vmatpush1.msra.mxu0 %v4124
    %4291 = vmatprep.subr.mxu0 0.0
    %4292 = vmatpush1.msra.mxu0 %v4123
    %4293 = vmatprep.subr.mxu0 0.0
    %4294 = vmatpush1.msra.mxu0 %v4122
    %4295 = vmatprep.subr.mxu0 0.0
    %4296 = vmatpush2.msra.mxu0 %v4153
    %4297 = vmatprep.subr.mxu0 0.0
    %4298 = vmatpush2.msra.mxu0 %v4152
    %4299 = vmatprep.subr.mxu0 0.0
    %4300 = vmatpush2.msra.mxu0 %v4151
    %4301 = vmatprep.subr.mxu0 0.0
    %4302 = vmatpush2.msra.mxu0 %v4150
    %4303 = vmatprep.subr.mxu0 0.0
    %4304 = vmatpush2.msra.mxu0 %v4149
    %4305 = vmatprep.subr.mxu0 0.0
    %4306 = vmatpush2.msra.mxu0 %v4148
    %4307 = vmatprep.subr.mxu0 0.0
    %4308 = vmatpush2.msra.mxu0 %v4147
    %4309 = vmatprep.subr.mxu0 0.0
    %4310 = vmatpush2.msra.mxu0 %v4146
    %4311 = vmatprep.subr.mxu0 0.0
    %4312 = vmatpush2.msra.mxu0 %v4145
    %4313 = vmatprep.subr.mxu0 0.0
    %4314 = vmatpush2.msra.mxu0 %v4144
    %4315 = vmatprep.subr.mxu0 0.0
    %4316 = vmatpush2.msra.mxu0 %v4143
    %4317 = vmatprep.subr.mxu0 0.0
    %4318 = vmatpush2.msra.mxu0 %v4142
    %4319 = vmatprep.subr.mxu0 0.0
    %4320 = vmatpush2.msra.mxu0 %v4141
    %4321 = vmatprep.subr.mxu0 0.0
    %4322 = vmatpush2.msra.mxu0 %v4140
    %4323 = vmatprep.subr.mxu0 0.0
    %4324 = vmatpush2.msra.mxu0 %v4139
    %4325 = vmatprep.subr.mxu0 0.0
    %4326 = vmatpush2.msra.mxu0 %v4138
    %4327 = vmatprep.mubr.f32.mxu0 %v4087
    %4328 = vmatmul.mubr.f32.gmra.mxu0 %v4086
    %v4329 = vpop.f32.mrf.mxu0
    %v4330 = vadd.f32 %v4260, %v4329
    %v4331 = vpop.f32.mrf.mxu0
    %4332 = vdwg.mxu0
    %4333 = vmatprep.subr.mxu0 0.0
    %4334 = vmatpush1.msra.mxu0 %v4169
    %4335 = vmatprep.subr.mxu0 0.0
    %4336 = vmatpush1.msra.mxu0 %v4168
    %4337 = vmatprep.subr.mxu0 0.0
    %4338 = vmatpush1.msra.mxu0 %v4167
    %4339 = vmatprep.subr.mxu0 0.0
    %4340 = vmatpush1.msra.mxu0 %v4166
    %4341 = vmatprep.subr.mxu0 0.0
    %4342 = vmatpush1.msra.mxu0 %v4165
    %4343 = vmatprep.subr.mxu0 0.0
    %4344 = vmatpush1.msra.mxu0 %v4164
    %4345 = vmatprep.subr.mxu0 0.0
    %4346 = vmatpush1.msra.mxu0 %v4163
    %4347 = vmatprep.subr.mxu0 0.0
    %4348 = vmatpush1.msra.mxu0 %v4162
    %4349 = vmatprep.subr.mxu0 0.0
    %4350 = vmatpush1.msra.mxu0 %v4161
    %4351 = vmatprep.subr.mxu0 0.0
    %4352 = vmatpush1.msra.mxu0 %v4160
    %4353 = vmatprep.subr.mxu0 0.0
    %4354 = vmatpush1.msra.mxu0 %v4159
    %4355 = vmatprep.subr.mxu0 0.0
    %4356 = vmatpush1.msra.mxu0 %v4158
    %4357 = vmatprep.subr.mxu0 0.0
    %4358 = vmatpush1.msra.mxu0 %v4157
    %4359 = vmatprep.subr.mxu0 0.0
    %4360 = vmatpush1.msra.mxu0 %v4156
    %4361 = vmatprep.subr.mxu0 0.0
    %4362 = vmatpush1.msra.mxu0 %v4155
    %4363 = vmatprep.subr.mxu0 0.0
    %4364 = vmatpush1.msra.mxu0 %v4154
    %4365 = vmatprep.subr.mxu0 0.0
    %4366 = vmatpush2.msra.mxu0 %v4185
    %4367 = vmatprep.subr.mxu0 0.0
    %4368 = vmatpush2.msra.mxu0 %v4184
    %4369 = vmatprep.subr.mxu0 0.0
    %4370 = vmatpush2.msra.mxu0 %v4183
    %4371 = vmatprep.subr.mxu0 0.0
    %4372 = vmatpush2.msra.mxu0 %v4182
    %4373 = vmatprep.subr.mxu0 0.0
    %4374 = vmatpush2.msra.mxu0 %v4181
    %4375 = vmatprep.subr.mxu0 0.0
    %4376 = vmatpush2.msra.mxu0 %v4180
    %4377 = vmatprep.subr.mxu0 0.0
    %4378 = vmatpush2.msra.mxu0 %v4179
    %4379 = vmatprep.subr.mxu0 0.0
    %4380 = vmatpush2.msra.mxu0 %v4178
    %4381 = vmatprep.subr.mxu0 0.0
    %4382 = vmatpush2.msra.mxu0 %v4177
    %4383 = vmatprep.subr.mxu0 0.0
    %4384 = vmatpush2.msra.mxu0 %v4176
    %4385 = vmatprep.subr.mxu0 0.0
    %4386 = vmatpush2.msra.mxu0 %v4175
    %4387 = vmatprep.subr.mxu0 0.0
    %4388 = vmatpush2.msra.mxu0 %v4174
    %4389 = vmatprep.subr.mxu0 0.0
    %4390 = vmatpush2.msra.mxu0 %v4173
    %4391 = vmatprep.subr.mxu0 0.0
    %4392 = vmatpush2.msra.mxu0 %v4172
    %4393 = vmatprep.subr.mxu0 0.0
    %4394 = vmatpush2.msra.mxu0 %v4171
    %4395 = vmatprep.subr.mxu0 0.0
    %4396 = vmatpush2.msra.mxu0 %v4170
    %4397 = vmatprep.mubr.f32.mxu0 %v4089
    %4398 = vmatmul.mubr.f32.gmra.mxu0 %v4088
    %v4399 = vpop.f32.mrf.mxu0
    %v4400 = vadd.f32 %v4330, %v4399
    %v4401 = vpop.f32.mrf.mxu0
    %4402 = vdwg.mxu0
    %4403 = vst [vmem:[%s10] sm:$0xff] %v4400
    // Predicated region
    $region62: #{simple_policy_gradient_forward.1} parent=1 // pred_check
      _
    $region63: #{simple_policy_gradient_forward.1} parent=1 // pred_check_branch
      %4405 = sbr.rel (0) target = $region65
    $region64: #{simple_policy_gradient_forward.1} parent=1 // pred_region
      _
    $region65: #{simple_policy_gradient_forward.1} parent=1 // pred_fallthru
      _
    // Predicated region
    $region66: #{simple_policy_gradient_forward.1} parent=1 // pred_check
      _
    $region67: #{simple_policy_gradient_forward.1} parent=1 // pred_check_branch
      %4407 = sbr.rel (0) target = $region69
    $region68: #{simple_policy_gradient_forward.1} parent=1 // pred_region
      %s4409 = ssub.s32 32, 32
      %4410 = vsyncadd [#allocation5], %s4409
      %s4412 = sshll.u32 [#allocation12], 4
      %s4413 = int_to_ptr.vmem [resolvable:$true] %s4412
      %4415 = dma.vmem_to_hbm [thread:$0]  %s4413, 32, %s11, [#allocation5]
    $region69: #{simple_policy_gradient_forward.1} parent=1 // pred_fallthru
      _
    // Predicated region
    $region70: #{simple_policy_gradient_forward.1} parent=1 // pred_check
      _
    $region71: #{simple_policy_gradient_forward.1} parent=1 // pred_check_branch
      %4417 = sbr.rel (0) target = $region73
    $region72: #{simple_policy_gradient_forward.1} parent=1 // pred_region
      %s4419 = ssub.s32 32, 32
      %4420 = vsyncadd [#allocation14], %s4419
      %s4422 = sshll.u32 [#allocation13], 4
      %s4423 = int_to_ptr.vmem [resolvable:$true] %s4422
      %4425 = dma.vmem_to_hbm [thread:$0]  %s4423, 32, %s12, [#allocation14]
    $region73: #{simple_policy_gradient_forward.1} parent=1 // pred_fallthru
      _
    // Predicated region
    $region74: #{simple_policy_gradient_forward.1} parent=1 // pred_check
      _
    $region75: #{simple_policy_gradient_forward.1} parent=1 // pred_check_branch
      %4427 = sbr.rel (0) target = $region77
    $region76: #{simple_policy_gradient_forward.1} parent=1 // pred_region
      _
    $region77: #{simple_policy_gradient_forward.1} parent=1 // pred_fallthru
      _
    // Predicated region
    $region78: #{simple_policy_gradient_forward.1} parent=1 // pred_check
      _
    $region79: #{simple_policy_gradient_forward.1} parent=1 // pred_check_branch
      %4429 = sbr.rel (0) target = $region81
    $region80: #{simple_policy_gradient_forward.1} parent=1 // pred_region
      %4430 = dma.done [#allocation5], 32
    $region81: #{simple_policy_gradient_forward.1} parent=1 // pred_fallthru
      _
    // Predicated region
    $region82: #{simple_policy_gradient_forward.1} parent=1 // pred_check
      _
    $region83: #{simple_policy_gradient_forward.1} parent=1 // pred_check_branch
      %4432 = sbr.rel (0) target = $region85
    $region84: #{simple_policy_gradient_forward.1} parent=1 // pred_region
      %4433 = dma.done [#allocation14], 32
    $region85: #{simple_policy_gradient_forward.1} parent=1 // pred_fallthru
      _
    %4434 = vsyncpa [#allocation4], 1
    %4435 = vsyncpa [#allocation7], 1
    %4436 = vsyncpa [#allocation10], 1
    %4437 = vsyncpa [#allocation5], 1
    %4438 = vsyncpa [#allocation14], 1

</llo_original>
